<compile_context>
chip_gen: v5e
topology: v5e:2x2
jax: 0.10.0
libtpu: 0.0.40
codegen_flags: <defaults>
</compile_context>

<pallas_src>
import jax
import jax.numpy as jnp
from jax.experimental import pallas as pl
from jax.experimental.pallas import tpu as pltpu

EPS = 1e-5

# (name, kernel_size, dilations, paddings) for the three IAMConv branches.
_BRANCHES = (
    ("iam1", 3, (1, 1, 1), (1, 1, 1)),
    ("iam2", 3, (1, 2, 3), (1, 2, 3)),
    ("iam3", 5, (1, 3, 7), (2, 6, 14)),
)


def _hw_tile(hw):
    # Lane-dense tile along the H*W axis: whole extent if it is not a multiple
    # of 128, otherwise a large multiple of 128 (capped to keep VMEM modest
    # even on v7x's 64 MiB per TensorCore).
    if hw % 128 != 0:
        return hw
    return min(hw, 8192)


# ---------------------------------------------------------------------------
# Pallas kernels: all operate on (channels, hw_tile) slabs, H*W on lanes.
# ---------------------------------------------------------------------------

def _conv_bn_relu_kernel(w_ref, s_ref, b_ref, x_ref, o_ref):
    # w: (Cout, K)  s,b: (Cout, 1)  x: (K, T)  o: (Cout, T)
    y = jnp.dot(w_ref[...], x_ref[...], preferred_element_type=jnp.float32)
    y = y * s_ref[...] + b_ref[...]
    o_ref[...] = jnp.maximum(y, 0.0).astype(o_ref.dtype)


def _conv_bn_relu_res_kernel(w_ref, s_ref, b_ref, x_ref, xin_ref, f_ref, r_ref):
    # Same as above, but also emits the branch residual (x_in - f) in the same
    # HBM pass (fuses the `x - conv(x)` elementwise op of IAM.forward).
    y = jnp.dot(w_ref[...], x_ref[...], preferred_element_type=jnp.float32)
    f = jnp.maximum(y * s_ref[...] + b_ref[...], 0.0)
    f_ref[...] = f.astype(f_ref.dtype)
    r_ref[...] = (xin_ref[...].astype(jnp.float32) - f).astype(r_ref.dtype)


def _project_pair_kernel(w_ref, s_ref, b_ref, xf_ref, xr_ref, o_ref):
    # o = relu(bn(W @ full)) + relu(bn(W @ res)); W/scale/shift shared in VMEM.
    w = w_ref[...]
    s = s_ref[...]
    b = b_ref[...]
    yf = jnp.maximum(
        jnp.dot(w, xf_ref[...], preferred_element_type=jnp.float32) * s + b, 0.0)
    yr = jnp.maximum(
        jnp.dot(w, xr_ref[...], preferred_element_type=jnp.float32) * s + b, 0.0)
    o_ref[...] = (yf + yr).astype(o_ref.dtype)


# ---------------------------------------------------------------------------
# pallas_call wrappers
# ---------------------------------------------------------------------------

def conv_bn_relu(cols, w, scale, shift):
    """relu(bn(w @ cols[b])) for every batch element. cols: (B, K, HW)."""
    B, K, HW = cols.shape
    Cout = w.shape[0]
    tile = _hw_tile(HW)
    return pl.pallas_call(
        _conv_bn_relu_kernel,
        out_shape=jax.ShapeDtypeStruct((B, Cout, HW), cols.dtype),
        grid_spec=pltpu.PrefetchScalarGridSpec(
            num_scalar_prefetch=0,
            grid=(B, pl.cdiv(HW, tile)),
            in_specs=[
                pl.BlockSpec((Cout, K), lambda b, h: (0, 0)),
                pl.BlockSpec((Cout, 1), lambda b, h: (0, 0)),
                pl.BlockSpec((Cout, 1), lambda b, h: (0, 0)),
                pl.BlockSpec((None, K, tile), lambda b, h: (b, 0, h)),
            ],
            out_specs=pl.BlockSpec((None, Cout, tile), lambda b, h: (b, 0, h)),
        ),
        compiler_params=pltpu.CompilerParams(
            dimension_semantics=("parallel", "parallel")),
    )(w, scale, shift, cols)


def conv_bn_relu_res(cols, w, scale, shift, x_orig):
    """Fused conv+BN+ReLU that also returns the residual x_orig - f."""
    B, K, HW = cols.shape
    Cout = w.shape[0]
    tile = _hw_tile(HW)
    return pl.pallas_call(
        _conv_bn_relu_res_kernel,
        out_shape=(jax.ShapeDtypeStruct((B, Cout, HW), cols.dtype),
                   jax.ShapeDtypeStruct((B, Cout, HW), cols.dtype)),
        grid_spec=pltpu.PrefetchScalarGridSpec(
            num_scalar_prefetch=0,
            grid=(B, pl.cdiv(HW, tile)),
            in_specs=[
                pl.BlockSpec((Cout, K), lambda b, h: (0, 0)),
                pl.BlockSpec((Cout, 1), lambda b, h: (0, 0)),
                pl.BlockSpec((Cout, 1), lambda b, h: (0, 0)),
                pl.BlockSpec((None, K, tile), lambda b, h: (b, 0, h)),
                pl.BlockSpec((None, Cout, tile), lambda b, h: (b, 0, h)),
            ],
            out_specs=[pl.BlockSpec((None, Cout, tile), lambda b, h: (b, 0, h)),
                       pl.BlockSpec((None, Cout, tile), lambda b, h: (b, 0, h))],
        ),
        compiler_params=pltpu.CompilerParams(
            dimension_semantics=("parallel", "parallel")),
    )(w, scale, shift, cols, x_orig)


def project_pair(full, res, w, scale, shift):
    """relu(bn(W@full)) + relu(bn(W@res)) fused in one kernel."""
    B, K, HW = full.shape
    Cout = w.shape[0]
    tile = _hw_tile(HW)
    return pl.pallas_call(
        _project_pair_kernel,
        out_shape=jax.ShapeDtypeStruct((B, Cout, HW), full.dtype),
        grid_spec=pltpu.PrefetchScalarGridSpec(
            num_scalar_prefetch=0,
            grid=(B, pl.cdiv(HW, tile)),
            in_specs=[
                pl.BlockSpec((Cout, K), lambda b, h: (0, 0)),
                pl.BlockSpec((Cout, 1), lambda b, h: (0, 0)),
                pl.BlockSpec((Cout, 1), lambda b, h: (0, 0)),
                pl.BlockSpec((None, K, tile), lambda b, h: (b, 0, h)),
                pl.BlockSpec((None, K, tile), lambda b, h: (b, 0, h)),
            ],
            out_specs=pl.BlockSpec((None, Cout, tile), lambda b, h: (b, 0, h)),
        ),
        compiler_params=pltpu.CompilerParams(
            dimension_semantics=("parallel", "parallel")),
    )(w, scale, shift, full, res)


# ---------------------------------------------------------------------------
# JAX glue: im2col (patch extraction), pooling branch, full forward
# ---------------------------------------------------------------------------

def _im2col(x, ksize, dilation, padding):
    """(B, C, H, W) -> (B, C*ksize*ksize, H*W), ordered to match OIHW weights."""
    B, C, H, W = x.shape
    xp = jnp.pad(x, ((0, 0), (0, 0), (padding, padding), (padding, padding)))
    taps = []
    for kh in range(ksize):
        for kw in range(ksize):
            h0, w0 = kh * dilation, kw * dilation
            taps.append(xp[:, :, h0:h0 + H, w0:w0 + W])
    patches = jnp.stack(taps, axis=2)          # (B, C, K*K, H, W)
    return patches.reshape(B, C * ksize * ksize, H * W)


def iam_pooling_branch(x_flat, w, scale, shift):
    # AdaptiveAvgPool2d(1) + 1x1 conv + BN + ReLU + bilinear upsample from 1x1
    # (== constant broadcast).  Work is O(B*C), so it stays in plain JAX.
    B, C, HW = x_flat.shape
    pooled = jnp.mean(x_flat, axis=2)                                   # (B, C)
    y = jnp.einsum("bc,oc->bo", pooled, w,
                   precision=jax.lax.Precision.HIGHEST)                 # (B, C)
    y = jnp.maximum(y * scale[:, 0][None, :] + shift[:, 0][None, :], 0.0)
    f = jnp.broadcast_to(y[:, :, None], (B, C, HW))
    r = x_flat - f
    return f, r


def iam_forward(x, params):
    B, C, H, W = x.shape
    HW = H * W
    x_flat = x.reshape(B, C, HW)

    fulls, ress = [], []

    # convs[0]: 1x1 conv + BN + ReLU (also emits x - f)
    p0 = params["conv0"]
    f, r = conv_bn_relu_res(x_flat, p0["w"], p0["scale"], p0["shift"], x_flat)
    fulls.append(f); ress.append(r)

    # convs[1..3]: IAMConv branches (3 conv+BN+ReLU layers each)
    for name, ksz, dils, pads in _BRANCHES:
        layers = params[name]
        h = x
        for i in range(2):
            cols = _im2col(h, ksz, dils[i], pads[i])
            p = layers[i]
            h = conv_bn_relu(cols, p["w"], p["scale"], p["shift"]).reshape(B, -1, H, W)
        cols = _im2col(h, ksz, dils[2], pads[2])
        p = layers[2]
        f, r = conv_bn_relu_res(cols, p["w"], p["scale"], p["shift"], x_flat)
        fulls.append(f); ress.append(r)

    # convs[4]: IAMPooling
    pp = params["pool"]
    f, r = iam_pooling_branch(x_flat, pp["w"], pp["scale"], pp["shift"])
    fulls.append(f); ress.append(r)

    full = jnp.concatenate(fulls, axis=1)   # (B, 5C, HW)
    res = jnp.concatenate(ress, axis=1)     # (B, 5C, HW)

    pj = params["project"]
    out = project_pair(full, res, pj["w"], pj["scale"], pj["shift"])
    return out.reshape(B, -1, H, W)


# ---------------------------------------------------------------------------
# Parameters (deterministic) and a pure-JAX reference for self-checking
# ---------------------------------------------------------------------------

def make_params(key, in_channels, out_channels):
    C = in_channels
    keys = iter(jax.random.split(key, 12))

    def conv_w(k, co, ci, ksz):
        fan_in = ci * ksz * ksz
        w = jax.random.normal(k, (co, ci, ksz, ksz), jnp.float32) / (fan_in ** 0.5)
        return w.reshape(co, ci * ksz * ksz)

    def bn(co):
        gamma = jnp.ones((co,), jnp.float32)
        beta = jnp.zeros((co,), jnp.float32)
        mean = jnp.zeros((co,), jnp.float32)
        var = jnp.ones((co,), jnp.float32)
        scale = gamma / jnp.sqrt(var + EPS)
        shift = beta - mean * scale
        return scale.reshape(co, 1), shift.reshape(co, 1)

    params = {}
    s, b = bn(C)
    params["conv0"] = dict(w=conv_w(next(keys), C, C, 1), scale=s, shift=b)
    for name, ksz, _, _ in _BRANCHES:
        layers = []
        for ci, co in ((C, C // 2), (C // 2, C // 2), (C // 2, C)):
            s, b = bn(co)
            layers.append(dict(w=conv_w(next(keys), co, ci, ksz), scale=s, shift=b))
        params[name] = layers
    s, b = bn(C)
    params["pool"] = dict(w=conv_w(next(keys), C, C, 1), scale=s, shift=b)
    s, b = bn(out_channels)
    params["project"] = dict(w=conv_w(next(keys), out_channels, 5 * C, 1), scale=s, shift=b)
    return params


def _ref_conv(x, w_flat, ci, co, ksz, dilation, padding):
    w = w_flat.reshape(co, ci, ksz, ksz)
    return jax.lax.conv_general_dilated(
        x, w, window_strides=(1, 1),
        padding=((padding, padding), (padding, padding)),
        rhs_dilation=(dilation, dilation),
        dimension_numbers=("NCHW", "OIHW", "NCHW"),
        precision=jax.lax.Precision.HIGHEST)


def iam_forward_ref(x, params):
    B, C, H, W = x.shape

    def cbr(h, p, ci, co, ksz, d, pad):
        y = _ref_conv(h, p["w"], ci, co, ksz, d, pad)
        return jnp.maximum(
            y * p["scale"][:, 0].reshape(1, -1, 1, 1)
            + p["shift"][:, 0].reshape(1, -1, 1, 1), 0.0)

    fulls, ress = [], []
    f = cbr(x, params["conv0"], C, C, 1, 1, 0)
    fulls.append(f); ress.append(x - f)

    for name, ksz, dils, pads in _BRANCHES:
        h = x
        for i, (ci, co) in enumerate(((C, C // 2), (C // 2, C // 2), (C // 2, C))):
            h = cbr(h, params[name][i], ci, co, ksz, dils[i], pads[i])
        fulls.append(h); ress.append(x - h)

    p = params["pool"]
    pooled = jnp.mean(x, axis=(2, 3), keepdims=True)
    y = cbr(pooled, p, C, C, 1, 1, 0)
    f = jnp.broadcast_to(y, (B, C, H, W))
    fulls.append(f); ress.append(x - f)

    full = jnp.concatenate(fulls, axis=1)
    res = jnp.concatenate(ress, axis=1)
    pj = params["project"]
    co = pj["w"].shape[0]

    def proj(h):
        return cbr(h, pj, 5 * C, co, 1, 1, 0)

    return proj(full) + proj(res)


if __name__ == "__main__":
    key = jax.random.PRNGKey(0)
    B, C, H, W = 2, 4, 16, 16
    OUT = 64

    k_x, k_p = jax.random.split(key)
    x = jax.random.normal(k_x, (B, C, H, W), dtype=jnp.float32)
    params = make_params(k_p, C, OUT)

    fwd = jax.jit(iam_forward)
    y = fwd(x, params)
    jax.block_until_ready(y)
    assert y.shape == (B, OUT, H, W)

    # Self-check against a pure-JAX reference of the same forward semantics.
    y_ref = iam_forward_ref(x, params)
    max_err = float(jnp.max(jnp.abs(y - y_ref)))
    assert jnp.allclose(y, y_ref, atol=1e-3, rtol=1e-3), max_err

    print("KERNEL_OK")
</pallas_src>

<mosaic_0001>
module attributes {stable_mosaic.version = 11 : i64} {
  func.func @_conv_bn_relu_kernel(%arg0: i32, %arg1: i32, %arg2: memref<2x100xf32, #tpu.memory_space<vmem>>, %arg3: memref<2x1xf32, #tpu.memory_space<vmem>>, %arg4: memref<2x1xf32, #tpu.memory_space<vmem>>, %arg5: memref<1x100x256xf32, #tpu.memory_space<vmem>>, %arg6: memref<1x2x256xf32, #tpu.memory_space<vmem>>) attributes {dimension_semantics = [#tpu.dimension_semantics<parallel>, #tpu.dimension_semantics<parallel>], iteration_bounds = array<i64: 2, 1>, scalar_prefetch = 0 : i64, scratch_operands = 0 : i64, tpu.core_type = #tpu.core_type<tc>, window_params = [{pipeline_mode = #tpu.pipeline_mode<synchronous>, transform_indices = @transform_0, window_bounds = array<i64: 2, 100>}, {pipeline_mode = #tpu.pipeline_mode<synchronous>, transform_indices = @transform_1, window_bounds = array<i64: 2, 1>}, {pipeline_mode = #tpu.pipeline_mode<synchronous>, transform_indices = @transform_2, window_bounds = array<i64: 2, 1>}, {transform_indices = @transform_3, window_bounds = array<i64: 1, 100, 256>}, {transform_indices = @transform_4, window_bounds = array<i64: 1, 2, 256>}]} {
    %c0 = arith.constant 0 : index
    %c0_0 = arith.constant 0 : index
    %0 = vector.load %arg2[%c0, %c0_0] : memref<2x100xf32, #tpu.memory_space<vmem>>, vector<2x100xf32>
    %c0_1 = arith.constant 0 : index
    %c0_2 = arith.constant 0 : index
    %c0_3 = arith.constant 0 : index
    %1 = vector.load %arg5[%c0_1, %c0_2, %c0_3] : memref<1x100x256xf32, #tpu.memory_space<vmem>>, vector<1x100x256xf32>
    %2 = vector.shape_cast %1 : vector<1x100x256xf32> to vector<100x256xf32>
    %cst = arith.constant dense<0.000000e+00> : vector<2x256xf32>
    %3 = tpu.matmul %0, %2, %cst {dimension_numbers = #tpu.dot_dimension_numbers<[1], [0], [0], [1], [0, 0, 1, 1], [], []>} : vector<2x100xf32>, vector<100x256xf32>, vector<2x256xf32> -> vector<2x256xf32>
    %c0_4 = arith.constant 0 : index
    %c0_5 = arith.constant 0 : index
    %4 = vector.load %arg3[%c0_4, %c0_5] : memref<2x1xf32, #tpu.memory_space<vmem>>, vector<2x1xf32>
    %5 = vector.broadcast %4 : vector<2x1xf32> to vector<2x256xf32>
    %6 = arith.mulf %3, %5 : vector<2x256xf32>
    %c0_6 = arith.constant 0 : index
    %c0_7 = arith.constant 0 : index
    %7 = vector.load %arg4[%c0_6, %c0_7] : memref<2x1xf32, #tpu.memory_space<vmem>>, vector<2x1xf32>
    %8 = vector.broadcast %7 : vector<2x1xf32> to vector<2x256xf32>
    %9 = arith.addf %6, %8 : vector<2x256xf32>
    %cst_8 = arith.constant 0.000000e+00 : f32
    %10 = vector.broadcast %cst_8 : f32 to vector<2x256xf32>
    %11 = arith.maximumf %9, %10 : vector<2x256xf32>
    %c0_9 = arith.constant 0 : index
    %c0_10 = arith.constant 0 : index
    %c0_11 = arith.constant 0 : index
    %12 = vector.load %arg6[%c0_9, %c0_10, %c0_11] : memref<1x2x256xf32, #tpu.memory_space<vmem>>, vector<1x2x256xf32>
    %13 = vector.shape_cast %12 : vector<1x2x256xf32> to vector<2x256xf32>
    %14 = vector.shape_cast %11 : vector<2x256xf32> to vector<1x2x256xf32>
    tpu.vector_store %arg6[%c0_9, %c0_10, %c0_11], %14 {strides = array<i32>} : memref<1x2x256xf32, #tpu.memory_space<vmem>>, vector<1x2x256xf32>,
    return
  }
  func.func @transform_0(%arg0: i32, %arg1: i32) -> (i32, i32) {
    %c0_i32 = arith.constant 0 : i32
    %c0_i32_0 = arith.constant 0 : i32
    %c0_i32_1 = arith.constant 0 : i32
    return %c0_i32, %c0_i32_0 : i32, i32
  }
  func.func @transform_1(%arg0: i32, %arg1: i32) -> (i32, i32) {
    %c0_i32 = arith.constant 0 : i32
    %c0_i32_0 = arith.constant 0 : i32
    %c0_i32_1 = arith.constant 0 : i32
    return %c0_i32, %c0_i32_0 : i32, i32
  }
  func.func @transform_2(%arg0: i32, %arg1: i32) -> (i32, i32) {
    %c0_i32 = arith.constant 0 : i32
    %c0_i32_0 = arith.constant 0 : i32
    %c0_i32_1 = arith.constant 0 : i32
    return %c0_i32, %c0_i32_0 : i32, i32
  }
  func.func @transform_3(%arg0: i32, %arg1: i32) -> (i32, i32, i32) {
    %c0_i32 = arith.constant 0 : i32
    %c0_i32_0 = arith.constant 0 : i32
    return %arg0, %c0_i32, %arg1 : i32, i32, i32
  }
  func.func @transform_4(%arg0: i32, %arg1: i32) -> (i32, i32, i32) {
    %c0_i32 = arith.constant 0 : i32
    %c0_i32_0 = arith.constant 0 : i32
    return %arg0, %c0_i32, %arg1 : i32, i32, i32
  }
}

module attributes {stable_mosaic.version = 11 : i64} {
  func.func @_conv_bn_relu_kernel(%arg0: i32, %arg1: i32, %arg2: memref<2x50xf32, #tpu.memory_space<vmem>>, %arg3: memref<2x1xf32, #tpu.memory_space<vmem>>, %arg4: memref<2x1xf32, #tpu.memory_space<vmem>>, %arg5: memref<1x50x256xf32, #tpu.memory_space<vmem>>, %arg6: memref<1x2x256xf32, #tpu.memory_space<vmem>>) attributes {dimension_semantics = [#tpu.dimension_semantics<parallel>, #tpu.dimension_semantics<parallel>], iteration_bounds = array<i64: 2, 1>, scalar_prefetch = 0 : i64, scratch_operands = 0 : i64, tpu.core_type = #tpu.core_type<tc>, window_params = [{pipeline_mode = #tpu.pipeline_mode<synchronous>, transform_indices = @transform_0, window_bounds = array<i64: 2, 50>}, {pipeline_mode = #tpu.pipeline_mode<synchronous>, transform_indices = @transform_1, window_bounds = array<i64: 2, 1>}, {pipeline_mode = #tpu.pipeline_mode<synchronous>, transform_indices = @transform_2, window_bounds = array<i64: 2, 1>}, {transform_indices = @transform_3, window_bounds = array<i64: 1, 50, 256>}, {transform_indices = @transform_4, window_bounds = array<i64: 1, 2, 256>}]} {
    %c0 = arith.constant 0 : index
    %c0_0 = arith.constant 0 : index
    %0 = vector.load %arg2[%c0, %c0_0] : memref<2x50xf32, #tpu.memory_space<vmem>>, vector<2x50xf32>
    %c0_1 = arith.constant 0 : index
    %c0_2 = arith.constant 0 : index
    %c0_3 = arith.constant 0 : index
    %1 = vector.load %arg5[%c0_1, %c0_2, %c0_3] : memref<1x50x256xf32, #tpu.memory_space<vmem>>, vector<1x50x256xf32>
    %2 = vector.shape_cast %1 : vector<1x50x256xf32> to vector<50x256xf32>
    %cst = arith.constant dense<0.000000e+00> : vector<2x256xf32>
    %3 = tpu.matmul %0, %2, %cst {dimension_numbers = #tpu.dot_dimension_numbers<[1], [0], [0], [1], [0, 0, 1, 1], [], []>} : vector<2x50xf32>, vector<50x256xf32>, vector<2x256xf32> -> vector<2x256xf32>
    %c0_4 = arith.constant 0 : index
    %c0_5 = arith.constant 0 : index
    %4 = vector.load %arg3[%c0_4, %c0_5] : memref<2x1xf32, #tpu.memory_space<vmem>>, vector<2x1xf32>
    %5 = vector.broadcast %4 : vector<2x1xf32> to vector<2x256xf32>
    %6 = arith.mulf %3, %5 : vector<2x256xf32>
    %c0_6 = arith.constant 0 : index
    %c0_7 = arith.constant 0 : index
    %7 = vector.load %arg4[%c0_6, %c0_7] : memref<2x1xf32, #tpu.memory_space<vmem>>, vector<2x1xf32>
    %8 = vector.broadcast %7 : vector<2x1xf32> to vector<2x256xf32>
    %9 = arith.addf %6, %8 : vector<2x256xf32>
    %cst_8 = arith.constant 0.000000e+00 : f32
    %10 = vector.broadcast %cst_8 : f32 to vector<2x256xf32>
    %11 = arith.maximumf %9, %10 : vector<2x256xf32>
    %c0_9 = arith.constant 0 : index
    %c0_10 = arith.constant 0 : index
    %c0_11 = arith.constant 0 : index
    %12 = vector.load %arg6[%c0_9, %c0_10, %c0_11] : memref<1x2x256xf32, #tpu.memory_space<vmem>>, vector<1x2x256xf32>
    %13 = vector.shape_cast %12 : vector<1x2x256xf32> to vector<2x256xf32>
    %14 = vector.shape_cast %11 : vector<2x256xf32> to vector<1x2x256xf32>
    tpu.vector_store %arg6[%c0_9, %c0_10, %c0_11], %14 {strides = array<i32>} : memref<1x2x256xf32, #tpu.memory_space<vmem>>, vector<1x2x256xf32>,
    return
  }
  func.func @transform_0(%arg0: i32, %arg1: i32) -> (i32, i32) {
    %c0_i32 = arith.constant 0 : i32
    %c0_i32_0 = arith.constant 0 : i32
    %c0_i32_1 = arith.constant 0 : i32
    return %c0_i32, %c0_i32_0 : i32, i32
  }
  func.func @transform_1(%arg0: i32, %arg1: i32) -> (i32, i32) {
    %c0_i32 = arith.constant 0 : i32
    %c0_i32_0 = arith.constant 0 : i32
    %c0_i32_1 = arith.constant 0 : i32
    return %c0_i32, %c0_i32_0 : i32, i32
  }
  func.func @transform_2(%arg0: i32, %arg1: i32) -> (i32, i32) {
    %c0_i32 = arith.constant 0 : i32
    %c0_i32_0 = arith.constant 0 : i32
    %c0_i32_1 = arith.constant 0 : i32
    return %c0_i32, %c0_i32_0 : i32, i32
  }
  func.func @transform_3(%arg0: i32, %arg1: i32) -> (i32, i32, i32) {
    %c0_i32 = arith.constant 0 : i32
    %c0_i32_0 = arith.constant 0 : i32
    return %arg0, %c0_i32, %arg1 : i32, i32, i32
  }
  func.func @transform_4(%arg0: i32, %arg1: i32) -> (i32, i32, i32) {
    %c0_i32 = arith.constant 0 : i32
    %c0_i32_0 = arith.constant 0 : i32
    return %arg0, %c0_i32, %arg1 : i32, i32, i32
  }
}

module attributes {stable_mosaic.version = 11 : i64} {
  func.func @_conv_bn_relu_res_kernel(%arg0: i32, %arg1: i32, %arg2: memref<4x50xf32, #tpu.memory_space<vmem>>, %arg3: memref<4x1xf32, #tpu.memory_space<vmem>>, %arg4: memref<4x1xf32, #tpu.memory_space<vmem>>, %arg5: memref<1x50x256xf32, #tpu.memory_space<vmem>>, %arg6: memref<1x4x256xf32, #tpu.memory_space<vmem>>, %arg7: memref<1x4x256xf32, #tpu.memory_space<vmem>>, %arg8: memref<1x4x256xf32, #tpu.memory_space<vmem>>) attributes {dimension_semantics = [#tpu.dimension_semantics<parallel>, #tpu.dimension_semantics<parallel>], iteration_bounds = array<i64: 2, 1>, scalar_prefetch = 0 : i64, scratch_operands = 0 : i64, tpu.core_type = #tpu.core_type<tc>, window_params = [{pipeline_mode = #tpu.pipeline_mode<synchronous>, transform_indices = @transform_0, window_bounds = array<i64: 4, 50>}, {pipeline_mode = #tpu.pipeline_mode<synchronous>, transform_indices = @transform_1, window_bounds = array<i64: 4, 1>}, {pipeline_mode = #tpu.pipeline_mode<synchronous>, transform_indices = @transform_2, window_bounds = array<i64: 4, 1>}, {transform_indices = @transform_3, window_bounds = array<i64: 1, 50, 256>}, {transform_indices = @transform_4, window_bounds = array<i64: 1, 4, 256>}, {transform_indices = @transform_5, window_bounds = array<i64: 1, 4, 256>}, {transform_indices = @transform_6, window_bounds = array<i64: 1, 4, 256>}]} {
    %c0 = arith.constant 0 : index
    %c0_0 = arith.constant 0 : index
    %0 = vector.load %arg2[%c0, %c0_0] : memref<4x50xf32, #tpu.memory_space<vmem>>, vector<4x50xf32>
    %c0_1 = arith.constant 0 : index
    %c0_2 = arith.constant 0 : index
    %c0_3 = arith.constant 0 : index
    %1 = vector.load %arg5[%c0_1, %c0_2, %c0_3] : memref<1x50x256xf32, #tpu.memory_space<vmem>>, vector<1x50x256xf32>
    %2 = vector.shape_cast %1 : vector<1x50x256xf32> to vector<50x256xf32>
    %cst = arith.constant dense<0.000000e+00> : vector<4x256xf32>
    %3 = tpu.matmul %0, %2, %cst {dimension_numbers = #tpu.dot_dimension_numbers<[1], [0], [0], [1], [0, 0, 1, 1], [], []>} : vector<4x50xf32>, vector<50x256xf32>, vector<4x256xf32> -> vector<4x256xf32>
    %c0_4 = arith.constant 0 : index
    %c0_5 = arith.constant 0 : index
    %4 = vector.load %arg3[%c0_4, %c0_5] : memref<4x1xf32, #tpu.memory_space<vmem>>, vector<4x1xf32>
    %5 = vector.broadcast %4 : vector<4x1xf32> to vector<4x256xf32>
    %6 = arith.mulf %3, %5 : vector<4x256xf32>
    %c0_6 = arith.constant 0 : index
    %c0_7 = arith.constant 0 : index
    %7 = vector.load %arg4[%c0_6, %c0_7] : memref<4x1xf32, #tpu.memory_space<vmem>>, vector<4x1xf32>
    %8 = vector.broadcast %7 : vector<4x1xf32> to vector<4x256xf32>
    %9 = arith.addf %6, %8 : vector<4x256xf32>
    %cst_8 = arith.constant 0.000000e+00 : f32
    %10 = vector.broadcast %cst_8 : f32 to vector<4x256xf32>
    %11 = arith.maximumf %9, %10 : vector<4x256xf32>
    %c0_9 = arith.constant 0 : index
    %c0_10 = arith.constant 0 : index
    %c0_11 = arith.constant 0 : index
    %12 = vector.load %arg7[%c0_9, %c0_10, %c0_11] : memref<1x4x256xf32, #tpu.memory_space<vmem>>, vector<1x4x256xf32>
    %13 = vector.shape_cast %12 : vector<1x4x256xf32> to vector<4x256xf32>
    %14 = vector.shape_cast %11 : vector<4x256xf32> to vector<1x4x256xf32>
    tpu.vector_store %arg7[%c0_9, %c0_10, %c0_11], %14 {strides = array<i32>} : memref<1x4x256xf32, #tpu.memory_space<vmem>>, vector<1x4x256xf32>,
    %c0_12 = arith.constant 0 : index
    %c0_13 = arith.constant 0 : index
    %c0_14 = arith.constant 0 : index
    %15 = vector.load %arg6[%c0_12, %c0_13, %c0_14] : memref<1x4x256xf32, #tpu.memory_space<vmem>>, vector<1x4x256xf32>
    %16 = vector.shape_cast %15 : vector<1x4x256xf32> to vector<4x256xf32>
    %17 = arith.subf %16, %11 : vector<4x256xf32>
    %c0_15 = arith.constant 0 : index
    %c0_16 = arith.constant 0 : index
    %c0_17 = arith.constant 0 : index
    %18 = vector.load %arg8[%c0_15, %c0_16, %c0_17] : memref<1x4x256xf32, #tpu.memory_space<vmem>>, vector<1x4x256xf32>
    %19 = vector.shape_cast %18 : vector<1x4x256xf32> to vector<4x256xf32>
    %20 = vector.shape_cast %17 : vector<4x256xf32> to vector<1x4x256xf32>
    tpu.vector_store %arg8[%c0_15, %c0_16, %c0_17], %20 {strides = array<i32>} : memref<1x4x256xf32, #tpu.memory_space<vmem>>, vector<1x4x256xf32>,
    return
  }
  func.func @transform_0(%arg0: i32, %arg1: i32) -> (i32, i32) {
    %c0_i32 = arith.constant 0 : i32
    %c0_i32_0 = arith.constant 0 : i32
    %c0_i32_1 = arith.constant 0 : i32
    return %c0_i32, %c0_i32_0 : i32, i32
  }
  func.func @transform_1(%arg0: i32, %arg1: i32) -> (i32, i32) {
    %c0_i32 = arith.constant 0 : i32
    %c0_i32_0 = arith.constant 0 : i32
    %c0_i32_1 = arith.constant 0 : i32
    return %c0_i32, %c0_i32_0 : i32, i32
  }
  func.func @transform_2(%arg0: i32, %arg1: i32) -> (i32, i32) {
    %c0_i32 = arith.constant 0 : i32
    %c0_i32_0 = arith.constant 0 : i32
    %c0_i32_1 = arith.constant 0 : i32
    return %c0_i32, %c0_i32_0 : i32, i32
  }
  func.func @transform_3(%arg0: i32, %arg1: i32) -> (i32, i32, i32) {
    %c0_i32 = arith.constant 0 : i32
    %c0_i32_0 = arith.constant 0 : i32
    return %arg0, %c0_i32, %arg1 : i32, i32, i32
  }
  func.func @transform_4(%arg0: i32, %arg1: i32) -> (i32, i32, i32) {
    %c0_i32 = arith.constant 0 : i32
    %c0_i32_0 = arith.constant 0 : i32
    return %arg0, %c0_i32, %arg1 : i32, i32, i32
  }
  func.func @transform_5(%arg0: i32, %arg1: i32) -> (i32, i32, i32) {
    %c0_i32 = arith.constant 0 : i32
    %c0_i32_0 = arith.constant 0 : i32
    return %arg0, %c0_i32, %arg1 : i32, i32, i32
  }
  func.func @transform_6(%arg0: i32, %arg1: i32) -> (i32, i32, i32) {
    %c0_i32 = arith.constant 0 : i32
    %c0_i32_0 = arith.constant 0 : i32
    return %arg0, %c0_i32, %arg1 : i32, i32, i32
  }
}

module attributes {stable_mosaic.version = 11 : i64} {
  func.func @_conv_bn_relu_kernel(%arg0: i32, %arg1: i32, %arg2: memref<2x36xf32, #tpu.memory_space<vmem>>, %arg3: memref<2x1xf32, #tpu.memory_space<vmem>>, %arg4: memref<2x1xf32, #tpu.memory_space<vmem>>, %arg5: memref<1x36x256xf32, #tpu.memory_space<vmem>>, %arg6: memref<1x2x256xf32, #tpu.memory_space<vmem>>) attributes {dimension_semantics = [#tpu.dimension_semantics<parallel>, #tpu.dimension_semantics<parallel>], iteration_bounds = array<i64: 2, 1>, scalar_prefetch = 0 : i64, scratch_operands = 0 : i64, tpu.core_type = #tpu.core_type<tc>, window_params = [{pipeline_mode = #tpu.pipeline_mode<synchronous>, transform_indices = @transform_0, window_bounds = array<i64: 2, 36>}, {pipeline_mode = #tpu.pipeline_mode<synchronous>, transform_indices = @transform_1, window_bounds = array<i64: 2, 1>}, {pipeline_mode = #tpu.pipeline_mode<synchronous>, transform_indices = @transform_2, window_bounds = array<i64: 2, 1>}, {transform_indices = @transform_3, window_bounds = array<i64: 1, 36, 256>}, {transform_indices = @transform_4, window_bounds = array<i64: 1, 2, 256>}]} {
    %c0 = arith.constant 0 : index
    %c0_0 = arith.constant 0 : index
    %0 = vector.load %arg2[%c0, %c0_0] : memref<2x36xf32, #tpu.memory_space<vmem>>, vector<2x36xf32>
    %c0_1 = arith.constant 0 : index
    %c0_2 = arith.constant 0 : index
    %c0_3 = arith.constant 0 : index
    %1 = vector.load %arg5[%c0_1, %c0_2, %c0_3] : memref<1x36x256xf32, #tpu.memory_space<vmem>>, vector<1x36x256xf32>
    %2 = vector.shape_cast %1 : vector<1x36x256xf32> to vector<36x256xf32>
    %cst = arith.constant dense<0.000000e+00> : vector<2x256xf32>
    %3 = tpu.matmul %0, %2, %cst {dimension_numbers = #tpu.dot_dimension_numbers<[1], [0], [0], [1], [0, 0, 1, 1], [], []>} : vector<2x36xf32>, vector<36x256xf32>, vector<2x256xf32> -> vector<2x256xf32>
    %c0_4 = arith.constant 0 : index
    %c0_5 = arith.constant 0 : index
    %4 = vector.load %arg3[%c0_4, %c0_5] : memref<2x1xf32, #tpu.memory_space<vmem>>, vector<2x1xf32>
    %5 = vector.broadcast %4 : vector<2x1xf32> to vector<2x256xf32>
    %6 = arith.mulf %3, %5 : vector<2x256xf32>
    %c0_6 = arith.constant 0 : index
    %c0_7 = arith.constant 0 : index
    %7 = vector.load %arg4[%c0_6, %c0_7] : memref<2x1xf32, #tpu.memory_space<vmem>>, vector<2x1xf32>
    %8 = vector.broadcast %7 : vector<2x1xf32> to vector<2x256xf32>
    %9 = arith.addf %6, %8 : vector<2x256xf32>
    %cst_8 = arith.constant 0.000000e+00 : f32
    %10 = vector.broadcast %cst_8 : f32 to vector<2x256xf32>
    %11 = arith.maximumf %9, %10 : vector<2x256xf32>
    %c0_9 = arith.constant 0 : index
    %c0_10 = arith.constant 0 : index
    %c0_11 = arith.constant 0 : index
    %12 = vector.load %arg6[%c0_9, %c0_10, %c0_11] : memref<1x2x256xf32, #tpu.memory_space<vmem>>, vector<1x2x256xf32>
    %13 = vector.shape_cast %12 : vector<1x2x256xf32> to vector<2x256xf32>
    %14 = vector.shape_cast %11 : vector<2x256xf32> to vector<1x2x256xf32>
    tpu.vector_store %arg6[%c0_9, %c0_10, %c0_11], %14 {strides = array<i32>} : memref<1x2x256xf32, #tpu.memory_space<vmem>>, vector<1x2x256xf32>,
    return
  }
  func.func @transform_0(%arg0: i32, %arg1: i32) -> (i32, i32) {
    %c0_i32 = arith.constant 0 : i32
    %c0_i32_0 = arith.constant 0 : i32
    %c0_i32_1 = arith.constant 0 : i32
    return %c0_i32, %c0_i32_0 : i32, i32
  }
  func.func @transform_1(%arg0: i32, %arg1: i32) -> (i32, i32) {
    %c0_i32 = arith.constant 0 : i32
    %c0_i32_0 = arith.constant 0 : i32
    %c0_i32_1 = arith.constant 0 : i32
    return %c0_i32, %c0_i32_0 : i32, i32
  }
  func.func @transform_2(%arg0: i32, %arg1: i32) -> (i32, i32) {
    %c0_i32 = arith.constant 0 : i32
    %c0_i32_0 = arith.constant 0 : i32
    %c0_i32_1 = arith.constant 0 : i32
    return %c0_i32, %c0_i32_0 : i32, i32
  }
  func.func @transform_3(%arg0: i32, %arg1: i32) -> (i32, i32, i32) {
    %c0_i32 = arith.constant 0 : i32
    %c0_i32_0 = arith.constant 0 : i32
    return %arg0, %c0_i32, %arg1 : i32, i32, i32
  }
  func.func @transform_4(%arg0: i32, %arg1: i32) -> (i32, i32, i32) {
    %c0_i32 = arith.constant 0 : i32
    %c0_i32_0 = arith.constant 0 : i32
    return %arg0, %c0_i32, %arg1 : i32, i32, i32
  }
}

module attributes {stable_mosaic.version = 11 : i64} {
  func.func @_conv_bn_relu_kernel(%arg0: i32, %arg1: i32, %arg2: memref<2x18xf32, #tpu.memory_space<vmem>>, %arg3: memref<2x1xf32, #tpu.memory_space<vmem>>, %arg4: memref<2x1xf32, #tpu.memory_space<vmem>>, %arg5: memref<1x18x256xf32, #tpu.memory_space<vmem>>, %arg6: memref<1x2x256xf32, #tpu.memory_space<vmem>>) attributes {dimension_semantics = [#tpu.dimension_semantics<parallel>, #tpu.dimension_semantics<parallel>], iteration_bounds = array<i64: 2, 1>, scalar_prefetch = 0 : i64, scratch_operands = 0 : i64, tpu.core_type = #tpu.core_type<tc>, window_params = [{pipeline_mode = #tpu.pipeline_mode<synchronous>, transform_indices = @transform_0, window_bounds = array<i64: 2, 18>}, {pipeline_mode = #tpu.pipeline_mode<synchronous>, transform_indices = @transform_1, window_bounds = array<i64: 2, 1>}, {pipeline_mode = #tpu.pipeline_mode<synchronous>, transform_indices = @transform_2, window_bounds = array<i64: 2, 1>}, {transform_indices = @transform_3, window_bounds = array<i64: 1, 18, 256>}, {transform_indices = @transform_4, window_bounds = array<i64: 1, 2, 256>}]} {
    %c0 = arith.constant 0 : index
    %c0_0 = arith.constant 0 : index
    %0 = vector.load %arg2[%c0, %c0_0] : memref<2x18xf32, #tpu.memory_space<vmem>>, vector<2x18xf32>
    %c0_1 = arith.constant 0 : index
    %c0_2 = arith.constant 0 : index
    %c0_3 = arith.constant 0 : index
    %1 = vector.load %arg5[%c0_1, %c0_2, %c0_3] : memref<1x18x256xf32, #tpu.memory_space<vmem>>, vector<1x18x256xf32>
    %2 = vector.shape_cast %1 : vector<1x18x256xf32> to vector<18x256xf32>
    %cst = arith.constant dense<0.000000e+00> : vector<2x256xf32>
    %3 = tpu.matmul %0, %2, %cst {dimension_numbers = #tpu.dot_dimension_numbers<[1], [0], [0], [1], [0, 0, 1, 1], [], []>} : vector<2x18xf32>, vector<18x256xf32>, vector<2x256xf32> -> vector<2x256xf32>
    %c0_4 = arith.constant 0 : index
    %c0_5 = arith.constant 0 : index
    %4 = vector.load %arg3[%c0_4, %c0_5] : memref<2x1xf32, #tpu.memory_space<vmem>>, vector<2x1xf32>
    %5 = vector.broadcast %4 : vector<2x1xf32> to vector<2x256xf32>
    %6 = arith.mulf %3, %5 : vector<2x256xf32>
    %c0_6 = arith.constant 0 : index
    %c0_7 = arith.constant 0 : index
    %7 = vector.load %arg4[%c0_6, %c0_7] : memref<2x1xf32, #tpu.memory_space<vmem>>, vector<2x1xf32>
    %8 = vector.broadcast %7 : vector<2x1xf32> to vector<2x256xf32>
    %9 = arith.addf %6, %8 : vector<2x256xf32>
    %cst_8 = arith.constant 0.000000e+00 : f32
    %10 = vector.broadcast %cst_8 : f32 to vector<2x256xf32>
    %11 = arith.maximumf %9, %10 : vector<2x256xf32>
    %c0_9 = arith.constant 0 : index
    %c0_10 = arith.constant 0 : index
    %c0_11 = arith.constant 0 : index
    %12 = vector.load %arg6[%c0_9, %c0_10, %c0_11] : memref<1x2x256xf32, #tpu.memory_space<vmem>>, vector<1x2x256xf32>
    %13 = vector.shape_cast %12 : vector<1x2x256xf32> to vector<2x256xf32>
    %14 = vector.shape_cast %11 : vector<2x256xf32> to vector<1x2x256xf32>
    tpu.vector_store %arg6[%c0_9, %c0_10, %c0_11], %14 {strides = array<i32>} : memref<1x2x256xf32, #tpu.memory_space<vmem>>, vector<1x2x256xf32>,
    return
  }
  func.func @transform_0(%arg0: i32, %arg1: i32) -> (i32, i32) {
    %c0_i32 = arith.constant 0 : i32
    %c0_i32_0 = arith.constant 0 : i32
    %c0_i32_1 = arith.constant 0 : i32
    return %c0_i32, %c0_i32_0 : i32, i32
  }
  func.func @transform_1(%arg0: i32, %arg1: i32) -> (i32, i32) {
    %c0_i32 = arith.constant 0 : i32
    %c0_i32_0 = arith.constant 0 : i32
    %c0_i32_1 = arith.constant 0 : i32
    return %c0_i32, %c0_i32_0 : i32, i32
  }
  func.func @transform_2(%arg0: i32, %arg1: i32) -> (i32, i32) {
    %c0_i32 = arith.constant 0 : i32
    %c0_i32_0 = arith.constant 0 : i32
    %c0_i32_1 = arith.constant 0 : i32
    return %c0_i32, %c0_i32_0 : i32, i32
  }
  func.func @transform_3(%arg0: i32, %arg1: i32) -> (i32, i32, i32) {
    %c0_i32 = arith.constant 0 : i32
    %c0_i32_0 = arith.constant 0 : i32
    return %arg0, %c0_i32, %arg1 : i32, i32, i32
  }
  func.func @transform_4(%arg0: i32, %arg1: i32) -> (i32, i32, i32) {
    %c0_i32 = arith.constant 0 : i32
    %c0_i32_0 = arith.constant 0 : i32
    return %arg0, %c0_i32, %arg1 : i32, i32, i32
  }
}

module attributes {stable_mosaic.version = 11 : i64} {
  func.func @_conv_bn_relu_res_kernel(%arg0: i32, %arg1: i32, %arg2: memref<4x18xf32, #tpu.memory_space<vmem>>, %arg3: memref<4x1xf32, #tpu.memory_space<vmem>>, %arg4: memref<4x1xf32, #tpu.memory_space<vmem>>, %arg5: memref<1x18x256xf32, #tpu.memory_space<vmem>>, %arg6: memref<1x4x256xf32, #tpu.memory_space<vmem>>, %arg7: memref<1x4x256xf32, #tpu.memory_space<vmem>>, %arg8: memref<1x4x256xf32, #tpu.memory_space<vmem>>) attributes {dimension_semantics = [#tpu.dimension_semantics<parallel>, #tpu.dimension_semantics<parallel>], iteration_bounds = array<i64: 2, 1>, scalar_prefetch = 0 : i64, scratch_operands = 0 : i64, tpu.core_type = #tpu.core_type<tc>, window_params = [{pipeline_mode = #tpu.pipeline_mode<synchronous>, transform_indices = @transform_0, window_bounds = array<i64: 4, 18>}, {pipeline_mode = #tpu.pipeline_mode<synchronous>, transform_indices = @transform_1, window_bounds = array<i64: 4, 1>}, {pipeline_mode = #tpu.pipeline_mode<synchronous>, transform_indices = @transform_2, window_bounds = array<i64: 4, 1>}, {transform_indices = @transform_3, window_bounds = array<i64: 1, 18, 256>}, {transform_indices = @transform_4, window_bounds = array<i64: 1, 4, 256>}, {transform_indices = @transform_5, window_bounds = array<i64: 1, 4, 256>}, {transform_indices = @transform_6, window_bounds = array<i64: 1, 4, 256>}]} {
    %c0 = arith.constant 0 : index
    %c0_0 = arith.constant 0 : index
    %0 = vector.load %arg2[%c0, %c0_0] : memref<4x18xf32, #tpu.memory_space<vmem>>, vector<4x18xf32>
    %c0_1 = arith.constant 0 : index
    %c0_2 = arith.constant 0 : index
    %c0_3 = arith.constant 0 : index
    %1 = vector.load %arg5[%c0_1, %c0_2, %c0_3] : memref<1x18x256xf32, #tpu.memory_space<vmem>>, vector<1x18x256xf32>
    %2 = vector.shape_cast %1 : vector<1x18x256xf32> to vector<18x256xf32>
    %cst = arith.constant dense<0.000000e+00> : vector<4x256xf32>
    %3 = tpu.matmul %0, %2, %cst {dimension_numbers = #tpu.dot_dimension_numbers<[1], [0], [0], [1], [0, 0, 1, 1], [], []>} : vector<4x18xf32>, vector<18x256xf32>, vector<4x256xf32> -> vector<4x256xf32>
    %c0_4 = arith.constant 0 : index
    %c0_5 = arith.constant 0 : index
    %4 = vector.load %arg3[%c0_4, %c0_5] : memref<4x1xf32, #tpu.memory_space<vmem>>, vector<4x1xf32>
    %5 = vector.broadcast %4 : vector<4x1xf32> to vector<4x256xf32>
    %6 = arith.mulf %3, %5 : vector<4x256xf32>
    %c0_6 = arith.constant 0 : index
    %c0_7 = arith.constant 0 : index
    %7 = vector.load %arg4[%c0_6, %c0_7] : memref<4x1xf32, #tpu.memory_space<vmem>>, vector<4x1xf32>
    %8 = vector.broadcast %7 : vector<4x1xf32> to vector<4x256xf32>
    %9 = arith.addf %6, %8 : vector<4x256xf32>
    %cst_8 = arith.constant 0.000000e+00 : f32
    %10 = vector.broadcast %cst_8 : f32 to vector<4x256xf32>
    %11 = arith.maximumf %9, %10 : vector<4x256xf32>
    %c0_9 = arith.constant 0 : index
    %c0_10 = arith.constant 0 : index
    %c0_11 = arith.constant 0 : index
    %12 = vector.load %arg7[%c0_9, %c0_10, %c0_11] : memref<1x4x256xf32, #tpu.memory_space<vmem>>, vector<1x4x256xf32>
    %13 = vector.shape_cast %12 : vector<1x4x256xf32> to vector<4x256xf32>
    %14 = vector.shape_cast %11 : vector<4x256xf32> to vector<1x4x256xf32>
    tpu.vector_store %arg7[%c0_9, %c0_10, %c0_11], %14 {strides = array<i32>} : memref<1x4x256xf32, #tpu.memory_space<vmem>>, vector<1x4x256xf32>,
    %c0_12 = arith.constant 0 : index
    %c0_13 = arith.constant 0 : index
    %c0_14 = arith.constant 0 : index
    %15 = vector.load %arg6[%c0_12, %c0_13, %c0_14] : memref<1x4x256xf32, #tpu.memory_space<vmem>>, vector<1x4x256xf32>
    %16 = vector.shape_cast %15 : vector<1x4x256xf32> to vector<4x256xf32>
    %17 = arith.subf %16, %11 : vector<4x256xf32>
    %c0_15 = arith.constant 0 : index
    %c0_16 = arith.constant 0 : index
    %c0_17 = arith.constant 0 : index
    %18 = vector.load %arg8[%c0_15, %c0_16, %c0_17] : memref<1x4x256xf32, #tpu.memory_space<vmem>>, vector<1x4x256xf32>
    %19 = vector.shape_cast %18 : vector<1x4x256xf32> to vector<4x256xf32>
    %20 = vector.shape_cast %17 : vector<4x256xf32> to vector<1x4x256xf32>
    tpu.vector_store %arg8[%c0_15, %c0_16, %c0_17], %20 {strides = array<i32>} : memref<1x4x256xf32, #tpu.memory_space<vmem>>, vector<1x4x256xf32>,
    return
  }
  func.func @transform_0(%arg0: i32, %arg1: i32) -> (i32, i32) {
    %c0_i32 = arith.constant 0 : i32
    %c0_i32_0 = arith.constant 0 : i32
    %c0_i32_1 = arith.constant 0 : i32
    return %c0_i32, %c0_i32_0 : i32, i32
  }
  func.func @transform_1(%arg0: i32, %arg1: i32) -> (i32, i32) {
    %c0_i32 = arith.constant 0 : i32
    %c0_i32_0 = arith.constant 0 : i32
    %c0_i32_1 = arith.constant 0 : i32
    return %c0_i32, %c0_i32_0 : i32, i32
  }
  func.func @transform_2(%arg0: i32, %arg1: i32) -> (i32, i32) {
    %c0_i32 = arith.constant 0 : i32
    %c0_i32_0 = arith.constant 0 : i32
    %c0_i32_1 = arith.constant 0 : i32
    return %c0_i32, %c0_i32_0 : i32, i32
  }
  func.func @transform_3(%arg0: i32, %arg1: i32) -> (i32, i32, i32) {
    %c0_i32 = arith.constant 0 : i32
    %c0_i32_0 = arith.constant 0 : i32
    return %arg0, %c0_i32, %arg1 : i32, i32, i32
  }
  func.func @transform_4(%arg0: i32, %arg1: i32) -> (i32, i32, i32) {
    %c0_i32 = arith.constant 0 : i32
    %c0_i32_0 = arith.constant 0 : i32
    return %arg0, %c0_i32, %arg1 : i32, i32, i32
  }
  func.func @transform_5(%arg0: i32, %arg1: i32) -> (i32, i32, i32) {
    %c0_i32 = arith.constant 0 : i32
    %c0_i32_0 = arith.constant 0 : i32
    return %arg0, %c0_i32, %arg1 : i32, i32, i32
  }
  func.func @transform_6(%arg0: i32, %arg1: i32) -> (i32, i32, i32) {
    %c0_i32 = arith.constant 0 : i32
    %c0_i32_0 = arith.constant 0 : i32
    return %arg0, %c0_i32, %arg1 : i32, i32, i32
  }
}

module attributes {stable_mosaic.version = 11 : i64} {
  func.func @_conv_bn_relu_res_kernel(%arg0: i32, %arg1: i32, %arg2: memref<4x4xf32, #tpu.memory_space<vmem>>, %arg3: memref<4x1xf32, #tpu.memory_space<vmem>>, %arg4: memref<4x1xf32, #tpu.memory_space<vmem>>, %arg5: memref<1x4x256xf32, #tpu.memory_space<vmem>>, %arg6: memref<1x4x256xf32, #tpu.memory_space<vmem>>, %arg7: memref<1x4x256xf32, #tpu.memory_space<vmem>>, %arg8: memref<1x4x256xf32, #tpu.memory_space<vmem>>) attributes {dimension_semantics = [#tpu.dimension_semantics<parallel>, #tpu.dimension_semantics<parallel>], iteration_bounds = array<i64: 2, 1>, scalar_prefetch = 0 : i64, scratch_operands = 0 : i64, tpu.core_type = #tpu.core_type<tc>, window_params = [{pipeline_mode = #tpu.pipeline_mode<synchronous>, transform_indices = @transform_0, window_bounds = array<i64: 4, 4>}, {pipeline_mode = #tpu.pipeline_mode<synchronous>, transform_indices = @transform_1, window_bounds = array<i64: 4, 1>}, {pipeline_mode = #tpu.pipeline_mode<synchronous>, transform_indices = @transform_2, window_bounds = array<i64: 4, 1>}, {transform_indices = @transform_3, window_bounds = array<i64: 1, 4, 256>}, {transform_indices = @transform_4, window_bounds = array<i64: 1, 4, 256>}, {transform_indices = @transform_5, window_bounds = array<i64: 1, 4, 256>}, {transform_indices = @transform_6, window_bounds = array<i64: 1, 4, 256>}]} {
    %c0 = arith.constant 0 : index
    %c0_0 = arith.constant 0 : index
    %0 = vector.load %arg2[%c0, %c0_0] : memref<4x4xf32, #tpu.memory_space<vmem>>, vector<4x4xf32>
    %c0_1 = arith.constant 0 : index
    %c0_2 = arith.constant 0 : index
    %c0_3 = arith.constant 0 : index
    %1 = vector.load %arg5[%c0_1, %c0_2, %c0_3] : memref<1x4x256xf32, #tpu.memory_space<vmem>>, vector<1x4x256xf32>
    %2 = vector.shape_cast %1 : vector<1x4x256xf32> to vector<4x256xf32>
    %cst = arith.constant dense<0.000000e+00> : vector<4x256xf32>
    %3 = tpu.matmul %0, %2, %cst {dimension_numbers = #tpu.dot_dimension_numbers<[1], [0], [0], [1], [0, 0, 1, 1], [], []>} : vector<4x4xf32>, vector<4x256xf32>, vector<4x256xf32> -> vector<4x256xf32>
    %c0_4 = arith.constant 0 : index
    %c0_5 = arith.constant 0 : index
    %4 = vector.load %arg3[%c0_4, %c0_5] : memref<4x1xf32, #tpu.memory_space<vmem>>, vector<4x1xf32>
    %5 = vector.broadcast %4 : vector<4x1xf32> to vector<4x256xf32>
    %6 = arith.mulf %3, %5 : vector<4x256xf32>
    %c0_6 = arith.constant 0 : index
    %c0_7 = arith.constant 0 : index
    %7 = vector.load %arg4[%c0_6, %c0_7] : memref<4x1xf32, #tpu.memory_space<vmem>>, vector<4x1xf32>
    %8 = vector.broadcast %7 : vector<4x1xf32> to vector<4x256xf32>
    %9 = arith.addf %6, %8 : vector<4x256xf32>
    %cst_8 = arith.constant 0.000000e+00 : f32
    %10 = vector.broadcast %cst_8 : f32 to vector<4x256xf32>
    %11 = arith.maximumf %9, %10 : vector<4x256xf32>
    %c0_9 = arith.constant 0 : index
    %c0_10 = arith.constant 0 : index
    %c0_11 = arith.constant 0 : index
    %12 = vector.load %arg7[%c0_9, %c0_10, %c0_11] : memref<1x4x256xf32, #tpu.memory_space<vmem>>, vector<1x4x256xf32>
    %13 = vector.shape_cast %12 : vector<1x4x256xf32> to vector<4x256xf32>
    %14 = vector.shape_cast %11 : vector<4x256xf32> to vector<1x4x256xf32>
    tpu.vector_store %arg7[%c0_9, %c0_10, %c0_11], %14 {strides = array<i32>} : memref<1x4x256xf32, #tpu.memory_space<vmem>>, vector<1x4x256xf32>,
    %c0_12 = arith.constant 0 : index
    %c0_13 = arith.constant 0 : index
    %c0_14 = arith.constant 0 : index
    %15 = vector.load %arg6[%c0_12, %c0_13, %c0_14] : memref<1x4x256xf32, #tpu.memory_space<vmem>>, vector<1x4x256xf32>
    %16 = vector.shape_cast %15 : vector<1x4x256xf32> to vector<4x256xf32>
    %17 = arith.subf %16, %11 : vector<4x256xf32>
    %c0_15 = arith.constant 0 : index
    %c0_16 = arith.constant 0 : index
    %c0_17 = arith.constant 0 : index
    %18 = vector.load %arg8[%c0_15, %c0_16, %c0_17] : memref<1x4x256xf32, #tpu.memory_space<vmem>>, vector<1x4x256xf32>
    %19 = vector.shape_cast %18 : vector<1x4x256xf32> to vector<4x256xf32>
    %20 = vector.shape_cast %17 : vector<4x256xf32> to vector<1x4x256xf32>
    tpu.vector_store %arg8[%c0_15, %c0_16, %c0_17], %20 {strides = array<i32>} : memref<1x4x256xf32, #tpu.memory_space<vmem>>, vector<1x4x256xf32>,
    return
  }
  func.func @transform_0(%arg0: i32, %arg1: i32) -> (i32, i32) {
    %c0_i32 = arith.constant 0 : i32
    %c0_i32_0 = arith.constant 0 : i32
    %c0_i32_1 = arith.constant 0 : i32
    return %c0_i32, %c0_i32_0 : i32, i32
  }
  func.func @transform_1(%arg0: i32, %arg1: i32) -> (i32, i32) {
    %c0_i32 = arith.constant 0 : i32
    %c0_i32_0 = arith.constant 0 : i32
    %c0_i32_1 = arith.constant 0 : i32
    return %c0_i32, %c0_i32_0 : i32, i32
  }
  func.func @transform_2(%arg0: i32, %arg1: i32) -> (i32, i32) {
    %c0_i32 = arith.constant 0 : i32
    %c0_i32_0 = arith.constant 0 : i32
    %c0_i32_1 = arith.constant 0 : i32
    return %c0_i32, %c0_i32_0 : i32, i32
  }
  func.func @transform_3(%arg0: i32, %arg1: i32) -> (i32, i32, i32) {
    %c0_i32 = arith.constant 0 : i32
    %c0_i32_0 = arith.constant 0 : i32
    return %arg0, %c0_i32, %arg1 : i32, i32, i32
  }
  func.func @transform_4(%arg0: i32, %arg1: i32) -> (i32, i32, i32) {
    %c0_i32 = arith.constant 0 : i32
    %c0_i32_0 = arith.constant 0 : i32
    return %arg0, %c0_i32, %arg1 : i32, i32, i32
  }
  func.func @transform_5(%arg0: i32, %arg1: i32) -> (i32, i32, i32) {
    %c0_i32 = arith.constant 0 : i32
    %c0_i32_0 = arith.constant 0 : i32
    return %arg0, %c0_i32, %arg1 : i32, i32, i32
  }
  func.func @transform_6(%arg0: i32, %arg1: i32) -> (i32, i32, i32) {
    %c0_i32 = arith.constant 0 : i32
    %c0_i32_0 = arith.constant 0 : i32
    return %arg0, %c0_i32, %arg1 : i32, i32, i32
  }
}

module attributes {stable_mosaic.version = 11 : i64} {
  func.func @_project_pair_kernel(%arg0: i32, %arg1: i32, %arg2: memref<64x20xf32, #tpu.memory_space<vmem>>, %arg3: memref<64x1xf32, #tpu.memory_space<vmem>>, %arg4: memref<64x1xf32, #tpu.memory_space<vmem>>, %arg5: memref<1x20x256xf32, #tpu.memory_space<vmem>>, %arg6: memref<1x20x256xf32, #tpu.memory_space<vmem>>, %arg7: memref<1x64x256xf32, #tpu.memory_space<vmem>>) attributes {dimension_semantics = [#tpu.dimension_semantics<parallel>, #tpu.dimension_semantics<parallel>], iteration_bounds = array<i64: 2, 1>, scalar_prefetch = 0 : i64, scratch_operands = 0 : i64, tpu.core_type = #tpu.core_type<tc>, window_params = [{pipeline_mode = #tpu.pipeline_mode<synchronous>, transform_indices = @transform_0, window_bounds = array<i64: 64, 20>}, {pipeline_mode = #tpu.pipeline_mode<synchronous>, transform_indices = @transform_1, window_bounds = array<i64: 64, 1>}, {pipeline_mode = #tpu.pipeline_mode<synchronous>, transform_indices = @transform_2, window_bounds = array<i64: 64, 1>}, {transform_indices = @transform_3, window_bounds = array<i64: 1, 20, 256>}, {transform_indices = @transform_4, window_bounds = array<i64: 1, 20, 256>}, {transform_indices = @transform_5, window_bounds = array<i64: 1, 64, 256>}]} {
    %c0 = arith.constant 0 : index
    %c0_0 = arith.constant 0 : index
    %0 = vector.load %arg2[%c0, %c0_0] : memref<64x20xf32, #tpu.memory_space<vmem>>, vector<64x20xf32>
    %c0_1 = arith.constant 0 : index
    %c0_2 = arith.constant 0 : index
    %1 = vector.load %arg3[%c0_1, %c0_2] : memref<64x1xf32, #tpu.memory_space<vmem>>, vector<64x1xf32>
    %c0_3 = arith.constant 0 : index
    %c0_4 = arith.constant 0 : index
    %2 = vector.load %arg4[%c0_3, %c0_4] : memref<64x1xf32, #tpu.memory_space<vmem>>, vector<64x1xf32>
    %c0_5 = arith.constant 0 : index
    %c0_6 = arith.constant 0 : index
    %c0_7 = arith.constant 0 : index
    %3 = vector.load %arg5[%c0_5, %c0_6, %c0_7] : memref<1x20x256xf32, #tpu.memory_space<vmem>>, vector<1x20x256xf32>
    %4 = vector.shape_cast %3 : vector<1x20x256xf32> to vector<20x256xf32>
    %cst = arith.constant dense<0.000000e+00> : vector<64x256xf32>
    %5 = tpu.matmul %0, %4, %cst {dimension_numbers = #tpu.dot_dimension_numbers<[1], [0], [0], [1], [0, 0, 1, 1], [], []>} : vector<64x20xf32>, vector<20x256xf32>, vector<64x256xf32> -> vector<64x256xf32>
    %6 = vector.broadcast %1 : vector<64x1xf32> to vector<64x256xf32>
    %7 = arith.mulf %5, %6 : vector<64x256xf32>
    %8 = vector.broadcast %2 : vector<64x1xf32> to vector<64x256xf32>
    %9 = arith.addf %7, %8 : vector<64x256xf32>
    %cst_8 = arith.constant 0.000000e+00 : f32
    %10 = vector.broadcast %cst_8 : f32 to vector<64x256xf32>
    %11 = arith.maximumf %9, %10 : vector<64x256xf32>
    %c0_9 = arith.constant 0 : index
    %c0_10 = arith.constant 0 : index
    %c0_11 = arith.constant 0 : index
    %12 = vector.load %arg6[%c0_9, %c0_10, %c0_11] : memref<1x20x256xf32, #tpu.memory_space<vmem>>, vector<1x20x256xf32>
    %13 = vector.shape_cast %12 : vector<1x20x256xf32> to vector<20x256xf32>
    %cst_12 = arith.constant dense<0.000000e+00> : vector<64x256xf32>
    %14 = tpu.matmul %0, %13, %cst_12 {dimension_numbers = #tpu.dot_dimension_numbers<[1], [0], [0], [1], [0, 0, 1, 1], [], []>} : vector<64x20xf32>, vector<20x256xf32>, vector<64x256xf32> -> vector<64x256xf32>
    %15 = vector.broadcast %1 : vector<64x1xf32> to vector<64x256xf32>
    %16 = arith.mulf %14, %15 : vector<64x256xf32>
    %17 = vector.broadcast %2 : vector<64x1xf32> to vector<64x256xf32>
    %18 = arith.addf %16, %17 : vector<64x256xf32>
    %cst_13 = arith.constant 0.000000e+00 : f32
    %19 = vector.broadcast %cst_13 : f32 to vector<64x256xf32>
    %20 = arith.maximumf %18, %19 : vector<64x256xf32>
    %21 = arith.addf %11, %20 : vector<64x256xf32>
    %c0_14 = arith.constant 0 : index
    %c0_15 = arith.constant 0 : index
    %c0_16 = arith.constant 0 : index
    %22 = vector.load %arg7[%c0_14, %c0_15, %c0_16] : memref<1x64x256xf32, #tpu.memory_space<vmem>>, vector<1x64x256xf32>
    %23 = vector.shape_cast %22 : vector<1x64x256xf32> to vector<64x256xf32>
    %24 = vector.shape_cast %21 : vector<64x256xf32> to vector<1x64x256xf32>
    tpu.vector_store %arg7[%c0_14, %c0_15, %c0_16], %24 {strides = array<i32>} : memref<1x64x256xf32, #tpu.memory_space<vmem>>, vector<1x64x256xf32>,
    return
  }
  func.func @transform_0(%arg0: i32, %arg1: i32) -> (i32, i32) {
    %c0_i32 = arith.constant 0 : i32
    %c0_i32_0 = arith.constant 0 : i32
    %c0_i32_1 = arith.constant 0 : i32
    return %c0_i32, %c0_i32_0 : i32, i32
  }
  func.func @transform_1(%arg0: i32, %arg1: i32) -> (i32, i32) {
    %c0_i32 = arith.constant 0 : i32
    %c0_i32_0 = arith.constant 0 : i32
    %c0_i32_1 = arith.constant 0 : i32
    return %c0_i32, %c0_i32_0 : i32, i32
  }
  func.func @transform_2(%arg0: i32, %arg1: i32) -> (i32, i32) {
    %c0_i32 = arith.constant 0 : i32
    %c0_i32_0 = arith.constant 0 : i32
    %c0_i32_1 = arith.constant 0 : i32
    return %c0_i32, %c0_i32_0 : i32, i32
  }
  func.func @transform_3(%arg0: i32, %arg1: i32) -> (i32, i32, i32) {
    %c0_i32 = arith.constant 0 : i32
    %c0_i32_0 = arith.constant 0 : i32
    return %arg0, %c0_i32, %arg1 : i32, i32, i32
  }
  func.func @transform_4(%arg0: i32, %arg1: i32) -> (i32, i32, i32) {
    %c0_i32 = arith.constant 0 : i32
    %c0_i32_0 = arith.constant 0 : i32
    return %arg0, %c0_i32, %arg1 : i32, i32, i32
  }
  func.func @transform_5(%arg0: i32, %arg1: i32) -> (i32, i32, i32) {
    %c0_i32 = arith.constant 0 : i32
    %c0_i32_0 = arith.constant 0 : i32
    return %arg0, %c0_i32, %arg1 : i32, i32, i32
  }
}

</mosaic_0001>

<llo_original>
// kernel: iam_forward.18
$region0: #{iam_forward.18}
  #allocation0 [shape = 'u32[]', space=smem, size = 0x4, offset = 0x4, fixed_abs, tag = 'smem constant byte address 0x4 - core index']
  #allocation1 [shape = 'u32[72,128]{1,0:T(1,128)}', space=vmem, size = 0x9000, scoped, tag = 'internal scratch']
  %s0 = inlined_call_operand.vmem [shape: f32[2,100], index: 0, kind: input, shape index: {}]
  %s1 = inlined_call_operand.vmem [shape: f32[2,1], index: 1, kind: input, shape index: {}]
  %s2 = inlined_call_operand.vmem [shape: f32[2,1], index: 2, kind: input, shape index: {}]
  %s3 = inlined_call_operand.vmem [shape: f32[2,100,256], index: 3, kind: input, shape index: {}]
  %s4 = inlined_call_operand.vmem [shape: f32[2,2,256], index: 4, kind: output, shape index: {}]
  %s5 = sld [smem:[#allocation0]]
  $region49: #{iam_forward.18} parent=0
    _
  %s7 = ssub.s32 1, %s5
  %s8 = scalar_select 0, %s7, %s5
  loop: start=0, step=1, limit=4
  $region2: #{iam_forward.18} parent=0 // loop_pre_header
    _
  $region3: #{iam_forward.18} parent=0 // loop_header
    %s10 = sphi 0, %s14
    %p11 = scmp.ge.s32.totalorder %s10, 4
    %s17 = sphi 0, %s29
    %s18 = sphi 0, %s25
    %s19 = sphi 0, %s17
    %s20 = sphi 0, %s18
    %s21 = sphi 0, %s19
    %s22 = sphi 0, %s20
    %s30 = sphi 0, %s30
    %s32 = sphi 0, %s30
    %s33 = sphi 0, %s32
    %s47 = sphi 0, %s33
    %s51 = sphi 0, %s51
    %s53 = sphi 0, %s51
    %s54 = sphi 0, %s53
    %s68 = sphi 0, %s54
    %s72 = sphi 0, %s72
    %s74 = sphi 0, %s72
    %s75 = sphi 0, %s74
    %s89 = sphi 0, %s75
    %s97 = sphi 0, %s99
    %s100 = sphi 0, %s97
    %s101 = sphi 0, %s100
    %s117 = sphi 0, %s101
    %s125 = sphi 0, %s127
    %s128 = sphi 0, %s125
    %s129 = sphi 0, %s128
    %s145 = sphi 0, %s129
  $region4: #{iam_forward.18} parent=0 // loop_header_branch
    %13 = sbr.rel (%p11) target = $region8
  $region5: #{iam_forward.18} parent=0 // loop_body
    %s15 = ssub.s32 %s10, 1
    %s16 = ssub.s32 %s10, 2
    %s23 = sadd.s32 1, %s18
    %p24 = scmp.ge.s32.totalorder %s23, 1
    %s25 = scalar_select %p24, 0, %s23
    %s26 = sadd.s32 1, %s17
    %s27 = scalar_select %p24, %s26, %s17
    %p28 = scmp.ge.s32.totalorder %s27, 2
    %s29 = scalar_select %p28, 0, %s27
    %s31 = sadd.s32 %s30, 1
    %p34 = scmp.eq.s32.totalorder %s10, 1
    %p35 = scmp.ne.s32.totalorder %s30, %s32
    %p36 = scmp.eq.s32.totalorder %s10, 0
    %p37 = por %p35, %p36
    %p38 = scmp.ne.s32.totalorder %s30, %s32
    %p39 = scmp.eq.s32.totalorder %s15, 1
    %p40 = por %p38, %p39
    %p41 = scmp.ne.s32.totalorder %s32, %s33
    %p42 = scmp.eq.s32.totalorder %s15, 0
    %p43 = por %p41, %p42
    %p44 = scmp.ne.s32.totalorder %s32, %s33
    %p45 = scmp.eq.s32.totalorder %s16, 1
    %p46 = por %p44, %p45
    %p48 = scmp.ne.s32.totalorder %s33, %s47
    %p49 = scmp.eq.s32.totalorder %s16, 0
    %p50 = por %p48, %p49
    %s52 = sadd.s32 %s51, 1
    %p55 = scmp.eq.s32.totalorder %s10, 1
    %p56 = scmp.ne.s32.totalorder %s51, %s53
    %p57 = scmp.eq.s32.totalorder %s10, 0
    %p58 = por %p56, %p57
    %p59 = scmp.ne.s32.totalorder %s51, %s53
    %p60 = scmp.eq.s32.totalorder %s15, 1
    %p61 = por %p59, %p60
    %p62 = scmp.ne.s32.totalorder %s53, %s54
    %p63 = scmp.eq.s32.totalorder %s15, 0
    %p64 = por %p62, %p63
    %p65 = scmp.ne.s32.totalorder %s53, %s54
    %p66 = scmp.eq.s32.totalorder %s16, 1
    %p67 = por %p65, %p66
    %p69 = scmp.ne.s32.totalorder %s54, %s68
    %p70 = scmp.eq.s32.totalorder %s16, 0
    %p71 = por %p69, %p70
    %s73 = sadd.s32 %s72, 1
    %p76 = scmp.eq.s32.totalorder %s10, 1
    %p77 = scmp.ne.s32.totalorder %s72, %s74
    %p78 = scmp.eq.s32.totalorder %s10, 0
    %p79 = por %p77, %p78
    %p80 = scmp.ne.s32.totalorder %s72, %s74
    %p81 = scmp.eq.s32.totalorder %s15, 1
    %p82 = por %p80, %p81
    %p83 = scmp.ne.s32.totalorder %s74, %s75
    %p84 = scmp.eq.s32.totalorder %s15, 0
    %p85 = por %p83, %p84
    %p86 = scmp.ne.s32.totalorder %s74, %s75
    %p87 = scmp.eq.s32.totalorder %s16, 1
    %p88 = por %p86, %p87
    %p90 = scmp.ne.s32.totalorder %s75, %s89
    %p91 = scmp.eq.s32.totalorder %s16, 0
    %p92 = por %p90, %p91
    %s93 = ssub.s32 %s17, %s29
    %s94 = ssub.s32 %s18, %s25
    %s95 = sor.u32 %s93, %s94
    %p96 = scmp.eq.s32.totalorder %s95, 0
    %s98 = sadd.s32 %s97, 1
    %s99 = scalar_select %p96, %s97, %s98
    %p102 = pneg %p96
    %p103 = scmp.eq.s32.totalorder %s10, 1
    %p104 = por %p102, %p103
    %p105 = scmp.ne.s32.totalorder %s97, %s100
    %p106 = scmp.eq.s32.totalorder %s10, 0
    %p107 = por %p105, %p106
    %p108 = scmp.ne.s32.totalorder %s97, %s100
    %p109 = scmp.eq.s32.totalorder %s15, 1
    %p110 = por %p108, %p109
    %p111 = scmp.ne.s32.totalorder %s100, %s101
    %p112 = scmp.eq.s32.totalorder %s15, 0
    %p113 = por %p111, %p112
    %p114 = scmp.ne.s32.totalorder %s100, %s101
    %p115 = scmp.eq.s32.totalorder %s16, 1
    %p116 = por %p114, %p115
    %p118 = scmp.ne.s32.totalorder %s101, %s117
    %p119 = scmp.eq.s32.totalorder %s16, 0
    %p120 = por %p118, %p119
    %s121 = ssub.s32 %s17, %s29
    %s122 = ssub.s32 %s18, %s25
    %s123 = sor.u32 %s121, %s122
    %p124 = scmp.eq.s32.totalorder %s123, 0
    %s126 = sadd.s32 %s125, 1
    %s127 = scalar_select %p124, %s125, %s126
    %p130 = pneg %p124
    %p131 = scmp.eq.s32.totalorder %s10, 1
    %p132 = por %p130, %p131
    %p133 = scmp.ne.s32.totalorder %s125, %s128
    %p134 = scmp.eq.s32.totalorder %s10, 0
    %p135 = por %p133, %p134
    %p136 = scmp.ne.s32.totalorder %s125, %s128
    %p137 = scmp.eq.s32.totalorder %s15, 1
    %p138 = por %p136, %p137
    %p139 = scmp.ne.s32.totalorder %s128, %s129
    %p140 = scmp.eq.s32.totalorder %s15, 0
    %p141 = por %p139, %p140
    %p142 = scmp.ne.s32.totalorder %s128, %s129
    %p143 = scmp.eq.s32.totalorder %s16, 1
    %p144 = por %p142, %p143
    %p146 = scmp.ne.s32.totalorder %s129, %s145
    %p147 = scmp.eq.s32.totalorder %s16, 0
    %p148 = por %p146, %p147
    %p149 = scmp.le.s32.totalorder 1, %s10
    %p150 = scmp.lt.s32.totalorder %s10, 3
    %p151 = pnand %p149, %p150
    %p152 = pneg %p151
    // Predicated region
    $region9: #{iam_forward.18} parent=5 // pred_check
      _
    $region10: #{iam_forward.18} parent=5 // pred_check_branch
      %154 = sbr.rel (%p151) target = $region12
    $region11: #{iam_forward.18} parent=5 // pred_region
      %s155 = ssub.s32 %s10, 1
      // Predicated region
      $region13: #{iam_forward.18} parent=11 // pred_check
        %p156 = pneg %p43
      $region14: #{iam_forward.18} parent=11 // pred_check_branch
        %158 = sbr.rel (%p156) target = $region16
      $region15: #{iam_forward.18} parent=11 // pred_region
        _
      $region16: #{iam_forward.18} parent=11 // pred_fallthru
        _
      // Predicated region
      $region17: #{iam_forward.18} parent=11 // pred_check
        %p159 = pneg %p64
      $region18: #{iam_forward.18} parent=11 // pred_check_branch
        %161 = sbr.rel (%p159) target = $region20
      $region19: #{iam_forward.18} parent=11 // pred_region
        _
      $region20: #{iam_forward.18} parent=11 // pred_fallthru
        _
      // Predicated region
      $region21: #{iam_forward.18} parent=11 // pred_check
        %p162 = pneg %p85
      $region22: #{iam_forward.18} parent=11 // pred_check_branch
        %164 = sbr.rel (%p162) target = $region24
      $region23: #{iam_forward.18} parent=11 // pred_region
        _
      $region24: #{iam_forward.18} parent=11 // pred_fallthru
        _
    $region12: #{iam_forward.18} parent=5 // pred_fallthru
      _
    %p165 = scmp.lt.s32.totalorder %s10, 2
    // Predicated region
    $region25: #{iam_forward.18} parent=5 // pred_check
      %p166 = pneg %p165
    $region26: #{iam_forward.18} parent=5 // pred_check_branch
      %168 = sbr.rel (%p166) target = $region28
    $region27: #{iam_forward.18} parent=5 // pred_region
      // Predicated region
      $region29: #{iam_forward.18} parent=27 // pred_check
        %p169 = pneg %p107
      $region30: #{iam_forward.18} parent=27 // pred_check_branch
        %171 = sbr.rel (%p169) target = $region32
      $region31: #{iam_forward.18} parent=27 // pred_region
        %s172 = smul.u32 2, %s18
        %p173 = scmp.lt.s32.totalorder %s17, 1
        %s174 = scalar_select %p173, %s17, 1
        %p175 = scmp.lt.s32.totalorder %s172, 1
        %s176 = scalar_select %p175, %s172, 1
        %s177 = smul.addr %s174, 26
        %s178 = sadd.s32 %s176, %s177
        %s179 = smul.addr %s178, 8
        %s180 = scalar_lea.vmem %s3, %s179
        %s181 = smul.u32 2, %s18
      $region32: #{iam_forward.18} parent=27 // pred_fallthru
        _
    $region28: #{iam_forward.18} parent=5 // pred_fallthru
      _
    %p182 = scmp.le.s32.totalorder 1, %s10
    %p183 = scmp.lt.s32.totalorder %s10, 3
    %p184 = pnand %p182, %p183
    %p185 = pneg %p184
    // Predicated region
    $region33: #{iam_forward.18} parent=5 // pred_check
      _
    $region34: #{iam_forward.18} parent=5 // pred_check_branch
      %187 = sbr.rel (%p184) target = $region36
    $region35: #{iam_forward.18} parent=5 // pred_region
      %s188 = ssub.s32 %s10, 1
      %p189 = pneg %p43
      %p190 = pneg %p40
      %p191 = pneg %p64
      %p192 = pneg %p61
      %p193 = pneg %p85
      %p194 = pneg %p82
      %s195 = smul.u32 2, %s20
      %p196 = scmp.lt.s32.totalorder %s19, 1
      %s197 = scalar_select %p196, %s19, 1
      %p198 = scmp.lt.s32.totalorder %s195, 1
      %s199 = scalar_select %p198, %s195, 1
      %s200 = smul.addr %s197, 26
      %s201 = sadd.s32 %s199, %s200
      %s202 = smul.addr %s201, 8
      %s203 = scalar_lea.vmem %s3, %s202
      %p204 = pneg %p113
      %p205 = pneg %p110
      %p206 = pneg %p141
      %p207 = pneg %p138
      %s208 = smul.u32 2, %s20
      %p209 = scmp.lt.s32.totalorder %s19, 1
      %s210 = scalar_select %p209, %s19, 1
      %p211 = scmp.lt.s32.totalorder %s208, 1
      %s212 = scalar_select %p211, %s208, 1
      %s213 = smul.addr %s210, 2
      %s214 = sadd.s32 %s212, %s213
      %s215 = smul.addr %s214, 2
      %s216 = scalar_lea.vmem %s4, %s215
      %s217 = smul.u32 2, %s20
      %p218 = scmp.lt.s32.totalorder %s19, 1
      %s219 = scalar_select %p218, %s19, 1
      %p220 = scmp.lt.s32.totalorder %s217, 1
      %s221 = scalar_select %p220, %s217, 1
      %s222 = smul.addr %s219, 26
      %s223 = sadd.s32 %s221, %s222
      %s224 = smul.addr %s223, 8
      %s225 = scalar_lea.vmem %s3, %s224
      %s226 = smul.u32 2, %s20
      %s227 = smul.u32 2, %s20
      %p228 = scmp.lt.s32.totalorder %s19, 1
      %s229 = scalar_select %p228, %s19, 1
      %p230 = scmp.lt.s32.totalorder %s227, 1
      %s231 = scalar_select %p230, %s227, 1
      %s232 = smul.addr %s229, 2
      %s233 = sadd.s32 %s231, %s232
      %s234 = smul.addr %s233, 2
      %s235 = scalar_lea.vmem %s4, %s234
      %s236 = smul.u32 2, %s20
      %v237 = vld [vmem:[%s0] sm:$0x3]
      %v238 = vld [vmem:[%s225] sm:$0xff]
      %v239 = vld [vmem:[%s225 + $0x8] sm:$0xff]
      %v240 = vld [vmem:[%s225 + $0x10] sm:$0xff]
      %v241 = vld [vmem:[%s225 + $0x18] sm:$0xff]
      %v242 = vld [vmem:[%s225 + $0x20] sm:$0xff]
      %v243 = vld [vmem:[%s225 + $0x28] sm:$0xff]
      %v244 = vld [vmem:[%s225 + $0x30] sm:$0xff]
      %v245 = vld [vmem:[%s225 + $0x38] sm:$0xff]
      %v246 = vld [vmem:[%s225 + $0x40] sm:$0xff]
      %v247 = vld [vmem:[%s225 + $0x48] sm:$0xff]
      %v248 = vld [vmem:[%s225 + $0x50] sm:$0xff]
      %v249 = vld [vmem:[%s225 + $0x58] sm:$0xff]
      %v250 = vld [vmem:[%s225 + $0x60] sm:$0xff]
      %v251 = vld [vmem:[%s225 + $0x68] sm:$0xff]
      %v252 = vld [vmem:[%s225 + $0x70] sm:$0xff]
      %v253 = vld [vmem:[%s225 + $0x78] sm:$0xff]
      %v254 = vld [vmem:[%s225 + $0x80] sm:$0xff]
      %v255 = vld [vmem:[%s225 + $0x88] sm:$0xff]
      %v256 = vld [vmem:[%s225 + $0x90] sm:$0xff]
      %v257 = vld [vmem:[%s225 + $0x98] sm:$0xff]
      %v258 = vld [vmem:[%s225 + $0xa0] sm:$0xff]
      %v259 = vld [vmem:[%s225 + $0xa8] sm:$0xff]
      %v260 = vld [vmem:[%s225 + $0xb0] sm:$0xff]
      %v261 = vld [vmem:[%s225 + $0xb8] sm:$0xff]
      %v262 = vld [vmem:[%s225 + $0xc0] sm:$0xf]
      %v263 = vld [vmem:[%s225 + $0xc8] sm:$0xf]
      %vm264 = vcmask 818176
      %v266 = vsel %vm264, %v237, 0
      %vm268 = vcmask 1043456
      %v270 = vsel %vm268, %v262, 0
      %v273 = vsel %vm268, %v263, 0
      %275 = vmatpush.msra.mxu0 0.0
      %276 = vmatpush.msra.mxu0 0.0
      %277 = vmatpush.msra.mxu0 0.0
      %278 = vmatpush.msra.mxu0 %v270
      %279 = vmatpush.msra.mxu0 %v260
      %280 = vmatpush.msra.mxu0 %v258
      %281 = vmatpush.msra.mxu0 %v256
      %282 = vmatpush.msra.mxu0 %v254
      %283 = vmatpush.msra.mxu0 %v252
      %284 = vmatpush.msra.mxu0 %v250
      %285 = vmatpush.msra.mxu0 %v248
      %286 = vmatpush.msra.mxu0 %v246
      %287 = vmatpush.msra.mxu0 %v244
      %288 = vmatpush.msra.mxu0 %v242
      %289 = vmatpush.msra.mxu0 %v240
      %290 = vmatpush.msra.mxu0 %v238
      %291 = vmatmul.f32.gmra.mxu0 %v266
      %v292 = vpop.f32.mrf.mxu0
      %v293 = vadd.f32 0.0, %v292
      %294 = vdwg.mxu0
      %295 = vmatpush.msra.mxu0 0.0
      %296 = vmatpush.msra.mxu0 0.0
      %297 = vmatpush.msra.mxu0 0.0
      %298 = vmatpush.msra.mxu0 %v273
      %299 = vmatpush.msra.mxu0 %v261
      %300 = vmatpush.msra.mxu0 %v259
      %301 = vmatpush.msra.mxu0 %v257
      %302 = vmatpush.msra.mxu0 %v255
      %303 = vmatpush.msra.mxu0 %v253
      %304 = vmatpush.msra.mxu0 %v251
      %305 = vmatpush.msra.mxu0 %v249
      %306 = vmatpush.msra.mxu0 %v247
      %307 = vmatpush.msra.mxu0 %v245
      %308 = vmatpush.msra.mxu0 %v243
      %309 = vmatpush.msra.mxu0 %v241
      %310 = vmatpush.msra.mxu0 %v239
      %311 = vmatmul.f32.gmra.mxu0 %v266
      %v312 = vpop.f32.mrf.mxu0
      %v313 = vadd.f32 0.0, %v312
      %314 = vdwg.mxu0
      %v315 = vld [vmem:[%s1] sm:$0x3]
      %317 = vset.pattern.permute.xlu0 0
      %318 = vperm.xlu0 %317, %v315
      %v319 = vpop.permute.xlu0 %318
      %v321 = vmul.f32 %v293, %v319
      %v322 = vmul.f32 %v313, %v319
      %v323 = vld [vmem:[%s2] sm:$0x3]
      %325 = vset.pattern.permute.xlu0 0
      %326 = vperm.xlu0 %325, %v323
      %v327 = vpop.permute.xlu0 %326
      %v329 = vadd.f32 %v321, %v327
      %v330 = vadd.f32 %v322, %v327
      %v331 = vmax.f32 %v329, 0.0
      %v332 = vmax.f32 %v330, 0.0
      %v335 = vrot.slane %v332, 6
      %vm336 = vcmask 1041408
      %v337 = vsel %vm336, %v331, %v335
      %339 = vst [vmem:[%s235] sm:$0xf] %v337
      %s340 = smul.u32 2, %s20
      %p341 = scmp.lt.s32.totalorder %s19, 1
      %s342 = scalar_select %p341, %s19, 1
      %p343 = scmp.lt.s32.totalorder %s340, 1
      %s344 = scalar_select %p343, %s340, 1
      %s345 = smul.addr %s342, 2
      %s346 = sadd.s32 %s344, %s345
      %s347 = smul.addr %s346, 2
      %s348 = scalar_lea.vmem %s4, %s347
      // Predicated region
      $region37: #{iam_forward.18} parent=35 // pred_check
        %p349 = pneg %p138
      $region38: #{iam_forward.18} parent=35 // pred_check_branch
        %351 = sbr.rel (%p349) target = $region40
      $region39: #{iam_forward.18} parent=35 // pred_region
        %s352 = smul.u32 2, %s20
      $region40: #{iam_forward.18} parent=35 // pred_fallthru
        _
    $region36: #{iam_forward.18} parent=5 // pred_fallthru
      _
    %p353 = scmp.le.s32.totalorder 2, %s10
    // Predicated region
    $region41: #{iam_forward.18} parent=5 // pred_check
      %p354 = pneg %p353
    $region42: #{iam_forward.18} parent=5 // pred_check_branch
      %356 = sbr.rel (%p354) target = $region44
    $region43: #{iam_forward.18} parent=5 // pred_region
      %s357 = ssub.s32 %s10, 2
      // Predicated region
      $region45: #{iam_forward.18} parent=43 // pred_check
        %p358 = pneg %p144
      $region46: #{iam_forward.18} parent=43 // pred_check_branch
        %360 = sbr.rel (%p358) target = $region48
      $region47: #{iam_forward.18} parent=43 // pred_region
        %s361 = smul.u32 2, %s22
        %p362 = scmp.lt.s32.totalorder %s21, 1
        %s363 = scalar_select %p362, %s21, 1
        %p364 = scmp.lt.s32.totalorder %s361, 1
        %s365 = scalar_select %p364, %s361, 1
        %s366 = smul.addr %s363, 2
        %s367 = sadd.s32 %s365, %s366
        %s368 = smul.addr %s367, 2
        %s369 = scalar_lea.vmem %s4, %s368
      $region48: #{iam_forward.18} parent=43 // pred_fallthru
        _
    $region44: #{iam_forward.18} parent=5 // pred_fallthru
      _
  $region6: #{iam_forward.18} parent=0 // loop_footer
    %s14 = sadd.s32 1, %s10
  $region7: #{iam_forward.18} parent=0 // loop_footer_branch
    %9 = sbr.rel target = $region3
  $region8: #{iam_forward.18} parent=0 // loop_exit
    _

// kernel: iam_forward.19
$region0: #{iam_forward.19}
  #allocation0 [shape = 'u32[]', space=smem, size = 0x4, offset = 0x4, fixed_abs, tag = 'smem constant byte address 0x4 - core index']
  #allocation1 [shape = 'u32[72,128]{1,0:T(1,128)}', space=vmem, size = 0x9000, scoped, tag = 'internal scratch']
  %s0 = inlined_call_operand.vmem [shape: f32[2,50], index: 0, kind: input, shape index: {}]
  %s1 = inlined_call_operand.vmem [shape: f32[2,1], index: 1, kind: input, shape index: {}]
  %s2 = inlined_call_operand.vmem [shape: f32[2,1], index: 2, kind: input, shape index: {}]
  %s3 = inlined_call_operand.vmem [shape: f32[2,50,256], index: 3, kind: input, shape index: {}]
  %s4 = inlined_call_operand.vmem [shape: f32[2,2,256], index: 4, kind: output, shape index: {}]
  %s5 = sld [smem:[#allocation0]]
  $region49: #{iam_forward.19} parent=0
    _
  %s7 = ssub.s32 1, %s5
  %s8 = scalar_select 0, %s7, %s5
  loop: start=0, step=1, limit=4
  $region2: #{iam_forward.19} parent=0 // loop_pre_header
    _
  $region3: #{iam_forward.19} parent=0 // loop_header
    %s10 = sphi 0, %s14
    %p11 = scmp.ge.s32.totalorder %s10, 4
    %s17 = sphi 0, %s29
    %s18 = sphi 0, %s25
    %s19 = sphi 0, %s17
    %s20 = sphi 0, %s18
    %s21 = sphi 0, %s19
    %s22 = sphi 0, %s20
    %s30 = sphi 0, %s30
    %s32 = sphi 0, %s30
    %s33 = sphi 0, %s32
    %s47 = sphi 0, %s33
    %s51 = sphi 0, %s51
    %s53 = sphi 0, %s51
    %s54 = sphi 0, %s53
    %s68 = sphi 0, %s54
    %s72 = sphi 0, %s72
    %s74 = sphi 0, %s72
    %s75 = sphi 0, %s74
    %s89 = sphi 0, %s75
    %s97 = sphi 0, %s99
    %s100 = sphi 0, %s97
    %s101 = sphi 0, %s100
    %s117 = sphi 0, %s101
    %s125 = sphi 0, %s127
    %s128 = sphi 0, %s125
    %s129 = sphi 0, %s128
    %s145 = sphi 0, %s129
  $region4: #{iam_forward.19} parent=0 // loop_header_branch
    %13 = sbr.rel (%p11) target = $region8
  $region5: #{iam_forward.19} parent=0 // loop_body
    %s15 = ssub.s32 %s10, 1
    %s16 = ssub.s32 %s10, 2
    %s23 = sadd.s32 1, %s18
    %p24 = scmp.ge.s32.totalorder %s23, 1
    %s25 = scalar_select %p24, 0, %s23
    %s26 = sadd.s32 1, %s17
    %s27 = scalar_select %p24, %s26, %s17
    %p28 = scmp.ge.s32.totalorder %s27, 2
    %s29 = scalar_select %p28, 0, %s27
    %s31 = sadd.s32 %s30, 1
    %p34 = scmp.eq.s32.totalorder %s10, 1
    %p35 = scmp.ne.s32.totalorder %s30, %s32
    %p36 = scmp.eq.s32.totalorder %s10, 0
    %p37 = por %p35, %p36
    %p38 = scmp.ne.s32.totalorder %s30, %s32
    %p39 = scmp.eq.s32.totalorder %s15, 1
    %p40 = por %p38, %p39
    %p41 = scmp.ne.s32.totalorder %s32, %s33
    %p42 = scmp.eq.s32.totalorder %s15, 0
    %p43 = por %p41, %p42
    %p44 = scmp.ne.s32.totalorder %s32, %s33
    %p45 = scmp.eq.s32.totalorder %s16, 1
    %p46 = por %p44, %p45
    %p48 = scmp.ne.s32.totalorder %s33, %s47
    %p49 = scmp.eq.s32.totalorder %s16, 0
    %p50 = por %p48, %p49
    %s52 = sadd.s32 %s51, 1
    %p55 = scmp.eq.s32.totalorder %s10, 1
    %p56 = scmp.ne.s32.totalorder %s51, %s53
    %p57 = scmp.eq.s32.totalorder %s10, 0
    %p58 = por %p56, %p57
    %p59 = scmp.ne.s32.totalorder %s51, %s53
    %p60 = scmp.eq.s32.totalorder %s15, 1
    %p61 = por %p59, %p60
    %p62 = scmp.ne.s32.totalorder %s53, %s54
    %p63 = scmp.eq.s32.totalorder %s15, 0
    %p64 = por %p62, %p63
    %p65 = scmp.ne.s32.totalorder %s53, %s54
    %p66 = scmp.eq.s32.totalorder %s16, 1
    %p67 = por %p65, %p66
    %p69 = scmp.ne.s32.totalorder %s54, %s68
    %p70 = scmp.eq.s32.totalorder %s16, 0
    %p71 = por %p69, %p70
    %s73 = sadd.s32 %s72, 1
    %p76 = scmp.eq.s32.totalorder %s10, 1
    %p77 = scmp.ne.s32.totalorder %s72, %s74
    %p78 = scmp.eq.s32.totalorder %s10, 0
    %p79 = por %p77, %p78
    %p80 = scmp.ne.s32.totalorder %s72, %s74
    %p81 = scmp.eq.s32.totalorder %s15, 1
    %p82 = por %p80, %p81
    %p83 = scmp.ne.s32.totalorder %s74, %s75
    %p84 = scmp.eq.s32.totalorder %s15, 0
    %p85 = por %p83, %p84
    %p86 = scmp.ne.s32.totalorder %s74, %s75
    %p87 = scmp.eq.s32.totalorder %s16, 1
    %p88 = por %p86, %p87
    %p90 = scmp.ne.s32.totalorder %s75, %s89
    %p91 = scmp.eq.s32.totalorder %s16, 0
    %p92 = por %p90, %p91
    %s93 = ssub.s32 %s17, %s29
    %s94 = ssub.s32 %s18, %s25
    %s95 = sor.u32 %s93, %s94
    %p96 = scmp.eq.s32.totalorder %s95, 0
    %s98 = sadd.s32 %s97, 1
    %s99 = scalar_select %p96, %s97, %s98
    %p102 = pneg %p96
    %p103 = scmp.eq.s32.totalorder %s10, 1
    %p104 = por %p102, %p103
    %p105 = scmp.ne.s32.totalorder %s97, %s100
    %p106 = scmp.eq.s32.totalorder %s10, 0
    %p107 = por %p105, %p106
    %p108 = scmp.ne.s32.totalorder %s97, %s100
    %p109 = scmp.eq.s32.totalorder %s15, 1
    %p110 = por %p108, %p109
    %p111 = scmp.ne.s32.totalorder %s100, %s101
    %p112 = scmp.eq.s32.totalorder %s15, 0
    %p113 = por %p111, %p112
    %p114 = scmp.ne.s32.totalorder %s100, %s101
    %p115 = scmp.eq.s32.totalorder %s16, 1
    %p116 = por %p114, %p115
    %p118 = scmp.ne.s32.totalorder %s101, %s117
    %p119 = scmp.eq.s32.totalorder %s16, 0
    %p120 = por %p118, %p119
    %s121 = ssub.s32 %s17, %s29
    %s122 = ssub.s32 %s18, %s25
    %s123 = sor.u32 %s121, %s122
    %p124 = scmp.eq.s32.totalorder %s123, 0
    %s126 = sadd.s32 %s125, 1
    %s127 = scalar_select %p124, %s125, %s126
    %p130 = pneg %p124
    %p131 = scmp.eq.s32.totalorder %s10, 1
    %p132 = por %p130, %p131
    %p133 = scmp.ne.s32.totalorder %s125, %s128
    %p134 = scmp.eq.s32.totalorder %s10, 0
    %p135 = por %p133, %p134
    %p136 = scmp.ne.s32.totalorder %s125, %s128
    %p137 = scmp.eq.s32.totalorder %s15, 1
    %p138 = por %p136, %p137
    %p139 = scmp.ne.s32.totalorder %s128, %s129
    %p140 = scmp.eq.s32.totalorder %s15, 0
    %p141 = por %p139, %p140
    %p142 = scmp.ne.s32.totalorder %s128, %s129
    %p143 = scmp.eq.s32.totalorder %s16, 1
    %p144 = por %p142, %p143
    %p146 = scmp.ne.s32.totalorder %s129, %s145
    %p147 = scmp.eq.s32.totalorder %s16, 0
    %p148 = por %p146, %p147
    %p149 = scmp.le.s32.totalorder 1, %s10
    %p150 = scmp.lt.s32.totalorder %s10, 3
    %p151 = pnand %p149, %p150
    %p152 = pneg %p151
    // Predicated region
    $region9: #{iam_forward.19} parent=5 // pred_check
      _
    $region10: #{iam_forward.19} parent=5 // pred_check_branch
      %154 = sbr.rel (%p151) target = $region12
    $region11: #{iam_forward.19} parent=5 // pred_region
      %s155 = ssub.s32 %s10, 1
      // Predicated region
      $region13: #{iam_forward.19} parent=11 // pred_check
        %p156 = pneg %p43
      $region14: #{iam_forward.19} parent=11 // pred_check_branch
        %158 = sbr.rel (%p156) target = $region16
      $region15: #{iam_forward.19} parent=11 // pred_region
        _
      $region16: #{iam_forward.19} parent=11 // pred_fallthru
        _
      // Predicated region
      $region17: #{iam_forward.19} parent=11 // pred_check
        %p159 = pneg %p64
      $region18: #{iam_forward.19} parent=11 // pred_check_branch
        %161 = sbr.rel (%p159) target = $region20
      $region19: #{iam_forward.19} parent=11 // pred_region
        _
      $region20: #{iam_forward.19} parent=11 // pred_fallthru
        _
      // Predicated region
      $region21: #{iam_forward.19} parent=11 // pred_check
        %p162 = pneg %p85
      $region22: #{iam_forward.19} parent=11 // pred_check_branch
        %164 = sbr.rel (%p162) target = $region24
      $region23: #{iam_forward.19} parent=11 // pred_region
        _
      $region24: #{iam_forward.19} parent=11 // pred_fallthru
        _
    $region12: #{iam_forward.19} parent=5 // pred_fallthru
      _
    %p165 = scmp.lt.s32.totalorder %s10, 2
    // Predicated region
    $region25: #{iam_forward.19} parent=5 // pred_check
      %p166 = pneg %p165
    $region26: #{iam_forward.19} parent=5 // pred_check_branch
      %168 = sbr.rel (%p166) target = $region28
    $region27: #{iam_forward.19} parent=5 // pred_region
      // Predicated region
      $region29: #{iam_forward.19} parent=27 // pred_check
        %p169 = pneg %p107
      $region30: #{iam_forward.19} parent=27 // pred_check_branch
        %171 = sbr.rel (%p169) target = $region32
      $region31: #{iam_forward.19} parent=27 // pred_region
        %s172 = smul.u32 2, %s18
        %p173 = scmp.lt.s32.totalorder %s17, 1
        %s174 = scalar_select %p173, %s17, 1
        %p175 = scmp.lt.s32.totalorder %s172, 1
        %s176 = scalar_select %p175, %s172, 1
        %s177 = smul.addr %s174, 14
        %s178 = sadd.s32 %s176, %s177
        %s179 = smul.addr %s178, 8
        %s180 = scalar_lea.vmem %s3, %s179
        %s181 = smul.u32 2, %s18
      $region32: #{iam_forward.19} parent=27 // pred_fallthru
        _
    $region28: #{iam_forward.19} parent=5 // pred_fallthru
      _
    %p182 = scmp.le.s32.totalorder 1, %s10
    %p183 = scmp.lt.s32.totalorder %s10, 3
    %p184 = pnand %p182, %p183
    %p185 = pneg %p184
    // Predicated region
    $region33: #{iam_forward.19} parent=5 // pred_check
      _
    $region34: #{iam_forward.19} parent=5 // pred_check_branch
      %187 = sbr.rel (%p184) target = $region36
    $region35: #{iam_forward.19} parent=5 // pred_region
      %s188 = ssub.s32 %s10, 1
      %p189 = pneg %p43
      %p190 = pneg %p40
      %p191 = pneg %p64
      %p192 = pneg %p61
      %p193 = pneg %p85
      %p194 = pneg %p82
      %s195 = smul.u32 2, %s20
      %p196 = scmp.lt.s32.totalorder %s19, 1
      %s197 = scalar_select %p196, %s19, 1
      %p198 = scmp.lt.s32.totalorder %s195, 1
      %s199 = scalar_select %p198, %s195, 1
      %s200 = smul.addr %s197, 14
      %s201 = sadd.s32 %s199, %s200
      %s202 = smul.addr %s201, 8
      %s203 = scalar_lea.vmem %s3, %s202
      %p204 = pneg %p113
      %p205 = pneg %p110
      %p206 = pneg %p141
      %p207 = pneg %p138
      %s208 = smul.u32 2, %s20
      %p209 = scmp.lt.s32.totalorder %s19, 1
      %s210 = scalar_select %p209, %s19, 1
      %p211 = scmp.lt.s32.totalorder %s208, 1
      %s212 = scalar_select %p211, %s208, 1
      %s213 = smul.addr %s210, 2
      %s214 = sadd.s32 %s212, %s213
      %s215 = smul.addr %s214, 2
      %s216 = scalar_lea.vmem %s4, %s215
      %s217 = smul.u32 2, %s20
      %p218 = scmp.lt.s32.totalorder %s19, 1
      %s219 = scalar_select %p218, %s19, 1
      %p220 = scmp.lt.s32.totalorder %s217, 1
      %s221 = scalar_select %p220, %s217, 1
      %s222 = smul.addr %s219, 14
      %s223 = sadd.s32 %s221, %s222
      %s224 = smul.addr %s223, 8
      %s225 = scalar_lea.vmem %s3, %s224
      %s226 = smul.u32 2, %s20
      %s227 = smul.u32 2, %s20
      %p228 = scmp.lt.s32.totalorder %s19, 1
      %s229 = scalar_select %p228, %s19, 1
      %p230 = scmp.lt.s32.totalorder %s227, 1
      %s231 = scalar_select %p230, %s227, 1
      %s232 = smul.addr %s229, 2
      %s233 = sadd.s32 %s231, %s232
      %s234 = smul.addr %s233, 2
      %s235 = scalar_lea.vmem %s4, %s234
      %s236 = smul.u32 2, %s20
      %v237 = vld [vmem:[%s0] sm:$0x3]
      %v238 = vld [vmem:[%s225] sm:$0xff]
      %v239 = vld [vmem:[%s225 + $0x8] sm:$0xff]
      %v240 = vld [vmem:[%s225 + $0x10] sm:$0xff]
      %v241 = vld [vmem:[%s225 + $0x18] sm:$0xff]
      %v242 = vld [vmem:[%s225 + $0x20] sm:$0xff]
      %v243 = vld [vmem:[%s225 + $0x28] sm:$0xff]
      %v244 = vld [vmem:[%s225 + $0x30] sm:$0xff]
      %v245 = vld [vmem:[%s225 + $0x38] sm:$0xff]
      %v246 = vld [vmem:[%s225 + $0x40] sm:$0xff]
      %v247 = vld [vmem:[%s225 + $0x48] sm:$0xff]
      %v248 = vld [vmem:[%s225 + $0x50] sm:$0xff]
      %v249 = vld [vmem:[%s225 + $0x58] sm:$0xff]
      %v250 = vld [vmem:[%s225 + $0x60] sm:$0x3]
      %v251 = vld [vmem:[%s225 + $0x68] sm:$0x3]
      %vm252 = vcmask 408576
      %v254 = vsel %vm252, %v237, 0
      %vm256 = vcmask 1041408
      %v258 = vsel %vm256, %v250, 0
      %v261 = vsel %vm256, %v251, 0
      %263 = vmatpush.msra.mxu0 0.0
      %264 = vmatpush.msra.mxu0 0.0
      %265 = vmatpush.msra.mxu0 0.0
      %266 = vmatpush.msra.mxu0 0.0
      %267 = vmatpush.msra.mxu0 0.0
      %268 = vmatpush.msra.mxu0 0.0
      %269 = vmatpush.msra.mxu0 0.0
      %270 = vmatpush.msra.mxu0 0.0
      %271 = vmatpush.msra.mxu0 0.0
      %272 = vmatpush.msra.mxu0 %v258
      %273 = vmatpush.msra.mxu0 %v248
      %274 = vmatpush.msra.mxu0 %v246
      %275 = vmatpush.msra.mxu0 %v244
      %276 = vmatpush.msra.mxu0 %v242
      %277 = vmatpush.msra.mxu0 %v240
      %278 = vmatpush.msra.mxu0 %v238
      %279 = vmatmul.f32.gmra.mxu0 %v254
      %v280 = vpop.f32.mrf.mxu0
      %v281 = vadd.f32 0.0, %v280
      %282 = vdwg.mxu0
      %283 = vmatpush.msra.mxu0 0.0
      %284 = vmatpush.msra.mxu0 0.0
      %285 = vmatpush.msra.mxu0 0.0
      %286 = vmatpush.msra.mxu0 0.0
      %287 = vmatpush.msra.mxu0 0.0
      %288 = vmatpush.msra.mxu0 0.0
      %289 = vmatpush.msra.mxu0 0.0
      %290 = vmatpush.msra.mxu0 0.0
      %291 = vmatpush.msra.mxu0 0.0
      %292 = vmatpush.msra.mxu0 %v261
      %293 = vmatpush.msra.mxu0 %v249
      %294 = vmatpush.msra.mxu0 %v247
      %295 = vmatpush.msra.mxu0 %v245
      %296 = vmatpush.msra.mxu0 %v243
      %297 = vmatpush.msra.mxu0 %v241
      %298 = vmatpush.msra.mxu0 %v239
      %299 = vmatmul.f32.gmra.mxu0 %v254
      %v300 = vpop.f32.mrf.mxu0
      %v301 = vadd.f32 0.0, %v300
      %302 = vdwg.mxu0
      %v303 = vld [vmem:[%s1] sm:$0x3]
      %305 = vset.pattern.permute.xlu0 0
      %306 = vperm.xlu0 %305, %v303
      %v307 = vpop.permute.xlu0 %306
      %v309 = vmul.f32 %v281, %v307
      %v310 = vmul.f32 %v301, %v307
      %v311 = vld [vmem:[%s2] sm:$0x3]
      %313 = vset.pattern.permute.xlu0 0
      %314 = vperm.xlu0 %313, %v311
      %v315 = vpop.permute.xlu0 %314
      %v317 = vadd.f32 %v309, %v315
      %v318 = vadd.f32 %v310, %v315
      %v319 = vmax.f32 %v317, 0.0
      %v320 = vmax.f32 %v318, 0.0
      %v323 = vrot.slane %v320, 6
      %v324 = vsel %vm256, %v319, %v323
      %326 = vst [vmem:[%s235] sm:$0xf] %v324
      %s327 = smul.u32 2, %s20
      %p328 = scmp.lt.s32.totalorder %s19, 1
      %s329 = scalar_select %p328, %s19, 1
      %p330 = scmp.lt.s32.totalorder %s327, 1
      %s331 = scalar_select %p330, %s327, 1
      %s332 = smul.addr %s329, 2
      %s333 = sadd.s32 %s331, %s332
      %s334 = smul.addr %s333, 2
      %s335 = scalar_lea.vmem %s4, %s334
      // Predicated region
      $region37: #{iam_forward.19} parent=35 // pred_check
        %p336 = pneg %p138
      $region38: #{iam_forward.19} parent=35 // pred_check_branch
        %338 = sbr.rel (%p336) target = $region40
      $region39: #{iam_forward.19} parent=35 // pred_region
        %s339 = smul.u32 2, %s20
      $region40: #{iam_forward.19} parent=35 // pred_fallthru
        _
    $region36: #{iam_forward.19} parent=5 // pred_fallthru
      _
    %p340 = scmp.le.s32.totalorder 2, %s10
    // Predicated region
    $region41: #{iam_forward.19} parent=5 // pred_check
      %p341 = pneg %p340
    $region42: #{iam_forward.19} parent=5 // pred_check_branch
      %343 = sbr.rel (%p341) target = $region44
    $region43: #{iam_forward.19} parent=5 // pred_region
      %s344 = ssub.s32 %s10, 2
      // Predicated region
      $region45: #{iam_forward.19} parent=43 // pred_check
        %p345 = pneg %p144
      $region46: #{iam_forward.19} parent=43 // pred_check_branch
        %347 = sbr.rel (%p345) target = $region48
      $region47: #{iam_forward.19} parent=43 // pred_region
        %s348 = smul.u32 2, %s22
        %p349 = scmp.lt.s32.totalorder %s21, 1
        %s350 = scalar_select %p349, %s21, 1
        %p351 = scmp.lt.s32.totalorder %s348, 1
        %s352 = scalar_select %p351, %s348, 1
        %s353 = smul.addr %s350, 2
        %s354 = sadd.s32 %s352, %s353
        %s355 = smul.addr %s354, 2
        %s356 = scalar_lea.vmem %s4, %s355
      $region48: #{iam_forward.19} parent=43 // pred_fallthru
        _
    $region44: #{iam_forward.19} parent=5 // pred_fallthru
      _
  $region6: #{iam_forward.19} parent=0 // loop_footer
    %s14 = sadd.s32 1, %s10
  $region7: #{iam_forward.19} parent=0 // loop_footer_branch
    %9 = sbr.rel target = $region3
  $region8: #{iam_forward.19} parent=0 // loop_exit
    _

// kernel: iam_forward.20
$region0: #{iam_forward.20}
  #allocation0 [shape = 'u32[]', space=smem, size = 0x4, offset = 0x4, fixed_abs, tag = 'smem constant byte address 0x4 - core index']
  #allocation1 [shape = 'u32[72,128]{1,0:T(1,128)}', space=vmem, size = 0x9000, scoped, tag = 'internal scratch']
  %s0 = inlined_call_operand.vmem [shape: f32[4,50], index: 0, kind: input, shape index: {}]
  %s1 = inlined_call_operand.vmem [shape: f32[4,1], index: 1, kind: input, shape index: {}]
  %s2 = inlined_call_operand.vmem [shape: f32[4,1], index: 2, kind: input, shape index: {}]
  %s3 = inlined_call_operand.vmem [shape: f32[2,50,256], index: 3, kind: input, shape index: {}]
  %s4 = inlined_call_operand.vmem [shape: f32[2,4,256], index: 4, kind: input, shape index: {}]
  %s5 = inlined_call_operand.vmem [shape: f32[2,4,256], index: 5, kind: output, shape index: {0}]
  %s6 = inlined_call_operand.vmem [shape: f32[2,4,256], index: 6, kind: output, shape index: {1}]
  %7 = xla_tuple %s5, %s6
  %s8 = sld [smem:[#allocation0]]
  $region61: #{iam_forward.20} parent=0
    _
  %s10 = ssub.s32 1, %s8
  %s11 = scalar_select 0, %s10, %s8
  loop: start=0, step=1, limit=4
  $region2: #{iam_forward.20} parent=0 // loop_pre_header
    _
  $region3: #{iam_forward.20} parent=0 // loop_header
    %s13 = sphi 0, %s17
    %p14 = scmp.ge.s32.totalorder %s13, 4
    %s20 = sphi 0, %s32
    %s21 = sphi 0, %s28
    %s22 = sphi 0, %s20
    %s23 = sphi 0, %s21
    %s24 = sphi 0, %s22
    %s25 = sphi 0, %s23
    %s33 = sphi 0, %s33
    %s35 = sphi 0, %s33
    %s36 = sphi 0, %s35
    %s50 = sphi 0, %s36
    %s54 = sphi 0, %s54
    %s56 = sphi 0, %s54
    %s57 = sphi 0, %s56
    %s71 = sphi 0, %s57
    %s75 = sphi 0, %s75
    %s77 = sphi 0, %s75
    %s78 = sphi 0, %s77
    %s92 = sphi 0, %s78
    %s100 = sphi 0, %s102
    %s103 = sphi 0, %s100
    %s104 = sphi 0, %s103
    %s120 = sphi 0, %s104
    %s128 = sphi 0, %s130
    %s131 = sphi 0, %s128
    %s132 = sphi 0, %s131
    %s148 = sphi 0, %s132
    %s156 = sphi 0, %s158
    %s159 = sphi 0, %s156
    %s160 = sphi 0, %s159
    %s176 = sphi 0, %s160
    %s184 = sphi 0, %s186
    %s187 = sphi 0, %s184
    %s188 = sphi 0, %s187
    %s204 = sphi 0, %s188
  $region4: #{iam_forward.20} parent=0 // loop_header_branch
    %16 = sbr.rel (%p14) target = $region8
  $region5: #{iam_forward.20} parent=0 // loop_body
    %s18 = ssub.s32 %s13, 1
    %s19 = ssub.s32 %s13, 2
    %s26 = sadd.s32 1, %s21
    %p27 = scmp.ge.s32.totalorder %s26, 1
    %s28 = scalar_select %p27, 0, %s26
    %s29 = sadd.s32 1, %s20
    %s30 = scalar_select %p27, %s29, %s20
    %p31 = scmp.ge.s32.totalorder %s30, 2
    %s32 = scalar_select %p31, 0, %s30
    %s34 = sadd.s32 %s33, 1
    %p37 = scmp.eq.s32.totalorder %s13, 1
    %p38 = scmp.ne.s32.totalorder %s33, %s35
    %p39 = scmp.eq.s32.totalorder %s13, 0
    %p40 = por %p38, %p39
    %p41 = scmp.ne.s32.totalorder %s33, %s35
    %p42 = scmp.eq.s32.totalorder %s18, 1
    %p43 = por %p41, %p42
    %p44 = scmp.ne.s32.totalorder %s35, %s36
    %p45 = scmp.eq.s32.totalorder %s18, 0
    %p46 = por %p44, %p45
    %p47 = scmp.ne.s32.totalorder %s35, %s36
    %p48 = scmp.eq.s32.totalorder %s19, 1
    %p49 = por %p47, %p48
    %p51 = scmp.ne.s32.totalorder %s36, %s50
    %p52 = scmp.eq.s32.totalorder %s19, 0
    %p53 = por %p51, %p52
    %s55 = sadd.s32 %s54, 1
    %p58 = scmp.eq.s32.totalorder %s13, 1
    %p59 = scmp.ne.s32.totalorder %s54, %s56
    %p60 = scmp.eq.s32.totalorder %s13, 0
    %p61 = por %p59, %p60
    %p62 = scmp.ne.s32.totalorder %s54, %s56
    %p63 = scmp.eq.s32.totalorder %s18, 1
    %p64 = por %p62, %p63
    %p65 = scmp.ne.s32.totalorder %s56, %s57
    %p66 = scmp.eq.s32.totalorder %s18, 0
    %p67 = por %p65, %p66
    %p68 = scmp.ne.s32.totalorder %s56, %s57
    %p69 = scmp.eq.s32.totalorder %s19, 1
    %p70 = por %p68, %p69
    %p72 = scmp.ne.s32.totalorder %s57, %s71
    %p73 = scmp.eq.s32.totalorder %s19, 0
    %p74 = por %p72, %p73
    %s76 = sadd.s32 %s75, 1
    %p79 = scmp.eq.s32.totalorder %s13, 1
    %p80 = scmp.ne.s32.totalorder %s75, %s77
    %p81 = scmp.eq.s32.totalorder %s13, 0
    %p82 = por %p80, %p81
    %p83 = scmp.ne.s32.totalorder %s75, %s77
    %p84 = scmp.eq.s32.totalorder %s18, 1
    %p85 = por %p83, %p84
    %p86 = scmp.ne.s32.totalorder %s77, %s78
    %p87 = scmp.eq.s32.totalorder %s18, 0
    %p88 = por %p86, %p87
    %p89 = scmp.ne.s32.totalorder %s77, %s78
    %p90 = scmp.eq.s32.totalorder %s19, 1
    %p91 = por %p89, %p90
    %p93 = scmp.ne.s32.totalorder %s78, %s92
    %p94 = scmp.eq.s32.totalorder %s19, 0
    %p95 = por %p93, %p94
    %s96 = ssub.s32 %s20, %s32
    %s97 = ssub.s32 %s21, %s28
    %s98 = sor.u32 %s96, %s97
    %p99 = scmp.eq.s32.totalorder %s98, 0
    %s101 = sadd.s32 %s100, 1
    %s102 = scalar_select %p99, %s100, %s101
    %p105 = pneg %p99
    %p106 = scmp.eq.s32.totalorder %s13, 1
    %p107 = por %p105, %p106
    %p108 = scmp.ne.s32.totalorder %s100, %s103
    %p109 = scmp.eq.s32.totalorder %s13, 0
    %p110 = por %p108, %p109
    %p111 = scmp.ne.s32.totalorder %s100, %s103
    %p112 = scmp.eq.s32.totalorder %s18, 1
    %p113 = por %p111, %p112
    %p114 = scmp.ne.s32.totalorder %s103, %s104
    %p115 = scmp.eq.s32.totalorder %s18, 0
    %p116 = por %p114, %p115
    %p117 = scmp.ne.s32.totalorder %s103, %s104
    %p118 = scmp.eq.s32.totalorder %s19, 1
    %p119 = por %p117, %p118
    %p121 = scmp.ne.s32.totalorder %s104, %s120
    %p122 = scmp.eq.s32.totalorder %s19, 0
    %p123 = por %p121, %p122
    %s124 = ssub.s32 %s20, %s32
    %s125 = ssub.s32 %s21, %s28
    %s126 = sor.u32 %s124, %s125
    %p127 = scmp.eq.s32.totalorder %s126, 0
    %s129 = sadd.s32 %s128, 1
    %s130 = scalar_select %p127, %s128, %s129
    %p133 = pneg %p127
    %p134 = scmp.eq.s32.totalorder %s13, 1
    %p135 = por %p133, %p134
    %p136 = scmp.ne.s32.totalorder %s128, %s131
    %p137 = scmp.eq.s32.totalorder %s13, 0
    %p138 = por %p136, %p137
    %p139 = scmp.ne.s32.totalorder %s128, %s131
    %p140 = scmp.eq.s32.totalorder %s18, 1
    %p141 = por %p139, %p140
    %p142 = scmp.ne.s32.totalorder %s131, %s132
    %p143 = scmp.eq.s32.totalorder %s18, 0
    %p144 = por %p142, %p143
    %p145 = scmp.ne.s32.totalorder %s131, %s132
    %p146 = scmp.eq.s32.totalorder %s19, 1
    %p147 = por %p145, %p146
    %p149 = scmp.ne.s32.totalorder %s132, %s148
    %p150 = scmp.eq.s32.totalorder %s19, 0
    %p151 = por %p149, %p150
    %s152 = ssub.s32 %s20, %s32
    %s153 = ssub.s32 %s21, %s28
    %s154 = sor.u32 %s152, %s153
    %p155 = scmp.eq.s32.totalorder %s154, 0
    %s157 = sadd.s32 %s156, 1
    %s158 = scalar_select %p155, %s156, %s157
    %p161 = pneg %p155
    %p162 = scmp.eq.s32.totalorder %s13, 1
    %p163 = por %p161, %p162
    %p164 = scmp.ne.s32.totalorder %s156, %s159
    %p165 = scmp.eq.s32.totalorder %s13, 0
    %p166 = por %p164, %p165
    %p167 = scmp.ne.s32.totalorder %s156, %s159
    %p168 = scmp.eq.s32.totalorder %s18, 1
    %p169 = por %p167, %p168
    %p170 = scmp.ne.s32.totalorder %s159, %s160
    %p171 = scmp.eq.s32.totalorder %s18, 0
    %p172 = por %p170, %p171
    %p173 = scmp.ne.s32.totalorder %s159, %s160
    %p174 = scmp.eq.s32.totalorder %s19, 1
    %p175 = por %p173, %p174
    %p177 = scmp.ne.s32.totalorder %s160, %s176
    %p178 = scmp.eq.s32.totalorder %s19, 0
    %p179 = por %p177, %p178
    %s180 = ssub.s32 %s20, %s32
    %s181 = ssub.s32 %s21, %s28
    %s182 = sor.u32 %s180, %s181
    %p183 = scmp.eq.s32.totalorder %s182, 0
    %s185 = sadd.s32 %s184, 1
    %s186 = scalar_select %p183, %s184, %s185
    %p189 = pneg %p183
    %p190 = scmp.eq.s32.totalorder %s13, 1
    %p191 = por %p189, %p190
    %p192 = scmp.ne.s32.totalorder %s184, %s187
    %p193 = scmp.eq.s32.totalorder %s13, 0
    %p194 = por %p192, %p193
    %p195 = scmp.ne.s32.totalorder %s184, %s187
    %p196 = scmp.eq.s32.totalorder %s18, 1
    %p197 = por %p195, %p196
    %p198 = scmp.ne.s32.totalorder %s187, %s188
    %p199 = scmp.eq.s32.totalorder %s18, 0
    %p200 = por %p198, %p199
    %p201 = scmp.ne.s32.totalorder %s187, %s188
    %p202 = scmp.eq.s32.totalorder %s19, 1
    %p203 = por %p201, %p202
    %p205 = scmp.ne.s32.totalorder %s188, %s204
    %p206 = scmp.eq.s32.totalorder %s19, 0
    %p207 = por %p205, %p206
    %p208 = scmp.le.s32.totalorder 1, %s13
    %p209 = scmp.lt.s32.totalorder %s13, 3
    %p210 = pnand %p208, %p209
    %p211 = pneg %p210
    // Predicated region
    $region9: #{iam_forward.20} parent=5 // pred_check
      _
    $region10: #{iam_forward.20} parent=5 // pred_check_branch
      %213 = sbr.rel (%p210) target = $region12
    $region11: #{iam_forward.20} parent=5 // pred_region
      %s214 = ssub.s32 %s13, 1
      // Predicated region
      $region13: #{iam_forward.20} parent=11 // pred_check
        %p215 = pneg %p46
      $region14: #{iam_forward.20} parent=11 // pred_check_branch
        %217 = sbr.rel (%p215) target = $region16
      $region15: #{iam_forward.20} parent=11 // pred_region
        _
      $region16: #{iam_forward.20} parent=11 // pred_fallthru
        _
      // Predicated region
      $region17: #{iam_forward.20} parent=11 // pred_check
        %p218 = pneg %p67
      $region18: #{iam_forward.20} parent=11 // pred_check_branch
        %220 = sbr.rel (%p218) target = $region20
      $region19: #{iam_forward.20} parent=11 // pred_region
        _
      $region20: #{iam_forward.20} parent=11 // pred_fallthru
        _
      // Predicated region
      $region21: #{iam_forward.20} parent=11 // pred_check
        %p221 = pneg %p88
      $region22: #{iam_forward.20} parent=11 // pred_check_branch
        %223 = sbr.rel (%p221) target = $region24
      $region23: #{iam_forward.20} parent=11 // pred_region
        _
      $region24: #{iam_forward.20} parent=11 // pred_fallthru
        _
    $region12: #{iam_forward.20} parent=5 // pred_fallthru
      _
    %p224 = scmp.lt.s32.totalorder %s13, 2
    // Predicated region
    $region25: #{iam_forward.20} parent=5 // pred_check
      %p225 = pneg %p224
    $region26: #{iam_forward.20} parent=5 // pred_check_branch
      %227 = sbr.rel (%p225) target = $region28
    $region27: #{iam_forward.20} parent=5 // pred_region
      // Predicated region
      $region29: #{iam_forward.20} parent=27 // pred_check
        %p228 = pneg %p110
      $region30: #{iam_forward.20} parent=27 // pred_check_branch
        %230 = sbr.rel (%p228) target = $region32
      $region31: #{iam_forward.20} parent=27 // pred_region
        %s231 = smul.u32 2, %s21
        %p232 = scmp.lt.s32.totalorder %s20, 1
        %s233 = scalar_select %p232, %s20, 1
        %p234 = scmp.lt.s32.totalorder %s231, 1
        %s235 = scalar_select %p234, %s231, 1
        %s236 = smul.addr %s233, 14
        %s237 = sadd.s32 %s235, %s236
        %s238 = smul.addr %s237, 8
        %s239 = scalar_lea.vmem %s3, %s238
        %s240 = smul.u32 2, %s21
      $region32: #{iam_forward.20} parent=27 // pred_fallthru
        _
      // Predicated region
      $region33: #{iam_forward.20} parent=27 // pred_check
        %p241 = pneg %p138
      $region34: #{iam_forward.20} parent=27 // pred_check_branch
        %243 = sbr.rel (%p241) target = $region36
      $region35: #{iam_forward.20} parent=27 // pred_region
        %s244 = smul.u32 2, %s21
        %p245 = scmp.lt.s32.totalorder %s20, 1
        %s246 = scalar_select %p245, %s20, 1
        %p247 = scmp.lt.s32.totalorder %s244, 1
        %s248 = scalar_select %p247, %s244, 1
        %s249 = smul.addr %s246, 2
        %s250 = sadd.s32 %s248, %s249
        %s251 = smul.addr %s250, 4
        %s252 = scalar_lea.vmem %s4, %s251
        %s253 = smul.u32 2, %s21
      $region36: #{iam_forward.20} parent=27 // pred_fallthru
        _
    $region28: #{iam_forward.20} parent=5 // pred_fallthru
      _
    %p254 = scmp.le.s32.totalorder 1, %s13
    %p255 = scmp.lt.s32.totalorder %s13, 3
    %p256 = pnand %p254, %p255
    %p257 = pneg %p256
    // Predicated region
    $region37: #{iam_forward.20} parent=5 // pred_check
      _
    $region38: #{iam_forward.20} parent=5 // pred_check_branch
      %259 = sbr.rel (%p256) target = $region40
    $region39: #{iam_forward.20} parent=5 // pred_region
      %s260 = ssub.s32 %s13, 1
      %p261 = pneg %p46
      %p262 = pneg %p43
      %p263 = pneg %p67
      %p264 = pneg %p64
      %p265 = pneg %p88
      %p266 = pneg %p85
      %s267 = smul.u32 2, %s23
      %p268 = scmp.lt.s32.totalorder %s22, 1
      %s269 = scalar_select %p268, %s22, 1
      %p270 = scmp.lt.s32.totalorder %s267, 1
      %s271 = scalar_select %p270, %s267, 1
      %s272 = smul.addr %s269, 14
      %s273 = sadd.s32 %s271, %s272
      %s274 = smul.addr %s273, 8
      %s275 = scalar_lea.vmem %s3, %s274
      %p276 = pneg %p116
      %p277 = pneg %p113
      %s278 = smul.u32 2, %s23
      %p279 = scmp.lt.s32.totalorder %s22, 1
      %s280 = scalar_select %p279, %s22, 1
      %p281 = scmp.lt.s32.totalorder %s278, 1
      %s282 = scalar_select %p281, %s278, 1
      %s283 = smul.addr %s280, 2
      %s284 = sadd.s32 %s282, %s283
      %s285 = smul.addr %s284, 4
      %s286 = scalar_lea.vmem %s4, %s285
      %p287 = pneg %p144
      %p288 = pneg %p141
      %p289 = pneg %p172
      %p290 = pneg %p169
      %s291 = smul.u32 2, %s23
      %p292 = scmp.lt.s32.totalorder %s22, 1
      %s293 = scalar_select %p292, %s22, 1
      %p294 = scmp.lt.s32.totalorder %s291, 1
      %s295 = scalar_select %p294, %s291, 1
      %s296 = smul.addr %s293, 2
      %s297 = sadd.s32 %s295, %s296
      %s298 = smul.addr %s297, 4
      %s299 = scalar_lea.vmem %s5, %s298
      %p300 = pneg %p200
      %p301 = pneg %p197
      %s302 = smul.u32 2, %s23
      %p303 = scmp.lt.s32.totalorder %s22, 1
      %s304 = scalar_select %p303, %s22, 1
      %p305 = scmp.lt.s32.totalorder %s302, 1
      %s306 = scalar_select %p305, %s302, 1
      %s307 = smul.addr %s304, 2
      %s308 = sadd.s32 %s306, %s307
      %s309 = smul.addr %s308, 4
      %s310 = scalar_lea.vmem %s6, %s309
      %s311 = smul.u32 2, %s23
      %p312 = scmp.lt.s32.totalorder %s22, 1
      %s313 = scalar_select %p312, %s22, 1
      %p314 = scmp.lt.s32.totalorder %s311, 1
      %s315 = scalar_select %p314, %s311, 1
      %s316 = smul.addr %s313, 14
      %s317 = sadd.s32 %s315, %s316
      %s318 = smul.addr %s317, 8
      %s319 = scalar_lea.vmem %s3, %s318
      %s320 = smul.u32 2, %s23
      %s321 = smul.u32 2, %s23
      %p322 = scmp.lt.s32.totalorder %s22, 1
      %s323 = scalar_select %p322, %s22, 1
      %p324 = scmp.lt.s32.totalorder %s321, 1
      %s325 = scalar_select %p324, %s321, 1
      %s326 = smul.addr %s323, 2
      %s327 = sadd.s32 %s325, %s326
      %s328 = smul.addr %s327, 4
      %s329 = scalar_lea.vmem %s4, %s328
      %s330 = smul.u32 2, %s23
      %s331 = smul.u32 2, %s23
      %p332 = scmp.lt.s32.totalorder %s22, 1
      %s333 = scalar_select %p332, %s22, 1
      %p334 = scmp.lt.s32.totalorder %s331, 1
      %s335 = scalar_select %p334, %s331, 1
      %s336 = smul.addr %s333, 2
      %s337 = sadd.s32 %s335, %s336
      %s338 = smul.addr %s337, 4
      %s339 = scalar_lea.vmem %s5, %s338
      %s340 = smul.u32 2, %s23
      %s341 = smul.u32 2, %s23
      %p342 = scmp.lt.s32.totalorder %s22, 1
      %s343 = scalar_select %p342, %s22, 1
      %p344 = scmp.lt.s32.totalorder %s341, 1
      %s345 = scalar_select %p344, %s341, 1
      %s346 = smul.addr %s343, 2
      %s347 = sadd.s32 %s345, %s346
      %s348 = smul.addr %s347, 4
      %s349 = scalar_lea.vmem %s6, %s348
      %s350 = smul.u32 2, %s23
      %v351 = vld [vmem:[%s0] sm:$0xf]
      %v352 = vld [vmem:[%s319] sm:$0xff]
      %v353 = vld [vmem:[%s319 + $0x8] sm:$0xff]
      %v354 = vld [vmem:[%s319 + $0x10] sm:$0xff]
      %v355 = vld [vmem:[%s319 + $0x18] sm:$0xff]
      %v356 = vld [vmem:[%s319 + $0x20] sm:$0xff]
      %v357 = vld [vmem:[%s319 + $0x28] sm:$0xff]
      %v358 = vld [vmem:[%s319 + $0x30] sm:$0xff]
      %v359 = vld [vmem:[%s319 + $0x38] sm:$0xff]
      %v360 = vld [vmem:[%s319 + $0x40] sm:$0xff]
      %v361 = vld [vmem:[%s319 + $0x48] sm:$0xff]
      %v362 = vld [vmem:[%s319 + $0x50] sm:$0xff]
      %v363 = vld [vmem:[%s319 + $0x58] sm:$0xff]
      %v364 = vld [vmem:[%s319 + $0x60] sm:$0x3]
      %v365 = vld [vmem:[%s319 + $0x68] sm:$0x3]
      %vm366 = vcmask 408576
      %v368 = vsel %vm366, %v351, 0
      %vm370 = vcmask 1041408
      %v372 = vsel %vm370, %v364, 0
      %v375 = vsel %vm370, %v365, 0
      %377 = vmatpush.msra.mxu0 0.0
      %378 = vmatpush.msra.mxu0 0.0
      %379 = vmatpush.msra.mxu0 0.0
      %380 = vmatpush.msra.mxu0 0.0
      %381 = vmatpush.msra.mxu0 0.0
      %382 = vmatpush.msra.mxu0 0.0
      %383 = vmatpush.msra.mxu0 0.0
      %384 = vmatpush.msra.mxu0 0.0
      %385 = vmatpush.msra.mxu0 0.0
      %386 = vmatpush.msra.mxu0 %v372
      %387 = vmatpush.msra.mxu0 %v362
      %388 = vmatpush.msra.mxu0 %v360
      %389 = vmatpush.msra.mxu0 %v358
      %390 = vmatpush.msra.mxu0 %v356
      %391 = vmatpush.msra.mxu0 %v354
      %392 = vmatpush.msra.mxu0 %v352
      %393 = vmatmul.f32.gmra.mxu0 %v368
      %v394 = vpop.f32.mrf.mxu0
      %v395 = vadd.f32 0.0, %v394
      %396 = vdwg.mxu0
      %397 = vmatpush.msra.mxu0 0.0
      %398 = vmatpush.msra.mxu0 0.0
      %399 = vmatpush.msra.mxu0 0.0
      %400 = vmatpush.msra.mxu0 0.0
      %401 = vmatpush.msra.mxu0 0.0
      %402 = vmatpush.msra.mxu0 0.0
      %403 = vmatpush.msra.mxu0 0.0
      %404 = vmatpush.msra.mxu0 0.0
      %405 = vmatpush.msra.mxu0 0.0
      %406 = vmatpush.msra.mxu0 %v375
      %407 = vmatpush.msra.mxu0 %v363
      %408 = vmatpush.msra.mxu0 %v361
      %409 = vmatpush.msra.mxu0 %v359
      %410 = vmatpush.msra.mxu0 %v357
      %411 = vmatpush.msra.mxu0 %v355
      %412 = vmatpush.msra.mxu0 %v353
      %413 = vmatmul.f32.gmra.mxu0 %v368
      %v414 = vpop.f32.mrf.mxu0
      %v415 = vadd.f32 0.0, %v414
      %416 = vdwg.mxu0
      %v417 = vld [vmem:[%s1] sm:$0xf]
      %419 = vset.pattern.permute.xlu0 0
      %420 = vperm.xlu0 %419, %v417
      %v421 = vpop.permute.xlu0 %420
      %v423 = vmul.f32 %v395, %v421
      %v424 = vmul.f32 %v415, %v421
      %v425 = vld [vmem:[%s2] sm:$0xf]
      %427 = vset.pattern.permute.xlu0 0
      %428 = vperm.xlu0 %427, %v425
      %v429 = vpop.permute.xlu0 %428
      %v431 = vadd.f32 %v423, %v429
      %v432 = vadd.f32 %v424, %v429
      %v433 = vmax.f32 %v431, 0.0
      %v434 = vmax.f32 %v432, 0.0
      %v437 = vrot.slane %v434, 4
      %vm438 = vcmask 1043456
      %v439 = vsel %vm438, %v433, %v437
      %441 = vst [vmem:[%s339] sm:$0xff] %v439
      %v442 = vld [vmem:[%s329] sm:$0xff]
      %v443 = vsub.f32 %v442, %v439
      %444 = vst [vmem:[%s349] sm:$0xff] %v443
      %s445 = smul.u32 2, %s23
      %p446 = scmp.lt.s32.totalorder %s22, 1
      %s447 = scalar_select %p446, %s22, 1
      %p448 = scmp.lt.s32.totalorder %s445, 1
      %s449 = scalar_select %p448, %s445, 1
      %s450 = smul.addr %s447, 2
      %s451 = sadd.s32 %s449, %s450
      %s452 = smul.addr %s451, 4
      %s453 = scalar_lea.vmem %s5, %s452
      %s454 = smul.u32 2, %s23
      %p455 = scmp.lt.s32.totalorder %s22, 1
      %s456 = scalar_select %p455, %s22, 1
      %p457 = scmp.lt.s32.totalorder %s454, 1
      %s458 = scalar_select %p457, %s454, 1
      %s459 = smul.addr %s456, 2
      %s460 = sadd.s32 %s458, %s459
      %s461 = smul.addr %s460, 4
      %s462 = scalar_lea.vmem %s6, %s461
      // Predicated region
      $region41: #{iam_forward.20} parent=39 // pred_check
        %p463 = pneg %p169
      $region42: #{iam_forward.20} parent=39 // pred_check_branch
        %465 = sbr.rel (%p463) target = $region44
      $region43: #{iam_forward.20} parent=39 // pred_region
        %s466 = smul.u32 2, %s23
      $region44: #{iam_forward.20} parent=39 // pred_fallthru
        _
      // Predicated region
      $region45: #{iam_forward.20} parent=39 // pred_check
        %p467 = pneg %p197
      $region46: #{iam_forward.20} parent=39 // pred_check_branch
        %469 = sbr.rel (%p467) target = $region48
      $region47: #{iam_forward.20} parent=39 // pred_region
        %s470 = smul.u32 2, %s23
      $region48: #{iam_forward.20} parent=39 // pred_fallthru
        _
    $region40: #{iam_forward.20} parent=5 // pred_fallthru
      _
    %p471 = scmp.le.s32.totalorder 2, %s13
    // Predicated region
    $region49: #{iam_forward.20} parent=5 // pred_check
      %p472 = pneg %p471
    $region50: #{iam_forward.20} parent=5 // pred_check_branch
      %474 = sbr.rel (%p472) target = $region52
    $region51: #{iam_forward.20} parent=5 // pred_region
      %s475 = ssub.s32 %s13, 2
      // Predicated region
      $region53: #{iam_forward.20} parent=51 // pred_check
        %p476 = pneg %p175
      $region54: #{iam_forward.20} parent=51 // pred_check_branch
        %478 = sbr.rel (%p476) target = $region56
      $region55: #{iam_forward.20} parent=51 // pred_region
        %s479 = smul.u32 2, %s25
        %p480 = scmp.lt.s32.totalorder %s24, 1
        %s481 = scalar_select %p480, %s24, 1
        %p482 = scmp.lt.s32.totalorder %s479, 1
        %s483 = scalar_select %p482, %s479, 1
        %s484 = smul.addr %s481, 2
        %s485 = sadd.s32 %s483, %s484
        %s486 = smul.addr %s485, 4
        %s487 = scalar_lea.vmem %s5, %s486
      $region56: #{iam_forward.20} parent=51 // pred_fallthru
        _
      // Predicated region
      $region57: #{iam_forward.20} parent=51 // pred_check
        %p488 = pneg %p203
      $region58: #{iam_forward.20} parent=51 // pred_check_branch
        %490 = sbr.rel (%p488) target = $region60
      $region59: #{iam_forward.20} parent=51 // pred_region
        %s491 = smul.u32 2, %s25
        %p492 = scmp.lt.s32.totalorder %s24, 1
        %s493 = scalar_select %p492, %s24, 1
        %p494 = scmp.lt.s32.totalorder %s491, 1
        %s495 = scalar_select %p494, %s491, 1
        %s496 = smul.addr %s493, 2
        %s497 = sadd.s32 %s495, %s496
        %s498 = smul.addr %s497, 4
        %s499 = scalar_lea.vmem %s6, %s498
      $region60: #{iam_forward.20} parent=51 // pred_fallthru
        _
    $region52: #{iam_forward.20} parent=5 // pred_fallthru
      _
  $region6: #{iam_forward.20} parent=0 // loop_footer
    %s17 = sadd.s32 1, %s13
  $region7: #{iam_forward.20} parent=0 // loop_footer_branch
    %12 = sbr.rel target = $region3
  $region8: #{iam_forward.20} parent=0 // loop_exit
    _

// kernel: iam_forward.15
$region0: #{iam_forward.15}
  #allocation0 [shape = 'u32[]', space=smem, size = 0x4, offset = 0x4, fixed_abs, tag = 'smem constant byte address 0x4 - core index']
  #allocation1 [shape = 'u32[72,128]{1,0:T(1,128)}', space=vmem, size = 0x9000, scoped, tag = 'internal scratch']
  %s0 = inlined_call_operand.vmem [shape: f32[2,36], index: 0, kind: input, shape index: {}]
  %s1 = inlined_call_operand.vmem [shape: f32[2,1], index: 1, kind: input, shape index: {}]
  %s2 = inlined_call_operand.vmem [shape: f32[2,1], index: 2, kind: input, shape index: {}]
  %s3 = inlined_call_operand.vmem [shape: f32[2,36,256], index: 3, kind: input, shape index: {}]
  %s4 = inlined_call_operand.vmem [shape: f32[2,2,256], index: 4, kind: output, shape index: {}]
  %s5 = sld [smem:[#allocation0]]
  $region49: #{iam_forward.15} parent=0
    _
  %s7 = ssub.s32 1, %s5
  %s8 = scalar_select 0, %s7, %s5
  loop: start=0, step=1, limit=4
  $region2: #{iam_forward.15} parent=0 // loop_pre_header
    _
  $region3: #{iam_forward.15} parent=0 // loop_header
    %s10 = sphi 0, %s14
    %p11 = scmp.ge.s32.totalorder %s10, 4
    %s17 = sphi 0, %s29
    %s18 = sphi 0, %s25
    %s19 = sphi 0, %s17
    %s20 = sphi 0, %s18
    %s21 = sphi 0, %s19
    %s22 = sphi 0, %s20
    %s30 = sphi 0, %s30
    %s32 = sphi 0, %s30
    %s33 = sphi 0, %s32
    %s47 = sphi 0, %s33
    %s51 = sphi 0, %s51
    %s53 = sphi 0, %s51
    %s54 = sphi 0, %s53
    %s68 = sphi 0, %s54
    %s72 = sphi 0, %s72
    %s74 = sphi 0, %s72
    %s75 = sphi 0, %s74
    %s89 = sphi 0, %s75
    %s97 = sphi 0, %s99
    %s100 = sphi 0, %s97
    %s101 = sphi 0, %s100
    %s117 = sphi 0, %s101
    %s125 = sphi 0, %s127
    %s128 = sphi 0, %s125
    %s129 = sphi 0, %s128
    %s145 = sphi 0, %s129
  $region4: #{iam_forward.15} parent=0 // loop_header_branch
    %13 = sbr.rel (%p11) target = $region8
  $region5: #{iam_forward.15} parent=0 // loop_body
    %s15 = ssub.s32 %s10, 1
    %s16 = ssub.s32 %s10, 2
    %s23 = sadd.s32 1, %s18
    %p24 = scmp.ge.s32.totalorder %s23, 1
    %s25 = scalar_select %p24, 0, %s23
    %s26 = sadd.s32 1, %s17
    %s27 = scalar_select %p24, %s26, %s17
    %p28 = scmp.ge.s32.totalorder %s27, 2
    %s29 = scalar_select %p28, 0, %s27
    %s31 = sadd.s32 %s30, 1
    %p34 = scmp.eq.s32.totalorder %s10, 1
    %p35 = scmp.ne.s32.totalorder %s30, %s32
    %p36 = scmp.eq.s32.totalorder %s10, 0
    %p37 = por %p35, %p36
    %p38 = scmp.ne.s32.totalorder %s30, %s32
    %p39 = scmp.eq.s32.totalorder %s15, 1
    %p40 = por %p38, %p39
    %p41 = scmp.ne.s32.totalorder %s32, %s33
    %p42 = scmp.eq.s32.totalorder %s15, 0
    %p43 = por %p41, %p42
    %p44 = scmp.ne.s32.totalorder %s32, %s33
    %p45 = scmp.eq.s32.totalorder %s16, 1
    %p46 = por %p44, %p45
    %p48 = scmp.ne.s32.totalorder %s33, %s47
    %p49 = scmp.eq.s32.totalorder %s16, 0
    %p50 = por %p48, %p49
    %s52 = sadd.s32 %s51, 1
    %p55 = scmp.eq.s32.totalorder %s10, 1
    %p56 = scmp.ne.s32.totalorder %s51, %s53
    %p57 = scmp.eq.s32.totalorder %s10, 0
    %p58 = por %p56, %p57
    %p59 = scmp.ne.s32.totalorder %s51, %s53
    %p60 = scmp.eq.s32.totalorder %s15, 1
    %p61 = por %p59, %p60
    %p62 = scmp.ne.s32.totalorder %s53, %s54
    %p63 = scmp.eq.s32.totalorder %s15, 0
    %p64 = por %p62, %p63
    %p65 = scmp.ne.s32.totalorder %s53, %s54
    %p66 = scmp.eq.s32.totalorder %s16, 1
    %p67 = por %p65, %p66
    %p69 = scmp.ne.s32.totalorder %s54, %s68
    %p70 = scmp.eq.s32.totalorder %s16, 0
    %p71 = por %p69, %p70
    %s73 = sadd.s32 %s72, 1
    %p76 = scmp.eq.s32.totalorder %s10, 1
    %p77 = scmp.ne.s32.totalorder %s72, %s74
    %p78 = scmp.eq.s32.totalorder %s10, 0
    %p79 = por %p77, %p78
    %p80 = scmp.ne.s32.totalorder %s72, %s74
    %p81 = scmp.eq.s32.totalorder %s15, 1
    %p82 = por %p80, %p81
    %p83 = scmp.ne.s32.totalorder %s74, %s75
    %p84 = scmp.eq.s32.totalorder %s15, 0
    %p85 = por %p83, %p84
    %p86 = scmp.ne.s32.totalorder %s74, %s75
    %p87 = scmp.eq.s32.totalorder %s16, 1
    %p88 = por %p86, %p87
    %p90 = scmp.ne.s32.totalorder %s75, %s89
    %p91 = scmp.eq.s32.totalorder %s16, 0
    %p92 = por %p90, %p91
    %s93 = ssub.s32 %s17, %s29
    %s94 = ssub.s32 %s18, %s25
    %s95 = sor.u32 %s93, %s94
    %p96 = scmp.eq.s32.totalorder %s95, 0
    %s98 = sadd.s32 %s97, 1
    %s99 = scalar_select %p96, %s97, %s98
    %p102 = pneg %p96
    %p103 = scmp.eq.s32.totalorder %s10, 1
    %p104 = por %p102, %p103
    %p105 = scmp.ne.s32.totalorder %s97, %s100
    %p106 = scmp.eq.s32.totalorder %s10, 0
    %p107 = por %p105, %p106
    %p108 = scmp.ne.s32.totalorder %s97, %s100
    %p109 = scmp.eq.s32.totalorder %s15, 1
    %p110 = por %p108, %p109
    %p111 = scmp.ne.s32.totalorder %s100, %s101
    %p112 = scmp.eq.s32.totalorder %s15, 0
    %p113 = por %p111, %p112
    %p114 = scmp.ne.s32.totalorder %s100, %s101
    %p115 = scmp.eq.s32.totalorder %s16, 1
    %p116 = por %p114, %p115
    %p118 = scmp.ne.s32.totalorder %s101, %s117
    %p119 = scmp.eq.s32.totalorder %s16, 0
    %p120 = por %p118, %p119
    %s121 = ssub.s32 %s17, %s29
    %s122 = ssub.s32 %s18, %s25
    %s123 = sor.u32 %s121, %s122
    %p124 = scmp.eq.s32.totalorder %s123, 0
    %s126 = sadd.s32 %s125, 1
    %s127 = scalar_select %p124, %s125, %s126
    %p130 = pneg %p124
    %p131 = scmp.eq.s32.totalorder %s10, 1
    %p132 = por %p130, %p131
    %p133 = scmp.ne.s32.totalorder %s125, %s128
    %p134 = scmp.eq.s32.totalorder %s10, 0
    %p135 = por %p133, %p134
    %p136 = scmp.ne.s32.totalorder %s125, %s128
    %p137 = scmp.eq.s32.totalorder %s15, 1
    %p138 = por %p136, %p137
    %p139 = scmp.ne.s32.totalorder %s128, %s129
    %p140 = scmp.eq.s32.totalorder %s15, 0
    %p141 = por %p139, %p140
    %p142 = scmp.ne.s32.totalorder %s128, %s129
    %p143 = scmp.eq.s32.totalorder %s16, 1
    %p144 = por %p142, %p143
    %p146 = scmp.ne.s32.totalorder %s129, %s145
    %p147 = scmp.eq.s32.totalorder %s16, 0
    %p148 = por %p146, %p147
    %p149 = scmp.le.s32.totalorder 1, %s10
    %p150 = scmp.lt.s32.totalorder %s10, 3
    %p151 = pnand %p149, %p150
    %p152 = pneg %p151
    // Predicated region
    $region9: #{iam_forward.15} parent=5 // pred_check
      _
    $region10: #{iam_forward.15} parent=5 // pred_check_branch
      %154 = sbr.rel (%p151) target = $region12
    $region11: #{iam_forward.15} parent=5 // pred_region
      %s155 = ssub.s32 %s10, 1
      // Predicated region
      $region13: #{iam_forward.15} parent=11 // pred_check
        %p156 = pneg %p43
      $region14: #{iam_forward.15} parent=11 // pred_check_branch
        %158 = sbr.rel (%p156) target = $region16
      $region15: #{iam_forward.15} parent=11 // pred_region
        _
      $region16: #{iam_forward.15} parent=11 // pred_fallthru
        _
      // Predicated region
      $region17: #{iam_forward.15} parent=11 // pred_check
        %p159 = pneg %p64
      $region18: #{iam_forward.15} parent=11 // pred_check_branch
        %161 = sbr.rel (%p159) target = $region20
      $region19: #{iam_forward.15} parent=11 // pred_region
        _
      $region20: #{iam_forward.15} parent=11 // pred_fallthru
        _
      // Predicated region
      $region21: #{iam_forward.15} parent=11 // pred_check
        %p162 = pneg %p85
      $region22: #{iam_forward.15} parent=11 // pred_check_branch
        %164 = sbr.rel (%p162) target = $region24
      $region23: #{iam_forward.15} parent=11 // pred_region
        _
      $region24: #{iam_forward.15} parent=11 // pred_fallthru
        _
    $region12: #{iam_forward.15} parent=5 // pred_fallthru
      _
    %p165 = scmp.lt.s32.totalorder %s10, 2
    // Predicated region
    $region25: #{iam_forward.15} parent=5 // pred_check
      %p166 = pneg %p165
    $region26: #{iam_forward.15} parent=5 // pred_check_branch
      %168 = sbr.rel (%p166) target = $region28
    $region27: #{iam_forward.15} parent=5 // pred_region
      // Predicated region
      $region29: #{iam_forward.15} parent=27 // pred_check
        %p169 = pneg %p107
      $region30: #{iam_forward.15} parent=27 // pred_check_branch
        %171 = sbr.rel (%p169) target = $region32
      $region31: #{iam_forward.15} parent=27 // pred_region
        %s172 = smul.u32 2, %s18
        %p173 = scmp.lt.s32.totalorder %s17, 1
        %s174 = scalar_select %p173, %s17, 1
        %p175 = scmp.lt.s32.totalorder %s172, 1
        %s176 = scalar_select %p175, %s172, 1
        %s177 = smul.addr %s174, 10
        %s178 = sadd.s32 %s176, %s177
        %s179 = smul.addr %s178, 8
        %s180 = scalar_lea.vmem %s3, %s179
        %s181 = smul.u32 2, %s18
      $region32: #{iam_forward.15} parent=27 // pred_fallthru
        _
    $region28: #{iam_forward.15} parent=5 // pred_fallthru
      _
    %p182 = scmp.le.s32.totalorder 1, %s10
    %p183 = scmp.lt.s32.totalorder %s10, 3
    %p184 = pnand %p182, %p183
    %p185 = pneg %p184
    // Predicated region
    $region33: #{iam_forward.15} parent=5 // pred_check
      _
    $region34: #{iam_forward.15} parent=5 // pred_check_branch
      %187 = sbr.rel (%p184) target = $region36
    $region35: #{iam_forward.15} parent=5 // pred_region
      %s188 = ssub.s32 %s10, 1
      %p189 = pneg %p43
      %p190 = pneg %p40
      %p191 = pneg %p64
      %p192 = pneg %p61
      %p193 = pneg %p85
      %p194 = pneg %p82
      %s195 = smul.u32 2, %s20
      %p196 = scmp.lt.s32.totalorder %s19, 1
      %s197 = scalar_select %p196, %s19, 1
      %p198 = scmp.lt.s32.totalorder %s195, 1
      %s199 = scalar_select %p198, %s195, 1
      %s200 = smul.addr %s197, 10
      %s201 = sadd.s32 %s199, %s200
      %s202 = smul.addr %s201, 8
      %s203 = scalar_lea.vmem %s3, %s202
      %p204 = pneg %p113
      %p205 = pneg %p110
      %p206 = pneg %p141
      %p207 = pneg %p138
      %s208 = smul.u32 2, %s20
      %p209 = scmp.lt.s32.totalorder %s19, 1
      %s210 = scalar_select %p209, %s19, 1
      %p211 = scmp.lt.s32.totalorder %s208, 1
      %s212 = scalar_select %p211, %s208, 1
      %s213 = smul.addr %s210, 2
      %s214 = sadd.s32 %s212, %s213
      %s215 = smul.addr %s214, 2
      %s216 = scalar_lea.vmem %s4, %s215
      %s217 = smul.u32 2, %s20
      %p218 = scmp.lt.s32.totalorder %s19, 1
      %s219 = scalar_select %p218, %s19, 1
      %p220 = scmp.lt.s32.totalorder %s217, 1
      %s221 = scalar_select %p220, %s217, 1
      %s222 = smul.addr %s219, 10
      %s223 = sadd.s32 %s221, %s222
      %s224 = smul.addr %s223, 8
      %s225 = scalar_lea.vmem %s3, %s224
      %s226 = smul.u32 2, %s20
      %s227 = smul.u32 2, %s20
      %p228 = scmp.lt.s32.totalorder %s19, 1
      %s229 = scalar_select %p228, %s19, 1
      %p230 = scmp.lt.s32.totalorder %s227, 1
      %s231 = scalar_select %p230, %s227, 1
      %s232 = smul.addr %s229, 2
      %s233 = sadd.s32 %s231, %s232
      %s234 = smul.addr %s233, 2
      %s235 = scalar_lea.vmem %s4, %s234
      %s236 = smul.u32 2, %s20
      %v237 = vld [vmem:[%s0] sm:$0x3]
      %v238 = vld [vmem:[%s225] sm:$0xff]
      %v239 = vld [vmem:[%s225 + $0x8] sm:$0xff]
      %v240 = vld [vmem:[%s225 + $0x10] sm:$0xff]
      %v241 = vld [vmem:[%s225 + $0x18] sm:$0xff]
      %v242 = vld [vmem:[%s225 + $0x20] sm:$0xff]
      %v243 = vld [vmem:[%s225 + $0x28] sm:$0xff]
      %v244 = vld [vmem:[%s225 + $0x30] sm:$0xff]
      %v245 = vld [vmem:[%s225 + $0x38] sm:$0xff]
      %v246 = vld [vmem:[%s225 + $0x40] sm:$0xf]
      %v247 = vld [vmem:[%s225 + $0x48] sm:$0xf]
      %vm248 = vcmask 293888
      %v250 = vsel %vm248, %v237, 0
      %vm252 = vcmask 1043456
      %v254 = vsel %vm252, %v246, 0
      %v257 = vsel %vm252, %v247, 0
      %259 = vmatpush.msra.mxu0 0.0
      %260 = vmatpush.msra.mxu0 0.0
      %261 = vmatpush.msra.mxu0 0.0
      %262 = vmatpush.msra.mxu0 0.0
      %263 = vmatpush.msra.mxu0 0.0
      %264 = vmatpush.msra.mxu0 0.0
      %265 = vmatpush.msra.mxu0 0.0
      %266 = vmatpush.msra.mxu0 0.0
      %267 = vmatpush.msra.mxu0 0.0
      %268 = vmatpush.msra.mxu0 0.0
      %269 = vmatpush.msra.mxu0 0.0
      %270 = vmatpush.msra.mxu0 %v254
      %271 = vmatpush.msra.mxu0 %v244
      %272 = vmatpush.msra.mxu0 %v242
      %273 = vmatpush.msra.mxu0 %v240
      %274 = vmatpush.msra.mxu0 %v238
      %275 = vmatmul.f32.gmra.mxu0 %v250
      %v276 = vpop.f32.mrf.mxu0
      %v277 = vadd.f32 0.0, %v276
      %278 = vdwg.mxu0
      %279 = vmatpush.msra.mxu0 0.0
      %280 = vmatpush.msra.mxu0 0.0
      %281 = vmatpush.msra.mxu0 0.0
      %282 = vmatpush.msra.mxu0 0.0
      %283 = vmatpush.msra.mxu0 0.0
      %284 = vmatpush.msra.mxu0 0.0
      %285 = vmatpush.msra.mxu0 0.0
      %286 = vmatpush.msra.mxu0 0.0
      %287 = vmatpush.msra.mxu0 0.0
      %288 = vmatpush.msra.mxu0 0.0
      %289 = vmatpush.msra.mxu0 0.0
      %290 = vmatpush.msra.mxu0 %v257
      %291 = vmatpush.msra.mxu0 %v245
      %292 = vmatpush.msra.mxu0 %v243
      %293 = vmatpush.msra.mxu0 %v241
      %294 = vmatpush.msra.mxu0 %v239
      %295 = vmatmul.f32.gmra.mxu0 %v250
      %v296 = vpop.f32.mrf.mxu0
      %v297 = vadd.f32 0.0, %v296
      %298 = vdwg.mxu0
      %v299 = vld [vmem:[%s1] sm:$0x3]
      %301 = vset.pattern.permute.xlu0 0
      %302 = vperm.xlu0 %301, %v299
      %v303 = vpop.permute.xlu0 %302
      %v305 = vmul.f32 %v277, %v303
      %v306 = vmul.f32 %v297, %v303
      %v307 = vld [vmem:[%s2] sm:$0x3]
      %309 = vset.pattern.permute.xlu0 0
      %310 = vperm.xlu0 %309, %v307
      %v311 = vpop.permute.xlu0 %310
      %v313 = vadd.f32 %v305, %v311
      %v314 = vadd.f32 %v306, %v311
      %v315 = vmax.f32 %v313, 0.0
      %v316 = vmax.f32 %v314, 0.0
      %v319 = vrot.slane %v316, 6
      %vm320 = vcmask 1041408
      %v321 = vsel %vm320, %v315, %v319
      %323 = vst [vmem:[%s235] sm:$0xf] %v321
      %s324 = smul.u32 2, %s20
      %p325 = scmp.lt.s32.totalorder %s19, 1
      %s326 = scalar_select %p325, %s19, 1
      %p327 = scmp.lt.s32.totalorder %s324, 1
      %s328 = scalar_select %p327, %s324, 1
      %s329 = smul.addr %s326, 2
      %s330 = sadd.s32 %s328, %s329
      %s331 = smul.addr %s330, 2
      %s332 = scalar_lea.vmem %s4, %s331
      // Predicated region
      $region37: #{iam_forward.15} parent=35 // pred_check
        %p333 = pneg %p138
      $region38: #{iam_forward.15} parent=35 // pred_check_branch
        %335 = sbr.rel (%p333) target = $region40
      $region39: #{iam_forward.15} parent=35 // pred_region
        %s336 = smul.u32 2, %s20
      $region40: #{iam_forward.15} parent=35 // pred_fallthru
        _
    $region36: #{iam_forward.15} parent=5 // pred_fallthru
      _
    %p337 = scmp.le.s32.totalorder 2, %s10
    // Predicated region
    $region41: #{iam_forward.15} parent=5 // pred_check
      %p338 = pneg %p337
    $region42: #{iam_forward.15} parent=5 // pred_check_branch
      %340 = sbr.rel (%p338) target = $region44
    $region43: #{iam_forward.15} parent=5 // pred_region
      %s341 = ssub.s32 %s10, 2
      // Predicated region
      $region45: #{iam_forward.15} parent=43 // pred_check
        %p342 = pneg %p144
      $region46: #{iam_forward.15} parent=43 // pred_check_branch
        %344 = sbr.rel (%p342) target = $region48
      $region47: #{iam_forward.15} parent=43 // pred_region
        %s345 = smul.u32 2, %s22
        %p346 = scmp.lt.s32.totalorder %s21, 1
        %s347 = scalar_select %p346, %s21, 1
        %p348 = scmp.lt.s32.totalorder %s345, 1
        %s349 = scalar_select %p348, %s345, 1
        %s350 = smul.addr %s347, 2
        %s351 = sadd.s32 %s349, %s350
        %s352 = smul.addr %s351, 2
        %s353 = scalar_lea.vmem %s4, %s352
      $region48: #{iam_forward.15} parent=43 // pred_fallthru
        _
    $region44: #{iam_forward.15} parent=5 // pred_fallthru
      _
  $region6: #{iam_forward.15} parent=0 // loop_footer
    %s14 = sadd.s32 1, %s10
  $region7: #{iam_forward.15} parent=0 // loop_footer_branch
    %9 = sbr.rel target = $region3
  $region8: #{iam_forward.15} parent=0 // loop_exit
    _

// kernel: iam_forward.16
$region0: #{iam_forward.16}
  #allocation0 [shape = 'u32[]', space=smem, size = 0x4, offset = 0x4, fixed_abs, tag = 'smem constant byte address 0x4 - core index']
  #allocation1 [shape = 'u32[72,128]{1,0:T(1,128)}', space=vmem, size = 0x9000, scoped, tag = 'internal scratch']
  %s0 = inlined_call_operand.vmem [shape: f32[2,18], index: 0, kind: input, shape index: {}]
  %s1 = inlined_call_operand.vmem [shape: f32[2,1], index: 1, kind: input, shape index: {}]
  %s2 = inlined_call_operand.vmem [shape: f32[2,1], index: 2, kind: input, shape index: {}]
  %s3 = inlined_call_operand.vmem [shape: f32[2,18,256], index: 3, kind: input, shape index: {}]
  %s4 = inlined_call_operand.vmem [shape: f32[2,2,256], index: 4, kind: output, shape index: {}]
  %s5 = sld [smem:[#allocation0]]
  $region49: #{iam_forward.16} parent=0
    _
  %s7 = ssub.s32 1, %s5
  %s8 = scalar_select 0, %s7, %s5
  loop: start=0, step=1, limit=4
  $region2: #{iam_forward.16} parent=0 // loop_pre_header
    _
  $region3: #{iam_forward.16} parent=0 // loop_header
    %s10 = sphi 0, %s14
    %p11 = scmp.ge.s32.totalorder %s10, 4
    %s17 = sphi 0, %s29
    %s18 = sphi 0, %s25
    %s19 = sphi 0, %s17
    %s20 = sphi 0, %s18
    %s21 = sphi 0, %s19
    %s22 = sphi 0, %s20
    %s30 = sphi 0, %s30
    %s32 = sphi 0, %s30
    %s33 = sphi 0, %s32
    %s47 = sphi 0, %s33
    %s51 = sphi 0, %s51
    %s53 = sphi 0, %s51
    %s54 = sphi 0, %s53
    %s68 = sphi 0, %s54
    %s72 = sphi 0, %s72
    %s74 = sphi 0, %s72
    %s75 = sphi 0, %s74
    %s89 = sphi 0, %s75
    %s97 = sphi 0, %s99
    %s100 = sphi 0, %s97
    %s101 = sphi 0, %s100
    %s117 = sphi 0, %s101
    %s125 = sphi 0, %s127
    %s128 = sphi 0, %s125
    %s129 = sphi 0, %s128
    %s145 = sphi 0, %s129
  $region4: #{iam_forward.16} parent=0 // loop_header_branch
    %13 = sbr.rel (%p11) target = $region8
  $region5: #{iam_forward.16} parent=0 // loop_body
    %s15 = ssub.s32 %s10, 1
    %s16 = ssub.s32 %s10, 2
    %s23 = sadd.s32 1, %s18
    %p24 = scmp.ge.s32.totalorder %s23, 1
    %s25 = scalar_select %p24, 0, %s23
    %s26 = sadd.s32 1, %s17
    %s27 = scalar_select %p24, %s26, %s17
    %p28 = scmp.ge.s32.totalorder %s27, 2
    %s29 = scalar_select %p28, 0, %s27
    %s31 = sadd.s32 %s30, 1
    %p34 = scmp.eq.s32.totalorder %s10, 1
    %p35 = scmp.ne.s32.totalorder %s30, %s32
    %p36 = scmp.eq.s32.totalorder %s10, 0
    %p37 = por %p35, %p36
    %p38 = scmp.ne.s32.totalorder %s30, %s32
    %p39 = scmp.eq.s32.totalorder %s15, 1
    %p40 = por %p38, %p39
    %p41 = scmp.ne.s32.totalorder %s32, %s33
    %p42 = scmp.eq.s32.totalorder %s15, 0
    %p43 = por %p41, %p42
    %p44 = scmp.ne.s32.totalorder %s32, %s33
    %p45 = scmp.eq.s32.totalorder %s16, 1
    %p46 = por %p44, %p45
    %p48 = scmp.ne.s32.totalorder %s33, %s47
    %p49 = scmp.eq.s32.totalorder %s16, 0
    %p50 = por %p48, %p49
    %s52 = sadd.s32 %s51, 1
    %p55 = scmp.eq.s32.totalorder %s10, 1
    %p56 = scmp.ne.s32.totalorder %s51, %s53
    %p57 = scmp.eq.s32.totalorder %s10, 0
    %p58 = por %p56, %p57
    %p59 = scmp.ne.s32.totalorder %s51, %s53
    %p60 = scmp.eq.s32.totalorder %s15, 1
    %p61 = por %p59, %p60
    %p62 = scmp.ne.s32.totalorder %s53, %s54
    %p63 = scmp.eq.s32.totalorder %s15, 0
    %p64 = por %p62, %p63
    %p65 = scmp.ne.s32.totalorder %s53, %s54
    %p66 = scmp.eq.s32.totalorder %s16, 1
    %p67 = por %p65, %p66
    %p69 = scmp.ne.s32.totalorder %s54, %s68
    %p70 = scmp.eq.s32.totalorder %s16, 0
    %p71 = por %p69, %p70
    %s73 = sadd.s32 %s72, 1
    %p76 = scmp.eq.s32.totalorder %s10, 1
    %p77 = scmp.ne.s32.totalorder %s72, %s74
    %p78 = scmp.eq.s32.totalorder %s10, 0
    %p79 = por %p77, %p78
    %p80 = scmp.ne.s32.totalorder %s72, %s74
    %p81 = scmp.eq.s32.totalorder %s15, 1
    %p82 = por %p80, %p81
    %p83 = scmp.ne.s32.totalorder %s74, %s75
    %p84 = scmp.eq.s32.totalorder %s15, 0
    %p85 = por %p83, %p84
    %p86 = scmp.ne.s32.totalorder %s74, %s75
    %p87 = scmp.eq.s32.totalorder %s16, 1
    %p88 = por %p86, %p87
    %p90 = scmp.ne.s32.totalorder %s75, %s89
    %p91 = scmp.eq.s32.totalorder %s16, 0
    %p92 = por %p90, %p91
    %s93 = ssub.s32 %s17, %s29
    %s94 = ssub.s32 %s18, %s25
    %s95 = sor.u32 %s93, %s94
    %p96 = scmp.eq.s32.totalorder %s95, 0
    %s98 = sadd.s32 %s97, 1
    %s99 = scalar_select %p96, %s97, %s98
    %p102 = pneg %p96
    %p103 = scmp.eq.s32.totalorder %s10, 1
    %p104 = por %p102, %p103
    %p105 = scmp.ne.s32.totalorder %s97, %s100
    %p106 = scmp.eq.s32.totalorder %s10, 0
    %p107 = por %p105, %p106
    %p108 = scmp.ne.s32.totalorder %s97, %s100
    %p109 = scmp.eq.s32.totalorder %s15, 1
    %p110 = por %p108, %p109
    %p111 = scmp.ne.s32.totalorder %s100, %s101
    %p112 = scmp.eq.s32.totalorder %s15, 0
    %p113 = por %p111, %p112
    %p114 = scmp.ne.s32.totalorder %s100, %s101
    %p115 = scmp.eq.s32.totalorder %s16, 1
    %p116 = por %p114, %p115
    %p118 = scmp.ne.s32.totalorder %s101, %s117
    %p119 = scmp.eq.s32.totalorder %s16, 0
    %p120 = por %p118, %p119
    %s121 = ssub.s32 %s17, %s29
    %s122 = ssub.s32 %s18, %s25
    %s123 = sor.u32 %s121, %s122
    %p124 = scmp.eq.s32.totalorder %s123, 0
    %s126 = sadd.s32 %s125, 1
    %s127 = scalar_select %p124, %s125, %s126
    %p130 = pneg %p124
    %p131 = scmp.eq.s32.totalorder %s10, 1
    %p132 = por %p130, %p131
    %p133 = scmp.ne.s32.totalorder %s125, %s128
    %p134 = scmp.eq.s32.totalorder %s10, 0
    %p135 = por %p133, %p134
    %p136 = scmp.ne.s32.totalorder %s125, %s128
    %p137 = scmp.eq.s32.totalorder %s15, 1
    %p138 = por %p136, %p137
    %p139 = scmp.ne.s32.totalorder %s128, %s129
    %p140 = scmp.eq.s32.totalorder %s15, 0
    %p141 = por %p139, %p140
    %p142 = scmp.ne.s32.totalorder %s128, %s129
    %p143 = scmp.eq.s32.totalorder %s16, 1
    %p144 = por %p142, %p143
    %p146 = scmp.ne.s32.totalorder %s129, %s145
    %p147 = scmp.eq.s32.totalorder %s16, 0
    %p148 = por %p146, %p147
    %p149 = scmp.le.s32.totalorder 1, %s10
    %p150 = scmp.lt.s32.totalorder %s10, 3
    %p151 = pnand %p149, %p150
    %p152 = pneg %p151
    // Predicated region
    $region9: #{iam_forward.16} parent=5 // pred_check
      _
    $region10: #{iam_forward.16} parent=5 // pred_check_branch
      %154 = sbr.rel (%p151) target = $region12
    $region11: #{iam_forward.16} parent=5 // pred_region
      %s155 = ssub.s32 %s10, 1
      // Predicated region
      $region13: #{iam_forward.16} parent=11 // pred_check
        %p156 = pneg %p43
      $region14: #{iam_forward.16} parent=11 // pred_check_branch
        %158 = sbr.rel (%p156) target = $region16
      $region15: #{iam_forward.16} parent=11 // pred_region
        _
      $region16: #{iam_forward.16} parent=11 // pred_fallthru
        _
      // Predicated region
      $region17: #{iam_forward.16} parent=11 // pred_check
        %p159 = pneg %p64
      $region18: #{iam_forward.16} parent=11 // pred_check_branch
        %161 = sbr.rel (%p159) target = $region20
      $region19: #{iam_forward.16} parent=11 // pred_region
        _
      $region20: #{iam_forward.16} parent=11 // pred_fallthru
        _
      // Predicated region
      $region21: #{iam_forward.16} parent=11 // pred_check
        %p162 = pneg %p85
      $region22: #{iam_forward.16} parent=11 // pred_check_branch
        %164 = sbr.rel (%p162) target = $region24
      $region23: #{iam_forward.16} parent=11 // pred_region
        _
      $region24: #{iam_forward.16} parent=11 // pred_fallthru
        _
    $region12: #{iam_forward.16} parent=5 // pred_fallthru
      _
    %p165 = scmp.lt.s32.totalorder %s10, 2
    // Predicated region
    $region25: #{iam_forward.16} parent=5 // pred_check
      %p166 = pneg %p165
    $region26: #{iam_forward.16} parent=5 // pred_check_branch
      %168 = sbr.rel (%p166) target = $region28
    $region27: #{iam_forward.16} parent=5 // pred_region
      // Predicated region
      $region29: #{iam_forward.16} parent=27 // pred_check
        %p169 = pneg %p107
      $region30: #{iam_forward.16} parent=27 // pred_check_branch
        %171 = sbr.rel (%p169) target = $region32
      $region31: #{iam_forward.16} parent=27 // pred_region
        %s172 = smul.u32 2, %s18
        %p173 = scmp.lt.s32.totalorder %s17, 1
        %s174 = scalar_select %p173, %s17, 1
        %p175 = scmp.lt.s32.totalorder %s172, 1
        %s176 = scalar_select %p175, %s172, 1
        %s177 = smul.addr %s174, 6
        %s178 = sadd.s32 %s176, %s177
        %s179 = smul.addr %s178, 8
        %s180 = scalar_lea.vmem %s3, %s179
        %s181 = smul.u32 2, %s18
      $region32: #{iam_forward.16} parent=27 // pred_fallthru
        _
    $region28: #{iam_forward.16} parent=5 // pred_fallthru
      _
    %p182 = scmp.le.s32.totalorder 1, %s10
    %p183 = scmp.lt.s32.totalorder %s10, 3
    %p184 = pnand %p182, %p183
    %p185 = pneg %p184
    // Predicated region
    $region33: #{iam_forward.16} parent=5 // pred_check
      _
    $region34: #{iam_forward.16} parent=5 // pred_check_branch
      %187 = sbr.rel (%p184) target = $region36
    $region35: #{iam_forward.16} parent=5 // pred_region
      %s188 = ssub.s32 %s10, 1
      %p189 = pneg %p43
      %p190 = pneg %p40
      %p191 = pneg %p64
      %p192 = pneg %p61
      %p193 = pneg %p85
      %p194 = pneg %p82
      %s195 = smul.u32 2, %s20
      %p196 = scmp.lt.s32.totalorder %s19, 1
      %s197 = scalar_select %p196, %s19, 1
      %p198 = scmp.lt.s32.totalorder %s195, 1
      %s199 = scalar_select %p198, %s195, 1
      %s200 = smul.addr %s197, 6
      %s201 = sadd.s32 %s199, %s200
      %s202 = smul.addr %s201, 8
      %s203 = scalar_lea.vmem %s3, %s202
      %p204 = pneg %p113
      %p205 = pneg %p110
      %p206 = pneg %p141
      %p207 = pneg %p138
      %s208 = smul.u32 2, %s20
      %p209 = scmp.lt.s32.totalorder %s19, 1
      %s210 = scalar_select %p209, %s19, 1
      %p211 = scmp.lt.s32.totalorder %s208, 1
      %s212 = scalar_select %p211, %s208, 1
      %s213 = smul.addr %s210, 2
      %s214 = sadd.s32 %s212, %s213
      %s215 = smul.addr %s214, 2
      %s216 = scalar_lea.vmem %s4, %s215
      %s217 = smul.u32 2, %s20
      %p218 = scmp.lt.s32.totalorder %s19, 1
      %s219 = scalar_select %p218, %s19, 1
      %p220 = scmp.lt.s32.totalorder %s217, 1
      %s221 = scalar_select %p220, %s217, 1
      %s222 = smul.addr %s219, 6
      %s223 = sadd.s32 %s221, %s222
      %s224 = smul.addr %s223, 8
      %s225 = scalar_lea.vmem %s3, %s224
      %s226 = smul.u32 2, %s20
      %s227 = smul.u32 2, %s20
      %p228 = scmp.lt.s32.totalorder %s19, 1
      %s229 = scalar_select %p228, %s19, 1
      %p230 = scmp.lt.s32.totalorder %s227, 1
      %s231 = scalar_select %p230, %s227, 1
      %s232 = smul.addr %s229, 2
      %s233 = sadd.s32 %s231, %s232
      %s234 = smul.addr %s233, 2
      %s235 = scalar_lea.vmem %s4, %s234
      %s236 = smul.u32 2, %s20
      %v237 = vld [vmem:[%s0] sm:$0x3]
      %v238 = vld [vmem:[%s225] sm:$0xff]
      %v239 = vld [vmem:[%s225 + $0x8] sm:$0xff]
      %v240 = vld [vmem:[%s225 + $0x10] sm:$0xff]
      %v241 = vld [vmem:[%s225 + $0x18] sm:$0xff]
      %v242 = vld [vmem:[%s225 + $0x20] sm:$0x3]
      %v243 = vld [vmem:[%s225 + $0x28] sm:$0x3]
      %vm244 = vcmask 146432
      %v246 = vsel %vm244, %v237, 0
      %vm248 = vcmask 1041408
      %v250 = vsel %vm248, %v242, 0
      %v253 = vsel %vm248, %v243, 0
      %255 = vmatpush.msra.mxu0 0.0
      %256 = vmatpush.msra.mxu0 0.0
      %257 = vmatpush.msra.mxu0 0.0
      %258 = vmatpush.msra.mxu0 0.0
      %259 = vmatpush.msra.mxu0 0.0
      %260 = vmatpush.msra.mxu0 0.0
      %261 = vmatpush.msra.mxu0 0.0
      %262 = vmatpush.msra.mxu0 0.0
      %263 = vmatpush.msra.mxu0 0.0
      %264 = vmatpush.msra.mxu0 0.0
      %265 = vmatpush.msra.mxu0 0.0
      %266 = vmatpush.msra.mxu0 0.0
      %267 = vmatpush.msra.mxu0 0.0
      %268 = vmatpush.msra.mxu0 %v250
      %269 = vmatpush.msra.mxu0 %v240
      %270 = vmatpush.msra.mxu0 %v238
      %271 = vmatmul.f32.gmra.mxu0 %v246
      %v272 = vpop.f32.mrf.mxu0
      %v273 = vadd.f32 0.0, %v272
      %274 = vdwg.mxu0
      %275 = vmatpush.msra.mxu0 0.0
      %276 = vmatpush.msra.mxu0 0.0
      %277 = vmatpush.msra.mxu0 0.0
      %278 = vmatpush.msra.mxu0 0.0
      %279 = vmatpush.msra.mxu0 0.0
      %280 = vmatpush.msra.mxu0 0.0
      %281 = vmatpush.msra.mxu0 0.0
      %282 = vmatpush.msra.mxu0 0.0
      %283 = vmatpush.msra.mxu0 0.0
      %284 = vmatpush.msra.mxu0 0.0
      %285 = vmatpush.msra.mxu0 0.0
      %286 = vmatpush.msra.mxu0 0.0
      %287 = vmatpush.msra.mxu0 0.0
      %288 = vmatpush.msra.mxu0 %v253
      %289 = vmatpush.msra.mxu0 %v241
      %290 = vmatpush.msra.mxu0 %v239
      %291 = vmatmul.f32.gmra.mxu0 %v246
      %v292 = vpop.f32.mrf.mxu0
      %v293 = vadd.f32 0.0, %v292
      %294 = vdwg.mxu0
      %v295 = vld [vmem:[%s1] sm:$0x3]
      %297 = vset.pattern.permute.xlu0 0
      %298 = vperm.xlu0 %297, %v295
      %v299 = vpop.permute.xlu0 %298
      %v301 = vmul.f32 %v273, %v299
      %v302 = vmul.f32 %v293, %v299
      %v303 = vld [vmem:[%s2] sm:$0x3]
      %305 = vset.pattern.permute.xlu0 0
      %306 = vperm.xlu0 %305, %v303
      %v307 = vpop.permute.xlu0 %306
      %v309 = vadd.f32 %v301, %v307
      %v310 = vadd.f32 %v302, %v307
      %v311 = vmax.f32 %v309, 0.0
      %v312 = vmax.f32 %v310, 0.0
      %v315 = vrot.slane %v312, 6
      %v316 = vsel %vm248, %v311, %v315
      %318 = vst [vmem:[%s235] sm:$0xf] %v316
      %s319 = smul.u32 2, %s20
      %p320 = scmp.lt.s32.totalorder %s19, 1
      %s321 = scalar_select %p320, %s19, 1
      %p322 = scmp.lt.s32.totalorder %s319, 1
      %s323 = scalar_select %p322, %s319, 1
      %s324 = smul.addr %s321, 2
      %s325 = sadd.s32 %s323, %s324
      %s326 = smul.addr %s325, 2
      %s327 = scalar_lea.vmem %s4, %s326
      // Predicated region
      $region37: #{iam_forward.16} parent=35 // pred_check
        %p328 = pneg %p138
      $region38: #{iam_forward.16} parent=35 // pred_check_branch
        %330 = sbr.rel (%p328) target = $region40
      $region39: #{iam_forward.16} parent=35 // pred_region
        %s331 = smul.u32 2, %s20
      $region40: #{iam_forward.16} parent=35 // pred_fallthru
        _
    $region36: #{iam_forward.16} parent=5 // pred_fallthru
      _
    %p332 = scmp.le.s32.totalorder 2, %s10
    // Predicated region
    $region41: #{iam_forward.16} parent=5 // pred_check
      %p333 = pneg %p332
    $region42: #{iam_forward.16} parent=5 // pred_check_branch
      %335 = sbr.rel (%p333) target = $region44
    $region43: #{iam_forward.16} parent=5 // pred_region
      %s336 = ssub.s32 %s10, 2
      // Predicated region
      $region45: #{iam_forward.16} parent=43 // pred_check
        %p337 = pneg %p144
      $region46: #{iam_forward.16} parent=43 // pred_check_branch
        %339 = sbr.rel (%p337) target = $region48
      $region47: #{iam_forward.16} parent=43 // pred_region
        %s340 = smul.u32 2, %s22
        %p341 = scmp.lt.s32.totalorder %s21, 1
        %s342 = scalar_select %p341, %s21, 1
        %p343 = scmp.lt.s32.totalorder %s340, 1
        %s344 = scalar_select %p343, %s340, 1
        %s345 = smul.addr %s342, 2
        %s346 = sadd.s32 %s344, %s345
        %s347 = smul.addr %s346, 2
        %s348 = scalar_lea.vmem %s4, %s347
      $region48: #{iam_forward.16} parent=43 // pred_fallthru
        _
    $region44: #{iam_forward.16} parent=5 // pred_fallthru
      _
  $region6: #{iam_forward.16} parent=0 // loop_footer
    %s14 = sadd.s32 1, %s10
  $region7: #{iam_forward.16} parent=0 // loop_footer_branch
    %9 = sbr.rel target = $region3
  $region8: #{iam_forward.16} parent=0 // loop_exit
    _

// kernel: iam_forward.17
$region0: #{iam_forward.17}
  #allocation0 [shape = 'u32[]', space=smem, size = 0x4, offset = 0x4, fixed_abs, tag = 'smem constant byte address 0x4 - core index']
  #allocation1 [shape = 'u32[72,128]{1,0:T(1,128)}', space=vmem, size = 0x9000, scoped, tag = 'internal scratch']
  %s0 = inlined_call_operand.vmem [shape: f32[4,18], index: 0, kind: input, shape index: {}]
  %s1 = inlined_call_operand.vmem [shape: f32[4,1], index: 1, kind: input, shape index: {}]
  %s2 = inlined_call_operand.vmem [shape: f32[4,1], index: 2, kind: input, shape index: {}]
  %s3 = inlined_call_operand.vmem [shape: f32[2,18,256], index: 3, kind: input, shape index: {}]
  %s4 = inlined_call_operand.vmem [shape: f32[2,4,256], index: 4, kind: input, shape index: {}]
  %s5 = inlined_call_operand.vmem [shape: f32[2,4,256], index: 5, kind: output, shape index: {0}]
  %s6 = inlined_call_operand.vmem [shape: f32[2,4,256], index: 6, kind: output, shape index: {1}]
  %7 = xla_tuple %s5, %s6
  %s8 = sld [smem:[#allocation0]]
  $region61: #{iam_forward.17} parent=0
    _
  %s10 = ssub.s32 1, %s8
  %s11 = scalar_select 0, %s10, %s8
  loop: start=0, step=1, limit=4
  $region2: #{iam_forward.17} parent=0 // loop_pre_header
    _
  $region3: #{iam_forward.17} parent=0 // loop_header
    %s13 = sphi 0, %s17
    %p14 = scmp.ge.s32.totalorder %s13, 4
    %s20 = sphi 0, %s32
    %s21 = sphi 0, %s28
    %s22 = sphi 0, %s20
    %s23 = sphi 0, %s21
    %s24 = sphi 0, %s22
    %s25 = sphi 0, %s23
    %s33 = sphi 0, %s33
    %s35 = sphi 0, %s33
    %s36 = sphi 0, %s35
    %s50 = sphi 0, %s36
    %s54 = sphi 0, %s54
    %s56 = sphi 0, %s54
    %s57 = sphi 0, %s56
    %s71 = sphi 0, %s57
    %s75 = sphi 0, %s75
    %s77 = sphi 0, %s75
    %s78 = sphi 0, %s77
    %s92 = sphi 0, %s78
    %s100 = sphi 0, %s102
    %s103 = sphi 0, %s100
    %s104 = sphi 0, %s103
    %s120 = sphi 0, %s104
    %s128 = sphi 0, %s130
    %s131 = sphi 0, %s128
    %s132 = sphi 0, %s131
    %s148 = sphi 0, %s132
    %s156 = sphi 0, %s158
    %s159 = sphi 0, %s156
    %s160 = sphi 0, %s159
    %s176 = sphi 0, %s160
    %s184 = sphi 0, %s186
    %s187 = sphi 0, %s184
    %s188 = sphi 0, %s187
    %s204 = sphi 0, %s188
  $region4: #{iam_forward.17} parent=0 // loop_header_branch
    %16 = sbr.rel (%p14) target = $region8
  $region5: #{iam_forward.17} parent=0 // loop_body
    %s18 = ssub.s32 %s13, 1
    %s19 = ssub.s32 %s13, 2
    %s26 = sadd.s32 1, %s21
    %p27 = scmp.ge.s32.totalorder %s26, 1
    %s28 = scalar_select %p27, 0, %s26
    %s29 = sadd.s32 1, %s20
    %s30 = scalar_select %p27, %s29, %s20
    %p31 = scmp.ge.s32.totalorder %s30, 2
    %s32 = scalar_select %p31, 0, %s30
    %s34 = sadd.s32 %s33, 1
    %p37 = scmp.eq.s32.totalorder %s13, 1
    %p38 = scmp.ne.s32.totalorder %s33, %s35
    %p39 = scmp.eq.s32.totalorder %s13, 0
    %p40 = por %p38, %p39
    %p41 = scmp.ne.s32.totalorder %s33, %s35
    %p42 = scmp.eq.s32.totalorder %s18, 1
    %p43 = por %p41, %p42
    %p44 = scmp.ne.s32.totalorder %s35, %s36
    %p45 = scmp.eq.s32.totalorder %s18, 0
    %p46 = por %p44, %p45
    %p47 = scmp.ne.s32.totalorder %s35, %s36
    %p48 = scmp.eq.s32.totalorder %s19, 1
    %p49 = por %p47, %p48
    %p51 = scmp.ne.s32.totalorder %s36, %s50
    %p52 = scmp.eq.s32.totalorder %s19, 0
    %p53 = por %p51, %p52
    %s55 = sadd.s32 %s54, 1
    %p58 = scmp.eq.s32.totalorder %s13, 1
    %p59 = scmp.ne.s32.totalorder %s54, %s56
    %p60 = scmp.eq.s32.totalorder %s13, 0
    %p61 = por %p59, %p60
    %p62 = scmp.ne.s32.totalorder %s54, %s56
    %p63 = scmp.eq.s32.totalorder %s18, 1
    %p64 = por %p62, %p63
    %p65 = scmp.ne.s32.totalorder %s56, %s57
    %p66 = scmp.eq.s32.totalorder %s18, 0
    %p67 = por %p65, %p66
    %p68 = scmp.ne.s32.totalorder %s56, %s57
    %p69 = scmp.eq.s32.totalorder %s19, 1
    %p70 = por %p68, %p69
    %p72 = scmp.ne.s32.totalorder %s57, %s71
    %p73 = scmp.eq.s32.totalorder %s19, 0
    %p74 = por %p72, %p73
    %s76 = sadd.s32 %s75, 1
    %p79 = scmp.eq.s32.totalorder %s13, 1
    %p80 = scmp.ne.s32.totalorder %s75, %s77
    %p81 = scmp.eq.s32.totalorder %s13, 0
    %p82 = por %p80, %p81
    %p83 = scmp.ne.s32.totalorder %s75, %s77
    %p84 = scmp.eq.s32.totalorder %s18, 1
    %p85 = por %p83, %p84
    %p86 = scmp.ne.s32.totalorder %s77, %s78
    %p87 = scmp.eq.s32.totalorder %s18, 0
    %p88 = por %p86, %p87
    %p89 = scmp.ne.s32.totalorder %s77, %s78
    %p90 = scmp.eq.s32.totalorder %s19, 1
    %p91 = por %p89, %p90
    %p93 = scmp.ne.s32.totalorder %s78, %s92
    %p94 = scmp.eq.s32.totalorder %s19, 0
    %p95 = por %p93, %p94
    %s96 = ssub.s32 %s20, %s32
    %s97 = ssub.s32 %s21, %s28
    %s98 = sor.u32 %s96, %s97
    %p99 = scmp.eq.s32.totalorder %s98, 0
    %s101 = sadd.s32 %s100, 1
    %s102 = scalar_select %p99, %s100, %s101
    %p105 = pneg %p99
    %p106 = scmp.eq.s32.totalorder %s13, 1
    %p107 = por %p105, %p106
    %p108 = scmp.ne.s32.totalorder %s100, %s103
    %p109 = scmp.eq.s32.totalorder %s13, 0
    %p110 = por %p108, %p109
    %p111 = scmp.ne.s32.totalorder %s100, %s103
    %p112 = scmp.eq.s32.totalorder %s18, 1
    %p113 = por %p111, %p112
    %p114 = scmp.ne.s32.totalorder %s103, %s104
    %p115 = scmp.eq.s32.totalorder %s18, 0
    %p116 = por %p114, %p115
    %p117 = scmp.ne.s32.totalorder %s103, %s104
    %p118 = scmp.eq.s32.totalorder %s19, 1
    %p119 = por %p117, %p118
    %p121 = scmp.ne.s32.totalorder %s104, %s120
    %p122 = scmp.eq.s32.totalorder %s19, 0
    %p123 = por %p121, %p122
    %s124 = ssub.s32 %s20, %s32
    %s125 = ssub.s32 %s21, %s28
    %s126 = sor.u32 %s124, %s125
    %p127 = scmp.eq.s32.totalorder %s126, 0
    %s129 = sadd.s32 %s128, 1
    %s130 = scalar_select %p127, %s128, %s129
    %p133 = pneg %p127
    %p134 = scmp.eq.s32.totalorder %s13, 1
    %p135 = por %p133, %p134
    %p136 = scmp.ne.s32.totalorder %s128, %s131
    %p137 = scmp.eq.s32.totalorder %s13, 0
    %p138 = por %p136, %p137
    %p139 = scmp.ne.s32.totalorder %s128, %s131
    %p140 = scmp.eq.s32.totalorder %s18, 1
    %p141 = por %p139, %p140
    %p142 = scmp.ne.s32.totalorder %s131, %s132
    %p143 = scmp.eq.s32.totalorder %s18, 0
    %p144 = por %p142, %p143
    %p145 = scmp.ne.s32.totalorder %s131, %s132
    %p146 = scmp.eq.s32.totalorder %s19, 1
    %p147 = por %p145, %p146
    %p149 = scmp.ne.s32.totalorder %s132, %s148
    %p150 = scmp.eq.s32.totalorder %s19, 0
    %p151 = por %p149, %p150
    %s152 = ssub.s32 %s20, %s32
    %s153 = ssub.s32 %s21, %s28
    %s154 = sor.u32 %s152, %s153
    %p155 = scmp.eq.s32.totalorder %s154, 0
    %s157 = sadd.s32 %s156, 1
    %s158 = scalar_select %p155, %s156, %s157
    %p161 = pneg %p155
    %p162 = scmp.eq.s32.totalorder %s13, 1
    %p163 = por %p161, %p162
    %p164 = scmp.ne.s32.totalorder %s156, %s159
    %p165 = scmp.eq.s32.totalorder %s13, 0
    %p166 = por %p164, %p165
    %p167 = scmp.ne.s32.totalorder %s156, %s159
    %p168 = scmp.eq.s32.totalorder %s18, 1
    %p169 = por %p167, %p168
    %p170 = scmp.ne.s32.totalorder %s159, %s160
    %p171 = scmp.eq.s32.totalorder %s18, 0
    %p172 = por %p170, %p171
    %p173 = scmp.ne.s32.totalorder %s159, %s160
    %p174 = scmp.eq.s32.totalorder %s19, 1
    %p175 = por %p173, %p174
    %p177 = scmp.ne.s32.totalorder %s160, %s176
    %p178 = scmp.eq.s32.totalorder %s19, 0
    %p179 = por %p177, %p178
    %s180 = ssub.s32 %s20, %s32
    %s181 = ssub.s32 %s21, %s28
    %s182 = sor.u32 %s180, %s181
    %p183 = scmp.eq.s32.totalorder %s182, 0
    %s185 = sadd.s32 %s184, 1
    %s186 = scalar_select %p183, %s184, %s185
    %p189 = pneg %p183
    %p190 = scmp.eq.s32.totalorder %s13, 1
    %p191 = por %p189, %p190
    %p192 = scmp.ne.s32.totalorder %s184, %s187
    %p193 = scmp.eq.s32.totalorder %s13, 0
    %p194 = por %p192, %p193
    %p195 = scmp.ne.s32.totalorder %s184, %s187
    %p196 = scmp.eq.s32.totalorder %s18, 1
    %p197 = por %p195, %p196
    %p198 = scmp.ne.s32.totalorder %s187, %s188
    %p199 = scmp.eq.s32.totalorder %s18, 0
    %p200 = por %p198, %p199
    %p201 = scmp.ne.s32.totalorder %s187, %s188
    %p202 = scmp.eq.s32.totalorder %s19, 1
    %p203 = por %p201, %p202
    %p205 = scmp.ne.s32.totalorder %s188, %s204
    %p206 = scmp.eq.s32.totalorder %s19, 0
    %p207 = por %p205, %p206
    %p208 = scmp.le.s32.totalorder 1, %s13
    %p209 = scmp.lt.s32.totalorder %s13, 3
    %p210 = pnand %p208, %p209
    %p211 = pneg %p210
    // Predicated region
    $region9: #{iam_forward.17} parent=5 // pred_check
      _
    $region10: #{iam_forward.17} parent=5 // pred_check_branch
      %213 = sbr.rel (%p210) target = $region12
    $region11: #{iam_forward.17} parent=5 // pred_region
      %s214 = ssub.s32 %s13, 1
      // Predicated region
      $region13: #{iam_forward.17} parent=11 // pred_check
        %p215 = pneg %p46
      $region14: #{iam_forward.17} parent=11 // pred_check_branch
        %217 = sbr.rel (%p215) target = $region16
      $region15: #{iam_forward.17} parent=11 // pred_region
        _
      $region16: #{iam_forward.17} parent=11 // pred_fallthru
        _
      // Predicated region
      $region17: #{iam_forward.17} parent=11 // pred_check
        %p218 = pneg %p67
      $region18: #{iam_forward.17} parent=11 // pred_check_branch
        %220 = sbr.rel (%p218) target = $region20
      $region19: #{iam_forward.17} parent=11 // pred_region
        _
      $region20: #{iam_forward.17} parent=11 // pred_fallthru
        _
      // Predicated region
      $region21: #{iam_forward.17} parent=11 // pred_check
        %p221 = pneg %p88
      $region22: #{iam_forward.17} parent=11 // pred_check_branch
        %223 = sbr.rel (%p221) target = $region24
      $region23: #{iam_forward.17} parent=11 // pred_region
        _
      $region24: #{iam_forward.17} parent=11 // pred_fallthru
        _
    $region12: #{iam_forward.17} parent=5 // pred_fallthru
      _
    %p224 = scmp.lt.s32.totalorder %s13, 2
    // Predicated region
    $region25: #{iam_forward.17} parent=5 // pred_check
      %p225 = pneg %p224
    $region26: #{iam_forward.17} parent=5 // pred_check_branch
      %227 = sbr.rel (%p225) target = $region28
    $region27: #{iam_forward.17} parent=5 // pred_region
      // Predicated region
      $region29: #{iam_forward.17} parent=27 // pred_check
        %p228 = pneg %p110
      $region30: #{iam_forward.17} parent=27 // pred_check_branch
        %230 = sbr.rel (%p228) target = $region32
      $region31: #{iam_forward.17} parent=27 // pred_region
        %s231 = smul.u32 2, %s21
        %p232 = scmp.lt.s32.totalorder %s20, 1
        %s233 = scalar_select %p232, %s20, 1
        %p234 = scmp.lt.s32.totalorder %s231, 1
        %s235 = scalar_select %p234, %s231, 1
        %s236 = smul.addr %s233, 6
        %s237 = sadd.s32 %s235, %s236
        %s238 = smul.addr %s237, 8
        %s239 = scalar_lea.vmem %s3, %s238
        %s240 = smul.u32 2, %s21
      $region32: #{iam_forward.17} parent=27 // pred_fallthru
        _
      // Predicated region
      $region33: #{iam_forward.17} parent=27 // pred_check
        %p241 = pneg %p138
      $region34: #{iam_forward.17} parent=27 // pred_check_branch
        %243 = sbr.rel (%p241) target = $region36
      $region35: #{iam_forward.17} parent=27 // pred_region
        %s244 = smul.u32 2, %s21
        %p245 = scmp.lt.s32.totalorder %s20, 1
        %s246 = scalar_select %p245, %s20, 1
        %p247 = scmp.lt.s32.totalorder %s244, 1
        %s248 = scalar_select %p247, %s244, 1
        %s249 = smul.addr %s246, 2
        %s250 = sadd.s32 %s248, %s249
        %s251 = smul.addr %s250, 4
        %s252 = scalar_lea.vmem %s4, %s251
        %s253 = smul.u32 2, %s21
      $region36: #{iam_forward.17} parent=27 // pred_fallthru
        _
    $region28: #{iam_forward.17} parent=5 // pred_fallthru
      _
    %p254 = scmp.le.s32.totalorder 1, %s13
    %p255 = scmp.lt.s32.totalorder %s13, 3
    %p256 = pnand %p254, %p255
    %p257 = pneg %p256
    // Predicated region
    $region37: #{iam_forward.17} parent=5 // pred_check
      _
    $region38: #{iam_forward.17} parent=5 // pred_check_branch
      %259 = sbr.rel (%p256) target = $region40
    $region39: #{iam_forward.17} parent=5 // pred_region
      %s260 = ssub.s32 %s13, 1
      %p261 = pneg %p46
      %p262 = pneg %p43
      %p263 = pneg %p67
      %p264 = pneg %p64
      %p265 = pneg %p88
      %p266 = pneg %p85
      %s267 = smul.u32 2, %s23
      %p268 = scmp.lt.s32.totalorder %s22, 1
      %s269 = scalar_select %p268, %s22, 1
      %p270 = scmp.lt.s32.totalorder %s267, 1
      %s271 = scalar_select %p270, %s267, 1
      %s272 = smul.addr %s269, 6
      %s273 = sadd.s32 %s271, %s272
      %s274 = smul.addr %s273, 8
      %s275 = scalar_lea.vmem %s3, %s274
      %p276 = pneg %p116
      %p277 = pneg %p113
      %s278 = smul.u32 2, %s23
      %p279 = scmp.lt.s32.totalorder %s22, 1
      %s280 = scalar_select %p279, %s22, 1
      %p281 = scmp.lt.s32.totalorder %s278, 1
      %s282 = scalar_select %p281, %s278, 1
      %s283 = smul.addr %s280, 2
      %s284 = sadd.s32 %s282, %s283
      %s285 = smul.addr %s284, 4
      %s286 = scalar_lea.vmem %s4, %s285
      %p287 = pneg %p144
      %p288 = pneg %p141
      %p289 = pneg %p172
      %p290 = pneg %p169
      %s291 = smul.u32 2, %s23
      %p292 = scmp.lt.s32.totalorder %s22, 1
      %s293 = scalar_select %p292, %s22, 1
      %p294 = scmp.lt.s32.totalorder %s291, 1
      %s295 = scalar_select %p294, %s291, 1
      %s296 = smul.addr %s293, 2
      %s297 = sadd.s32 %s295, %s296
      %s298 = smul.addr %s297, 4
      %s299 = scalar_lea.vmem %s5, %s298
      %p300 = pneg %p200
      %p301 = pneg %p197
      %s302 = smul.u32 2, %s23
      %p303 = scmp.lt.s32.totalorder %s22, 1
      %s304 = scalar_select %p303, %s22, 1
      %p305 = scmp.lt.s32.totalorder %s302, 1
      %s306 = scalar_select %p305, %s302, 1
      %s307 = smul.addr %s304, 2
      %s308 = sadd.s32 %s306, %s307
      %s309 = smul.addr %s308, 4
      %s310 = scalar_lea.vmem %s6, %s309
      %s311 = smul.u32 2, %s23
      %p312 = scmp.lt.s32.totalorder %s22, 1
      %s313 = scalar_select %p312, %s22, 1
      %p314 = scmp.lt.s32.totalorder %s311, 1
      %s315 = scalar_select %p314, %s311, 1
      %s316 = smul.addr %s313, 6
      %s317 = sadd.s32 %s315, %s316
      %s318 = smul.addr %s317, 8
      %s319 = scalar_lea.vmem %s3, %s318
      %s320 = smul.u32 2, %s23
      %s321 = smul.u32 2, %s23
      %p322 = scmp.lt.s32.totalorder %s22, 1
      %s323 = scalar_select %p322, %s22, 1
      %p324 = scmp.lt.s32.totalorder %s321, 1
      %s325 = scalar_select %p324, %s321, 1
      %s326 = smul.addr %s323, 2
      %s327 = sadd.s32 %s325, %s326
      %s328 = smul.addr %s327, 4
      %s329 = scalar_lea.vmem %s4, %s328
      %s330 = smul.u32 2, %s23
      %s331 = smul.u32 2, %s23
      %p332 = scmp.lt.s32.totalorder %s22, 1
      %s333 = scalar_select %p332, %s22, 1
      %p334 = scmp.lt.s32.totalorder %s331, 1
      %s335 = scalar_select %p334, %s331, 1
      %s336 = smul.addr %s333, 2
      %s337 = sadd.s32 %s335, %s336
      %s338 = smul.addr %s337, 4
      %s339 = scalar_lea.vmem %s5, %s338
      %s340 = smul.u32 2, %s23
      %s341 = smul.u32 2, %s23
      %p342 = scmp.lt.s32.totalorder %s22, 1
      %s343 = scalar_select %p342, %s22, 1
      %p344 = scmp.lt.s32.totalorder %s341, 1
      %s345 = scalar_select %p344, %s341, 1
      %s346 = smul.addr %s343, 2
      %s347 = sadd.s32 %s345, %s346
      %s348 = smul.addr %s347, 4
      %s349 = scalar_lea.vmem %s6, %s348
      %s350 = smul.u32 2, %s23
      %v351 = vld [vmem:[%s0] sm:$0xf]
      %v352 = vld [vmem:[%s319] sm:$0xff]
      %v353 = vld [vmem:[%s319 + $0x8] sm:$0xff]
      %v354 = vld [vmem:[%s319 + $0x10] sm:$0xff]
      %v355 = vld [vmem:[%s319 + $0x18] sm:$0xff]
      %v356 = vld [vmem:[%s319 + $0x20] sm:$0x3]
      %v357 = vld [vmem:[%s319 + $0x28] sm:$0x3]
      %vm358 = vcmask 146432
      %v360 = vsel %vm358, %v351, 0
      %vm362 = vcmask 1041408
      %v364 = vsel %vm362, %v356, 0
      %v367 = vsel %vm362, %v357, 0
      %369 = vmatpush.msra.mxu0 0.0
      %370 = vmatpush.msra.mxu0 0.0
      %371 = vmatpush.msra.mxu0 0.0
      %372 = vmatpush.msra.mxu0 0.0
      %373 = vmatpush.msra.mxu0 0.0
      %374 = vmatpush.msra.mxu0 0.0
      %375 = vmatpush.msra.mxu0 0.0
      %376 = vmatpush.msra.mxu0 0.0
      %377 = vmatpush.msra.mxu0 0.0
      %378 = vmatpush.msra.mxu0 0.0
      %379 = vmatpush.msra.mxu0 0.0
      %380 = vmatpush.msra.mxu0 0.0
      %381 = vmatpush.msra.mxu0 0.0
      %382 = vmatpush.msra.mxu0 %v364
      %383 = vmatpush.msra.mxu0 %v354
      %384 = vmatpush.msra.mxu0 %v352
      %385 = vmatmul.f32.gmra.mxu0 %v360
      %v386 = vpop.f32.mrf.mxu0
      %v387 = vadd.f32 0.0, %v386
      %388 = vdwg.mxu0
      %389 = vmatpush.msra.mxu0 0.0
      %390 = vmatpush.msra.mxu0 0.0
      %391 = vmatpush.msra.mxu0 0.0
      %392 = vmatpush.msra.mxu0 0.0
      %393 = vmatpush.msra.mxu0 0.0
      %394 = vmatpush.msra.mxu0 0.0
      %395 = vmatpush.msra.mxu0 0.0
      %396 = vmatpush.msra.mxu0 0.0
      %397 = vmatpush.msra.mxu0 0.0
      %398 = vmatpush.msra.mxu0 0.0
      %399 = vmatpush.msra.mxu0 0.0
      %400 = vmatpush.msra.mxu0 0.0
      %401 = vmatpush.msra.mxu0 0.0
      %402 = vmatpush.msra.mxu0 %v367
      %403 = vmatpush.msra.mxu0 %v355
      %404 = vmatpush.msra.mxu0 %v353
      %405 = vmatmul.f32.gmra.mxu0 %v360
      %v406 = vpop.f32.mrf.mxu0
      %v407 = vadd.f32 0.0, %v406
      %408 = vdwg.mxu0
      %v409 = vld [vmem:[%s1] sm:$0xf]
      %411 = vset.pattern.permute.xlu0 0
      %412 = vperm.xlu0 %411, %v409
      %v413 = vpop.permute.xlu0 %412
      %v415 = vmul.f32 %v387, %v413
      %v416 = vmul.f32 %v407, %v413
      %v417 = vld [vmem:[%s2] sm:$0xf]
      %419 = vset.pattern.permute.xlu0 0
      %420 = vperm.xlu0 %419, %v417
      %v421 = vpop.permute.xlu0 %420
      %v423 = vadd.f32 %v415, %v421
      %v424 = vadd.f32 %v416, %v421
      %v425 = vmax.f32 %v423, 0.0
      %v426 = vmax.f32 %v424, 0.0
      %v429 = vrot.slane %v426, 4
      %vm430 = vcmask 1043456
      %v431 = vsel %vm430, %v425, %v429
      %433 = vst [vmem:[%s339] sm:$0xff] %v431
      %v434 = vld [vmem:[%s329] sm:$0xff]
      %v435 = vsub.f32 %v434, %v431
      %436 = vst [vmem:[%s349] sm:$0xff] %v435
      %s437 = smul.u32 2, %s23
      %p438 = scmp.lt.s32.totalorder %s22, 1
      %s439 = scalar_select %p438, %s22, 1
      %p440 = scmp.lt.s32.totalorder %s437, 1
      %s441 = scalar_select %p440, %s437, 1
      %s442 = smul.addr %s439, 2
      %s443 = sadd.s32 %s441, %s442
      %s444 = smul.addr %s443, 4
      %s445 = scalar_lea.vmem %s5, %s444
      %s446 = smul.u32 2, %s23
      %p447 = scmp.lt.s32.totalorder %s22, 1
      %s448 = scalar_select %p447, %s22, 1
      %p449 = scmp.lt.s32.totalorder %s446, 1
      %s450 = scalar_select %p449, %s446, 1
      %s451 = smul.addr %s448, 2
      %s452 = sadd.s32 %s450, %s451
      %s453 = smul.addr %s452, 4
      %s454 = scalar_lea.vmem %s6, %s453
      // Predicated region
      $region41: #{iam_forward.17} parent=39 // pred_check
        %p455 = pneg %p169
      $region42: #{iam_forward.17} parent=39 // pred_check_branch
        %457 = sbr.rel (%p455) target = $region44
      $region43: #{iam_forward.17} parent=39 // pred_region
        %s458 = smul.u32 2, %s23
      $region44: #{iam_forward.17} parent=39 // pred_fallthru
        _
      // Predicated region
      $region45: #{iam_forward.17} parent=39 // pred_check
        %p459 = pneg %p197
      $region46: #{iam_forward.17} parent=39 // pred_check_branch
        %461 = sbr.rel (%p459) target = $region48
      $region47: #{iam_forward.17} parent=39 // pred_region
        %s462 = smul.u32 2, %s23
      $region48: #{iam_forward.17} parent=39 // pred_fallthru
        _
    $region40: #{iam_forward.17} parent=5 // pred_fallthru
      _
    %p463 = scmp.le.s32.totalorder 2, %s13
    // Predicated region
    $region49: #{iam_forward.17} parent=5 // pred_check
      %p464 = pneg %p463
    $region50: #{iam_forward.17} parent=5 // pred_check_branch
      %466 = sbr.rel (%p464) target = $region52
    $region51: #{iam_forward.17} parent=5 // pred_region
      %s467 = ssub.s32 %s13, 2
      // Predicated region
      $region53: #{iam_forward.17} parent=51 // pred_check
        %p468 = pneg %p175
      $region54: #{iam_forward.17} parent=51 // pred_check_branch
        %470 = sbr.rel (%p468) target = $region56
      $region55: #{iam_forward.17} parent=51 // pred_region
        %s471 = smul.u32 2, %s25
        %p472 = scmp.lt.s32.totalorder %s24, 1
        %s473 = scalar_select %p472, %s24, 1
        %p474 = scmp.lt.s32.totalorder %s471, 1
        %s475 = scalar_select %p474, %s471, 1
        %s476 = smul.addr %s473, 2
        %s477 = sadd.s32 %s475, %s476
        %s478 = smul.addr %s477, 4
        %s479 = scalar_lea.vmem %s5, %s478
      $region56: #{iam_forward.17} parent=51 // pred_fallthru
        _
      // Predicated region
      $region57: #{iam_forward.17} parent=51 // pred_check
        %p480 = pneg %p203
      $region58: #{iam_forward.17} parent=51 // pred_check_branch
        %482 = sbr.rel (%p480) target = $region60
      $region59: #{iam_forward.17} parent=51 // pred_region
        %s483 = smul.u32 2, %s25
        %p484 = scmp.lt.s32.totalorder %s24, 1
        %s485 = scalar_select %p484, %s24, 1
        %p486 = scmp.lt.s32.totalorder %s483, 1
        %s487 = scalar_select %p486, %s483, 1
        %s488 = smul.addr %s485, 2
        %s489 = sadd.s32 %s487, %s488
        %s490 = smul.addr %s489, 4
        %s491 = scalar_lea.vmem %s6, %s490
      $region60: #{iam_forward.17} parent=51 // pred_fallthru
        _
    $region52: #{iam_forward.17} parent=5 // pred_fallthru
      _
  $region6: #{iam_forward.17} parent=0 // loop_footer
    %s17 = sadd.s32 1, %s13
  $region7: #{iam_forward.17} parent=0 // loop_footer_branch
    %12 = sbr.rel target = $region3
  $region8: #{iam_forward.17} parent=0 // loop_exit
    _

// kernel: iam_forward.11
$region0: #{iam_forward.11}
  #allocation0 [shape = 'u32[]', space=smem, size = 0x4, offset = 0x4, fixed_abs, tag = 'smem constant byte address 0x4 - core index']
  #allocation1 [shape = 'u32[72,128]{1,0:T(1,128)}', space=vmem, size = 0x9000, scoped, tag = 'internal scratch']
  %s0 = inlined_call_operand.vmem [shape: f32[4,4], index: 0, kind: input, shape index: {}]
  %s1 = inlined_call_operand.vmem [shape: f32[4,1], index: 1, kind: input, shape index: {}]
  %s2 = inlined_call_operand.vmem [shape: f32[4,1], index: 2, kind: input, shape index: {}]
  %s3 = inlined_call_operand.vmem [shape: f32[2,4,256], index: 3, kind: input, shape index: {}, may-alias: {3,4}]
  %s4 = inlined_call_operand.vmem [shape: f32[2,4,256], index: 4, kind: input, shape index: {}, may-alias: {3,4}]
  %s5 = inlined_call_operand.vmem [shape: f32[2,4,256], index: 5, kind: output, shape index: {0}]
  %s6 = inlined_call_operand.vmem [shape: f32[2,4,256], index: 6, kind: output, shape index: {1}]
  %7 = xla_tuple %s5, %s6
  %s8 = sld [smem:[#allocation0]]
  $region61: #{iam_forward.11} parent=0
    _
  %s10 = ssub.s32 1, %s8
  %s11 = scalar_select 0, %s10, %s8
  loop: start=0, step=1, limit=4
  $region2: #{iam_forward.11} parent=0 // loop_pre_header
    _
  $region3: #{iam_forward.11} parent=0 // loop_header
    %s13 = sphi 0, %s17
    %p14 = scmp.ge.s32.totalorder %s13, 4
    %s20 = sphi 0, %s32
    %s21 = sphi 0, %s28
    %s22 = sphi 0, %s20
    %s23 = sphi 0, %s21
    %s24 = sphi 0, %s22
    %s25 = sphi 0, %s23
    %s33 = sphi 0, %s33
    %s35 = sphi 0, %s33
    %s36 = sphi 0, %s35
    %s50 = sphi 0, %s36
    %s54 = sphi 0, %s54
    %s56 = sphi 0, %s54
    %s57 = sphi 0, %s56
    %s71 = sphi 0, %s57
    %s75 = sphi 0, %s75
    %s77 = sphi 0, %s75
    %s78 = sphi 0, %s77
    %s92 = sphi 0, %s78
    %s100 = sphi 0, %s102
    %s103 = sphi 0, %s100
    %s104 = sphi 0, %s103
    %s120 = sphi 0, %s104
    %s128 = sphi 0, %s130
    %s131 = sphi 0, %s128
    %s132 = sphi 0, %s131
    %s148 = sphi 0, %s132
    %s156 = sphi 0, %s158
    %s159 = sphi 0, %s156
    %s160 = sphi 0, %s159
    %s176 = sphi 0, %s160
    %s184 = sphi 0, %s186
    %s187 = sphi 0, %s184
    %s188 = sphi 0, %s187
    %s204 = sphi 0, %s188
  $region4: #{iam_forward.11} parent=0 // loop_header_branch
    %16 = sbr.rel (%p14) target = $region8
  $region5: #{iam_forward.11} parent=0 // loop_body
    %s18 = ssub.s32 %s13, 1
    %s19 = ssub.s32 %s13, 2
    %s26 = sadd.s32 1, %s21
    %p27 = scmp.ge.s32.totalorder %s26, 1
    %s28 = scalar_select %p27, 0, %s26
    %s29 = sadd.s32 1, %s20
    %s30 = scalar_select %p27, %s29, %s20
    %p31 = scmp.ge.s32.totalorder %s30, 2
    %s32 = scalar_select %p31, 0, %s30
    %s34 = sadd.s32 %s33, 1
    %p37 = scmp.eq.s32.totalorder %s13, 1
    %p38 = scmp.ne.s32.totalorder %s33, %s35
    %p39 = scmp.eq.s32.totalorder %s13, 0
    %p40 = por %p38, %p39
    %p41 = scmp.ne.s32.totalorder %s33, %s35
    %p42 = scmp.eq.s32.totalorder %s18, 1
    %p43 = por %p41, %p42
    %p44 = scmp.ne.s32.totalorder %s35, %s36
    %p45 = scmp.eq.s32.totalorder %s18, 0
    %p46 = por %p44, %p45
    %p47 = scmp.ne.s32.totalorder %s35, %s36
    %p48 = scmp.eq.s32.totalorder %s19, 1
    %p49 = por %p47, %p48
    %p51 = scmp.ne.s32.totalorder %s36, %s50
    %p52 = scmp.eq.s32.totalorder %s19, 0
    %p53 = por %p51, %p52
    %s55 = sadd.s32 %s54, 1
    %p58 = scmp.eq.s32.totalorder %s13, 1
    %p59 = scmp.ne.s32.totalorder %s54, %s56
    %p60 = scmp.eq.s32.totalorder %s13, 0
    %p61 = por %p59, %p60
    %p62 = scmp.ne.s32.totalorder %s54, %s56
    %p63 = scmp.eq.s32.totalorder %s18, 1
    %p64 = por %p62, %p63
    %p65 = scmp.ne.s32.totalorder %s56, %s57
    %p66 = scmp.eq.s32.totalorder %s18, 0
    %p67 = por %p65, %p66
    %p68 = scmp.ne.s32.totalorder %s56, %s57
    %p69 = scmp.eq.s32.totalorder %s19, 1
    %p70 = por %p68, %p69
    %p72 = scmp.ne.s32.totalorder %s57, %s71
    %p73 = scmp.eq.s32.totalorder %s19, 0
    %p74 = por %p72, %p73
    %s76 = sadd.s32 %s75, 1
    %p79 = scmp.eq.s32.totalorder %s13, 1
    %p80 = scmp.ne.s32.totalorder %s75, %s77
    %p81 = scmp.eq.s32.totalorder %s13, 0
    %p82 = por %p80, %p81
    %p83 = scmp.ne.s32.totalorder %s75, %s77
    %p84 = scmp.eq.s32.totalorder %s18, 1
    %p85 = por %p83, %p84
    %p86 = scmp.ne.s32.totalorder %s77, %s78
    %p87 = scmp.eq.s32.totalorder %s18, 0
    %p88 = por %p86, %p87
    %p89 = scmp.ne.s32.totalorder %s77, %s78
    %p90 = scmp.eq.s32.totalorder %s19, 1
    %p91 = por %p89, %p90
    %p93 = scmp.ne.s32.totalorder %s78, %s92
    %p94 = scmp.eq.s32.totalorder %s19, 0
    %p95 = por %p93, %p94
    %s96 = ssub.s32 %s20, %s32
    %s97 = ssub.s32 %s21, %s28
    %s98 = sor.u32 %s96, %s97
    %p99 = scmp.eq.s32.totalorder %s98, 0
    %s101 = sadd.s32 %s100, 1
    %s102 = scalar_select %p99, %s100, %s101
    %p105 = pneg %p99
    %p106 = scmp.eq.s32.totalorder %s13, 1
    %p107 = por %p105, %p106
    %p108 = scmp.ne.s32.totalorder %s100, %s103
    %p109 = scmp.eq.s32.totalorder %s13, 0
    %p110 = por %p108, %p109
    %p111 = scmp.ne.s32.totalorder %s100, %s103
    %p112 = scmp.eq.s32.totalorder %s18, 1
    %p113 = por %p111, %p112
    %p114 = scmp.ne.s32.totalorder %s103, %s104
    %p115 = scmp.eq.s32.totalorder %s18, 0
    %p116 = por %p114, %p115
    %p117 = scmp.ne.s32.totalorder %s103, %s104
    %p118 = scmp.eq.s32.totalorder %s19, 1
    %p119 = por %p117, %p118
    %p121 = scmp.ne.s32.totalorder %s104, %s120
    %p122 = scmp.eq.s32.totalorder %s19, 0
    %p123 = por %p121, %p122
    %s124 = ssub.s32 %s20, %s32
    %s125 = ssub.s32 %s21, %s28
    %s126 = sor.u32 %s124, %s125
    %p127 = scmp.eq.s32.totalorder %s126, 0
    %s129 = sadd.s32 %s128, 1
    %s130 = scalar_select %p127, %s128, %s129
    %p133 = pneg %p127
    %p134 = scmp.eq.s32.totalorder %s13, 1
    %p135 = por %p133, %p134
    %p136 = scmp.ne.s32.totalorder %s128, %s131
    %p137 = scmp.eq.s32.totalorder %s13, 0
    %p138 = por %p136, %p137
    %p139 = scmp.ne.s32.totalorder %s128, %s131
    %p140 = scmp.eq.s32.totalorder %s18, 1
    %p141 = por %p139, %p140
    %p142 = scmp.ne.s32.totalorder %s131, %s132
    %p143 = scmp.eq.s32.totalorder %s18, 0
    %p144 = por %p142, %p143
    %p145 = scmp.ne.s32.totalorder %s131, %s132
    %p146 = scmp.eq.s32.totalorder %s19, 1
    %p147 = por %p145, %p146
    %p149 = scmp.ne.s32.totalorder %s132, %s148
    %p150 = scmp.eq.s32.totalorder %s19, 0
    %p151 = por %p149, %p150
    %s152 = ssub.s32 %s20, %s32
    %s153 = ssub.s32 %s21, %s28
    %s154 = sor.u32 %s152, %s153
    %p155 = scmp.eq.s32.totalorder %s154, 0
    %s157 = sadd.s32 %s156, 1
    %s158 = scalar_select %p155, %s156, %s157
    %p161 = pneg %p155
    %p162 = scmp.eq.s32.totalorder %s13, 1
    %p163 = por %p161, %p162
    %p164 = scmp.ne.s32.totalorder %s156, %s159
    %p165 = scmp.eq.s32.totalorder %s13, 0
    %p166 = por %p164, %p165
    %p167 = scmp.ne.s32.totalorder %s156, %s159
    %p168 = scmp.eq.s32.totalorder %s18, 1
    %p169 = por %p167, %p168
    %p170 = scmp.ne.s32.totalorder %s159, %s160
    %p171 = scmp.eq.s32.totalorder %s18, 0
    %p172 = por %p170, %p171
    %p173 = scmp.ne.s32.totalorder %s159, %s160
    %p174 = scmp.eq.s32.totalorder %s19, 1
    %p175 = por %p173, %p174
    %p177 = scmp.ne.s32.totalorder %s160, %s176
    %p178 = scmp.eq.s32.totalorder %s19, 0
    %p179 = por %p177, %p178
    %s180 = ssub.s32 %s20, %s32
    %s181 = ssub.s32 %s21, %s28
    %s182 = sor.u32 %s180, %s181
    %p183 = scmp.eq.s32.totalorder %s182, 0
    %s185 = sadd.s32 %s184, 1
    %s186 = scalar_select %p183, %s184, %s185
    %p189 = pneg %p183
    %p190 = scmp.eq.s32.totalorder %s13, 1
    %p191 = por %p189, %p190
    %p192 = scmp.ne.s32.totalorder %s184, %s187
    %p193 = scmp.eq.s32.totalorder %s13, 0
    %p194 = por %p192, %p193
    %p195 = scmp.ne.s32.totalorder %s184, %s187
    %p196 = scmp.eq.s32.totalorder %s18, 1
    %p197 = por %p195, %p196
    %p198 = scmp.ne.s32.totalorder %s187, %s188
    %p199 = scmp.eq.s32.totalorder %s18, 0
    %p200 = por %p198, %p199
    %p201 = scmp.ne.s32.totalorder %s187, %s188
    %p202 = scmp.eq.s32.totalorder %s19, 1
    %p203 = por %p201, %p202
    %p205 = scmp.ne.s32.totalorder %s188, %s204
    %p206 = scmp.eq.s32.totalorder %s19, 0
    %p207 = por %p205, %p206
    %p208 = scmp.le.s32.totalorder 1, %s13
    %p209 = scmp.lt.s32.totalorder %s13, 3
    %p210 = pnand %p208, %p209
    %p211 = pneg %p210
    // Predicated region
    $region9: #{iam_forward.11} parent=5 // pred_check
      _
    $region10: #{iam_forward.11} parent=5 // pred_check_branch
      %213 = sbr.rel (%p210) target = $region12
    $region11: #{iam_forward.11} parent=5 // pred_region
      %s214 = ssub.s32 %s13, 1
      // Predicated region
      $region13: #{iam_forward.11} parent=11 // pred_check
        %p215 = pneg %p46
      $region14: #{iam_forward.11} parent=11 // pred_check_branch
        %217 = sbr.rel (%p215) target = $region16
      $region15: #{iam_forward.11} parent=11 // pred_region
        _
      $region16: #{iam_forward.11} parent=11 // pred_fallthru
        _
      // Predicated region
      $region17: #{iam_forward.11} parent=11 // pred_check
        %p218 = pneg %p67
      $region18: #{iam_forward.11} parent=11 // pred_check_branch
        %220 = sbr.rel (%p218) target = $region20
      $region19: #{iam_forward.11} parent=11 // pred_region
        _
      $region20: #{iam_forward.11} parent=11 // pred_fallthru
        _
      // Predicated region
      $region21: #{iam_forward.11} parent=11 // pred_check
        %p221 = pneg %p88
      $region22: #{iam_forward.11} parent=11 // pred_check_branch
        %223 = sbr.rel (%p221) target = $region24
      $region23: #{iam_forward.11} parent=11 // pred_region
        _
      $region24: #{iam_forward.11} parent=11 // pred_fallthru
        _
    $region12: #{iam_forward.11} parent=5 // pred_fallthru
      _
    %p224 = scmp.lt.s32.totalorder %s13, 2
    // Predicated region
    $region25: #{iam_forward.11} parent=5 // pred_check
      %p225 = pneg %p224
    $region26: #{iam_forward.11} parent=5 // pred_check_branch
      %227 = sbr.rel (%p225) target = $region28
    $region27: #{iam_forward.11} parent=5 // pred_region
      // Predicated region
      $region29: #{iam_forward.11} parent=27 // pred_check
        %p228 = pneg %p110
      $region30: #{iam_forward.11} parent=27 // pred_check_branch
        %230 = sbr.rel (%p228) target = $region32
      $region31: #{iam_forward.11} parent=27 // pred_region
        %s231 = smul.u32 2, %s21
        %p232 = scmp.lt.s32.totalorder %s20, 1
        %s233 = scalar_select %p232, %s20, 1
        %p234 = scmp.lt.s32.totalorder %s231, 1
        %s235 = scalar_select %p234, %s231, 1
        %s236 = smul.addr %s233, 2
        %s237 = sadd.s32 %s235, %s236
        %s238 = smul.addr %s237, 4
        %s239 = scalar_lea.vmem %s3, %s238
        %s240 = smul.u32 2, %s21
      $region32: #{iam_forward.11} parent=27 // pred_fallthru
        _
      // Predicated region
      $region33: #{iam_forward.11} parent=27 // pred_check
        %p241 = pneg %p138
      $region34: #{iam_forward.11} parent=27 // pred_check_branch
        %243 = sbr.rel (%p241) target = $region36
      $region35: #{iam_forward.11} parent=27 // pred_region
        %s244 = smul.u32 2, %s21
        %p245 = scmp.lt.s32.totalorder %s20, 1
        %s246 = scalar_select %p245, %s20, 1
        %p247 = scmp.lt.s32.totalorder %s244, 1
        %s248 = scalar_select %p247, %s244, 1
        %s249 = smul.addr %s246, 2
        %s250 = sadd.s32 %s248, %s249
        %s251 = smul.addr %s250, 4
        %s252 = scalar_lea.vmem %s4, %s251
        %s253 = smul.u32 2, %s21
      $region36: #{iam_forward.11} parent=27 // pred_fallthru
        _
    $region28: #{iam_forward.11} parent=5 // pred_fallthru
      _
    %p254 = scmp.le.s32.totalorder 1, %s13
    %p255 = scmp.lt.s32.totalorder %s13, 3
    %p256 = pnand %p254, %p255
    %p257 = pneg %p256
    // Predicated region
    $region37: #{iam_forward.11} parent=5 // pred_check
      _
    $region38: #{iam_forward.11} parent=5 // pred_check_branch
      %259 = sbr.rel (%p256) target = $region40
    $region39: #{iam_forward.11} parent=5 // pred_region
      %s260 = ssub.s32 %s13, 1
      %p261 = pneg %p46
      %p262 = pneg %p43
      %p263 = pneg %p67
      %p264 = pneg %p64
      %p265 = pneg %p88
      %p266 = pneg %p85
      %s267 = smul.u32 2, %s23
      %p268 = scmp.lt.s32.totalorder %s22, 1
      %s269 = scalar_select %p268, %s22, 1
      %p270 = scmp.lt.s32.totalorder %s267, 1
      %s271 = scalar_select %p270, %s267, 1
      %s272 = smul.addr %s269, 2
      %s273 = sadd.s32 %s271, %s272
      %s274 = smul.addr %s273, 4
      %s275 = scalar_lea.vmem %s3, %s274
      %p276 = pneg %p116
      %p277 = pneg %p113
      %s278 = smul.u32 2, %s23
      %p279 = scmp.lt.s32.totalorder %s22, 1
      %s280 = scalar_select %p279, %s22, 1
      %p281 = scmp.lt.s32.totalorder %s278, 1
      %s282 = scalar_select %p281, %s278, 1
      %s283 = smul.addr %s280, 2
      %s284 = sadd.s32 %s282, %s283
      %s285 = smul.addr %s284, 4
      %s286 = scalar_lea.vmem %s4, %s285
      %p287 = pneg %p144
      %p288 = pneg %p141
      %p289 = pneg %p172
      %p290 = pneg %p169
      %s291 = smul.u32 2, %s23
      %p292 = scmp.lt.s32.totalorder %s22, 1
      %s293 = scalar_select %p292, %s22, 1
      %p294 = scmp.lt.s32.totalorder %s291, 1
      %s295 = scalar_select %p294, %s291, 1
      %s296 = smul.addr %s293, 2
      %s297 = sadd.s32 %s295, %s296
      %s298 = smul.addr %s297, 4
      %s299 = scalar_lea.vmem %s5, %s298
      %p300 = pneg %p200
      %p301 = pneg %p197
      %s302 = smul.u32 2, %s23
      %p303 = scmp.lt.s32.totalorder %s22, 1
      %s304 = scalar_select %p303, %s22, 1
      %p305 = scmp.lt.s32.totalorder %s302, 1
      %s306 = scalar_select %p305, %s302, 1
      %s307 = smul.addr %s304, 2
      %s308 = sadd.s32 %s306, %s307
      %s309 = smul.addr %s308, 4
      %s310 = scalar_lea.vmem %s6, %s309
      %s311 = smul.u32 2, %s23
      %p312 = scmp.lt.s32.totalorder %s22, 1
      %s313 = scalar_select %p312, %s22, 1
      %p314 = scmp.lt.s32.totalorder %s311, 1
      %s315 = scalar_select %p314, %s311, 1
      %s316 = smul.addr %s313, 2
      %s317 = sadd.s32 %s315, %s316
      %s318 = smul.addr %s317, 4
      %s319 = scalar_lea.vmem %s3, %s318
      %s320 = smul.u32 2, %s23
      %s321 = smul.u32 2, %s23
      %p322 = scmp.lt.s32.totalorder %s22, 1
      %s323 = scalar_select %p322, %s22, 1
      %p324 = scmp.lt.s32.totalorder %s321, 1
      %s325 = scalar_select %p324, %s321, 1
      %s326 = smul.addr %s323, 2
      %s327 = sadd.s32 %s325, %s326
      %s328 = smul.addr %s327, 4
      %s329 = scalar_lea.vmem %s4, %s328
      %s330 = smul.u32 2, %s23
      %s331 = smul.u32 2, %s23
      %p332 = scmp.lt.s32.totalorder %s22, 1
      %s333 = scalar_select %p332, %s22, 1
      %p334 = scmp.lt.s32.totalorder %s331, 1
      %s335 = scalar_select %p334, %s331, 1
      %s336 = smul.addr %s333, 2
      %s337 = sadd.s32 %s335, %s336
      %s338 = smul.addr %s337, 4
      %s339 = scalar_lea.vmem %s5, %s338
      %s340 = smul.u32 2, %s23
      %s341 = smul.u32 2, %s23
      %p342 = scmp.lt.s32.totalorder %s22, 1
      %s343 = scalar_select %p342, %s22, 1
      %p344 = scmp.lt.s32.totalorder %s341, 1
      %s345 = scalar_select %p344, %s341, 1
      %s346 = smul.addr %s343, 2
      %s347 = sadd.s32 %s345, %s346
      %s348 = smul.addr %s347, 4
      %s349 = scalar_lea.vmem %s6, %s348
      %s350 = smul.u32 2, %s23
      %v351 = vld [vmem:[%s0] sm:$0xf]
      %v352 = vld [vmem:[%s319] sm:$0xff]
      %354 = vst [vmem:[#allocation1] ss:$2 sm:$0xff] %v352
      %v355 = vld.sshfl [vmem:[#allocation1] sm:$0xff pattern:$0x75316420]
      %v356 = vld.sshfl [vmem:[#allocation1 + $0x8] sm:$0xff pattern:$0x75316420]
      %vm357 = vcmask 31744
      %v359 = vsel %vm357, %v351, 0
      %vm361 = vcmask 1043456
      %v362 = vsel %vm361, %v355, 0
      %v364 = vsel %vm361, %v356, 0
      %366 = vmatpush.msra.mxu0 0.0
      %367 = vmatpush.msra.mxu0 0.0
      %368 = vmatpush.msra.mxu0 0.0
      %369 = vmatpush.msra.mxu0 0.0
      %370 = vmatpush.msra.mxu0 0.0
      %371 = vmatpush.msra.mxu0 0.0
      %372 = vmatpush.msra.mxu0 0.0
      %373 = vmatpush.msra.mxu0 0.0
      %374 = vmatpush.msra.mxu0 0.0
      %375 = vmatpush.msra.mxu0 0.0
      %376 = vmatpush.msra.mxu0 0.0
      %377 = vmatpush.msra.mxu0 0.0
      %378 = vmatpush.msra.mxu0 0.0
      %379 = vmatpush.msra.mxu0 0.0
      %380 = vmatpush.msra.mxu0 0.0
      %381 = vmatpush.msra.mxu0 %v362
      %382 = vmatmul.f32.gmra.mxu0 %v359
      %v383 = vpop.f32.mrf.mxu0
      %v384 = vadd.f32 0.0, %v383
      %385 = vdwg.mxu0
      %386 = vmatpush.msra.mxu0 0.0
      %387 = vmatpush.msra.mxu0 0.0
      %388 = vmatpush.msra.mxu0 0.0
      %389 = vmatpush.msra.mxu0 0.0
      %390 = vmatpush.msra.mxu0 0.0
      %391 = vmatpush.msra.mxu0 0.0
      %392 = vmatpush.msra.mxu0 0.0
      %393 = vmatpush.msra.mxu0 0.0
      %394 = vmatpush.msra.mxu0 0.0
      %395 = vmatpush.msra.mxu0 0.0
      %396 = vmatpush.msra.mxu0 0.0
      %397 = vmatpush.msra.mxu0 0.0
      %398 = vmatpush.msra.mxu0 0.0
      %399 = vmatpush.msra.mxu0 0.0
      %400 = vmatpush.msra.mxu0 0.0
      %401 = vmatpush.msra.mxu0 %v364
      %402 = vmatmul.f32.gmra.mxu0 %v359
      %v403 = vpop.f32.mrf.mxu0
      %v404 = vadd.f32 0.0, %v403
      %405 = vdwg.mxu0
      %v406 = vld [vmem:[%s1] sm:$0xf]
      %408 = vset.pattern.permute.xlu0 0
      %409 = vperm.xlu0 %408, %v406
      %v410 = vpop.permute.xlu0 %409
      %v412 = vmul.f32 %v384, %v410
      %v413 = vmul.f32 %v404, %v410
      %v414 = vld [vmem:[%s2] sm:$0xf]
      %416 = vset.pattern.permute.xlu0 0
      %417 = vperm.xlu0 %416, %v414
      %v418 = vpop.permute.xlu0 %417
      %v420 = vadd.f32 %v412, %v418
      %v421 = vadd.f32 %v413, %v418
      %v422 = vmax.f32 %v420, 0.0
      %v423 = vmax.f32 %v421, 0.0
      %v426 = vrot.slane %v423, 4
      %v427 = vsel %vm361, %v422, %v426
      %429 = vst [vmem:[%s339] sm:$0xff] %v427
      %v430 = vld [vmem:[%s329] sm:$0xff]
      %v431 = vsub.f32 %v430, %v427
      %432 = vst [vmem:[%s349] sm:$0xff] %v431
      %s433 = smul.u32 2, %s23
      %p434 = scmp.lt.s32.totalorder %s22, 1
      %s435 = scalar_select %p434, %s22, 1
      %p436 = scmp.lt.s32.totalorder %s433, 1
      %s437 = scalar_select %p436, %s433, 1
      %s438 = smul.addr %s435, 2
      %s439 = sadd.s32 %s437, %s438
      %s440 = smul.addr %s439, 4
      %s441 = scalar_lea.vmem %s5, %s440
      %s442 = smul.u32 2, %s23
      %p443 = scmp.lt.s32.totalorder %s22, 1
      %s444 = scalar_select %p443, %s22, 1
      %p445 = scmp.lt.s32.totalorder %s442, 1
      %s446 = scalar_select %p445, %s442, 1
      %s447 = smul.addr %s444, 2
      %s448 = sadd.s32 %s446, %s447
      %s449 = smul.addr %s448, 4
      %s450 = scalar_lea.vmem %s6, %s449
      // Predicated region
      $region41: #{iam_forward.11} parent=39 // pred_check
        %p451 = pneg %p169
      $region42: #{iam_forward.11} parent=39 // pred_check_branch
        %453 = sbr.rel (%p451) target = $region44
      $region43: #{iam_forward.11} parent=39 // pred_region
        %s454 = smul.u32 2, %s23
      $region44: #{iam_forward.11} parent=39 // pred_fallthru
        _
      // Predicated region
      $region45: #{iam_forward.11} parent=39 // pred_check
        %p455 = pneg %p197
      $region46: #{iam_forward.11} parent=39 // pred_check_branch
        %457 = sbr.rel (%p455) target = $region48
      $region47: #{iam_forward.11} parent=39 // pred_region
        %s458 = smul.u32 2, %s23
      $region48: #{iam_forward.11} parent=39 // pred_fallthru
        _
    $region40: #{iam_forward.11} parent=5 // pred_fallthru
      _
    %p459 = scmp.le.s32.totalorder 2, %s13
    // Predicated region
    $region49: #{iam_forward.11} parent=5 // pred_check
      %p460 = pneg %p459
    $region50: #{iam_forward.11} parent=5 // pred_check_branch
      %462 = sbr.rel (%p460) target = $region52
    $region51: #{iam_forward.11} parent=5 // pred_region
      %s463 = ssub.s32 %s13, 2
      // Predicated region
      $region53: #{iam_forward.11} parent=51 // pred_check
        %p464 = pneg %p175
      $region54: #{iam_forward.11} parent=51 // pred_check_branch
        %466 = sbr.rel (%p464) target = $region56
      $region55: #{iam_forward.11} parent=51 // pred_region
        %s467 = smul.u32 2, %s25
        %p468 = scmp.lt.s32.totalorder %s24, 1
        %s469 = scalar_select %p468, %s24, 1
        %p470 = scmp.lt.s32.totalorder %s467, 1
        %s471 = scalar_select %p470, %s467, 1
        %s472 = smul.addr %s469, 2
        %s473 = sadd.s32 %s471, %s472
        %s474 = smul.addr %s473, 4
        %s475 = scalar_lea.vmem %s5, %s474
      $region56: #{iam_forward.11} parent=51 // pred_fallthru
        _
      // Predicated region
      $region57: #{iam_forward.11} parent=51 // pred_check
        %p476 = pneg %p203
      $region58: #{iam_forward.11} parent=51 // pred_check_branch
        %478 = sbr.rel (%p476) target = $region60
      $region59: #{iam_forward.11} parent=51 // pred_region
        %s479 = smul.u32 2, %s25
        %p480 = scmp.lt.s32.totalorder %s24, 1
        %s481 = scalar_select %p480, %s24, 1
        %p482 = scmp.lt.s32.totalorder %s479, 1
        %s483 = scalar_select %p482, %s479, 1
        %s484 = smul.addr %s481, 2
        %s485 = sadd.s32 %s483, %s484
        %s486 = smul.addr %s485, 4
        %s487 = scalar_lea.vmem %s6, %s486
      $region60: #{iam_forward.11} parent=51 // pred_fallthru
        _
    $region52: #{iam_forward.11} parent=5 // pred_fallthru
      _
  $region6: #{iam_forward.11} parent=0 // loop_footer
    %s17 = sadd.s32 1, %s13
  $region7: #{iam_forward.11} parent=0 // loop_footer_branch
    %12 = sbr.rel target = $region3
  $region8: #{iam_forward.11} parent=0 // loop_exit
    _

// kernel: iam_forward.21
$region0: #{iam_forward.21}
  #allocation0 [shape = 'u32[]', space=smem, size = 0x4, offset = 0x4, fixed_abs, tag = 'smem constant byte address 0x4 - core index']
  #allocation1 [shape = 'u32[72,128]{1,0:T(1,128)}', space=vmem, size = 0x9000, scoped, tag = 'internal scratch']
  %s0 = inlined_call_operand.vmem [shape: f32[64,20], index: 0, kind: input, shape index: {}]
  %s1 = inlined_call_operand.vmem [shape: f32[64,1], index: 1, kind: input, shape index: {}]
  %s2 = inlined_call_operand.vmem [shape: f32[64,1], index: 2, kind: input, shape index: {}]
  %s3 = inlined_call_operand.vmem [shape: f32[2,20,256], index: 3, kind: input, shape index: {}]
  %s4 = inlined_call_operand.vmem [shape: f32[2,20,256], index: 4, kind: input, shape index: {}]
  %s5 = inlined_call_operand.vmem [shape: f32[2,64,256], index: 5, kind: output, shape index: {}]
  %s6 = sld [smem:[#allocation0]]
  $region53: #{iam_forward.21} parent=0
    _
  %s8 = ssub.s32 1, %s6
  %s9 = scalar_select 0, %s8, %s6
  loop: start=0, step=1, limit=4
  $region2: #{iam_forward.21} parent=0 // loop_pre_header
    _
  $region3: #{iam_forward.21} parent=0 // loop_header
    %s11 = sphi 0, %s15
    %p12 = scmp.ge.s32.totalorder %s11, 4
    %s18 = sphi 0, %s30
    %s19 = sphi 0, %s26
    %s20 = sphi 0, %s18
    %s21 = sphi 0, %s19
    %s22 = sphi 0, %s20
    %s23 = sphi 0, %s21
    %s31 = sphi 0, %s31
    %s33 = sphi 0, %s31
    %s34 = sphi 0, %s33
    %s48 = sphi 0, %s34
    %s52 = sphi 0, %s52
    %s54 = sphi 0, %s52
    %s55 = sphi 0, %s54
    %s69 = sphi 0, %s55
    %s73 = sphi 0, %s73
    %s75 = sphi 0, %s73
    %s76 = sphi 0, %s75
    %s90 = sphi 0, %s76
    %s98 = sphi 0, %s100
    %s101 = sphi 0, %s98
    %s102 = sphi 0, %s101
    %s118 = sphi 0, %s102
    %s126 = sphi 0, %s128
    %s129 = sphi 0, %s126
    %s130 = sphi 0, %s129
    %s146 = sphi 0, %s130
    %s154 = sphi 0, %s156
    %s157 = sphi 0, %s154
    %s158 = sphi 0, %s157
    %s174 = sphi 0, %s158
  $region4: #{iam_forward.21} parent=0 // loop_header_branch
    %14 = sbr.rel (%p12) target = $region8
  $region5: #{iam_forward.21} parent=0 // loop_body
    %s16 = ssub.s32 %s11, 1
    %s17 = ssub.s32 %s11, 2
    %s24 = sadd.s32 1, %s19
    %p25 = scmp.ge.s32.totalorder %s24, 1
    %s26 = scalar_select %p25, 0, %s24
    %s27 = sadd.s32 1, %s18
    %s28 = scalar_select %p25, %s27, %s18
    %p29 = scmp.ge.s32.totalorder %s28, 2
    %s30 = scalar_select %p29, 0, %s28
    %s32 = sadd.s32 %s31, 1
    %p35 = scmp.eq.s32.totalorder %s11, 1
    %p36 = scmp.ne.s32.totalorder %s31, %s33
    %p37 = scmp.eq.s32.totalorder %s11, 0
    %p38 = por %p36, %p37
    %p39 = scmp.ne.s32.totalorder %s31, %s33
    %p40 = scmp.eq.s32.totalorder %s16, 1
    %p41 = por %p39, %p40
    %p42 = scmp.ne.s32.totalorder %s33, %s34
    %p43 = scmp.eq.s32.totalorder %s16, 0
    %p44 = por %p42, %p43
    %p45 = scmp.ne.s32.totalorder %s33, %s34
    %p46 = scmp.eq.s32.totalorder %s17, 1
    %p47 = por %p45, %p46
    %p49 = scmp.ne.s32.totalorder %s34, %s48
    %p50 = scmp.eq.s32.totalorder %s17, 0
    %p51 = por %p49, %p50
    %s53 = sadd.s32 %s52, 1
    %p56 = scmp.eq.s32.totalorder %s11, 1
    %p57 = scmp.ne.s32.totalorder %s52, %s54
    %p58 = scmp.eq.s32.totalorder %s11, 0
    %p59 = por %p57, %p58
    %p60 = scmp.ne.s32.totalorder %s52, %s54
    %p61 = scmp.eq.s32.totalorder %s16, 1
    %p62 = por %p60, %p61
    %p63 = scmp.ne.s32.totalorder %s54, %s55
    %p64 = scmp.eq.s32.totalorder %s16, 0
    %p65 = por %p63, %p64
    %p66 = scmp.ne.s32.totalorder %s54, %s55
    %p67 = scmp.eq.s32.totalorder %s17, 1
    %p68 = por %p66, %p67
    %p70 = scmp.ne.s32.totalorder %s55, %s69
    %p71 = scmp.eq.s32.totalorder %s17, 0
    %p72 = por %p70, %p71
    %s74 = sadd.s32 %s73, 1
    %p77 = scmp.eq.s32.totalorder %s11, 1
    %p78 = scmp.ne.s32.totalorder %s73, %s75
    %p79 = scmp.eq.s32.totalorder %s11, 0
    %p80 = por %p78, %p79
    %p81 = scmp.ne.s32.totalorder %s73, %s75
    %p82 = scmp.eq.s32.totalorder %s16, 1
    %p83 = por %p81, %p82
    %p84 = scmp.ne.s32.totalorder %s75, %s76
    %p85 = scmp.eq.s32.totalorder %s16, 0
    %p86 = por %p84, %p85
    %p87 = scmp.ne.s32.totalorder %s75, %s76
    %p88 = scmp.eq.s32.totalorder %s17, 1
    %p89 = por %p87, %p88
    %p91 = scmp.ne.s32.totalorder %s76, %s90
    %p92 = scmp.eq.s32.totalorder %s17, 0
    %p93 = por %p91, %p92
    %s94 = ssub.s32 %s18, %s30
    %s95 = ssub.s32 %s19, %s26
    %s96 = sor.u32 %s94, %s95
    %p97 = scmp.eq.s32.totalorder %s96, 0
    %s99 = sadd.s32 %s98, 1
    %s100 = scalar_select %p97, %s98, %s99
    %p103 = pneg %p97
    %p104 = scmp.eq.s32.totalorder %s11, 1
    %p105 = por %p103, %p104
    %p106 = scmp.ne.s32.totalorder %s98, %s101
    %p107 = scmp.eq.s32.totalorder %s11, 0
    %p108 = por %p106, %p107
    %p109 = scmp.ne.s32.totalorder %s98, %s101
    %p110 = scmp.eq.s32.totalorder %s16, 1
    %p111 = por %p109, %p110
    %p112 = scmp.ne.s32.totalorder %s101, %s102
    %p113 = scmp.eq.s32.totalorder %s16, 0
    %p114 = por %p112, %p113
    %p115 = scmp.ne.s32.totalorder %s101, %s102
    %p116 = scmp.eq.s32.totalorder %s17, 1
    %p117 = por %p115, %p116
    %p119 = scmp.ne.s32.totalorder %s102, %s118
    %p120 = scmp.eq.s32.totalorder %s17, 0
    %p121 = por %p119, %p120
    %s122 = ssub.s32 %s18, %s30
    %s123 = ssub.s32 %s19, %s26
    %s124 = sor.u32 %s122, %s123
    %p125 = scmp.eq.s32.totalorder %s124, 0
    %s127 = sadd.s32 %s126, 1
    %s128 = scalar_select %p125, %s126, %s127
    %p131 = pneg %p125
    %p132 = scmp.eq.s32.totalorder %s11, 1
    %p133 = por %p131, %p132
    %p134 = scmp.ne.s32.totalorder %s126, %s129
    %p135 = scmp.eq.s32.totalorder %s11, 0
    %p136 = por %p134, %p135
    %p137 = scmp.ne.s32.totalorder %s126, %s129
    %p138 = scmp.eq.s32.totalorder %s16, 1
    %p139 = por %p137, %p138
    %p140 = scmp.ne.s32.totalorder %s129, %s130
    %p141 = scmp.eq.s32.totalorder %s16, 0
    %p142 = por %p140, %p141
    %p143 = scmp.ne.s32.totalorder %s129, %s130
    %p144 = scmp.eq.s32.totalorder %s17, 1
    %p145 = por %p143, %p144
    %p147 = scmp.ne.s32.totalorder %s130, %s146
    %p148 = scmp.eq.s32.totalorder %s17, 0
    %p149 = por %p147, %p148
    %s150 = ssub.s32 %s18, %s30
    %s151 = ssub.s32 %s19, %s26
    %s152 = sor.u32 %s150, %s151
    %p153 = scmp.eq.s32.totalorder %s152, 0
    %s155 = sadd.s32 %s154, 1
    %s156 = scalar_select %p153, %s154, %s155
    %p159 = pneg %p153
    %p160 = scmp.eq.s32.totalorder %s11, 1
    %p161 = por %p159, %p160
    %p162 = scmp.ne.s32.totalorder %s154, %s157
    %p163 = scmp.eq.s32.totalorder %s11, 0
    %p164 = por %p162, %p163
    %p165 = scmp.ne.s32.totalorder %s154, %s157
    %p166 = scmp.eq.s32.totalorder %s16, 1
    %p167 = por %p165, %p166
    %p168 = scmp.ne.s32.totalorder %s157, %s158
    %p169 = scmp.eq.s32.totalorder %s16, 0
    %p170 = por %p168, %p169
    %p171 = scmp.ne.s32.totalorder %s157, %s158
    %p172 = scmp.eq.s32.totalorder %s17, 1
    %p173 = por %p171, %p172
    %p175 = scmp.ne.s32.totalorder %s158, %s174
    %p176 = scmp.eq.s32.totalorder %s17, 0
    %p177 = por %p175, %p176
    %p178 = scmp.le.s32.totalorder 1, %s11
    %p179 = scmp.lt.s32.totalorder %s11, 3
    %p180 = pnand %p178, %p179
    %p181 = pneg %p180
    // Predicated region
    $region9: #{iam_forward.21} parent=5 // pred_check
      _
    $region10: #{iam_forward.21} parent=5 // pred_check_branch
      %183 = sbr.rel (%p180) target = $region12
    $region11: #{iam_forward.21} parent=5 // pred_region
      %s184 = ssub.s32 %s11, 1
      // Predicated region
      $region13: #{iam_forward.21} parent=11 // pred_check
        %p185 = pneg %p44
      $region14: #{iam_forward.21} parent=11 // pred_check_branch
        %187 = sbr.rel (%p185) target = $region16
      $region15: #{iam_forward.21} parent=11 // pred_region
        _
      $region16: #{iam_forward.21} parent=11 // pred_fallthru
        _
      // Predicated region
      $region17: #{iam_forward.21} parent=11 // pred_check
        %p188 = pneg %p65
      $region18: #{iam_forward.21} parent=11 // pred_check_branch
        %190 = sbr.rel (%p188) target = $region20
      $region19: #{iam_forward.21} parent=11 // pred_region
        _
      $region20: #{iam_forward.21} parent=11 // pred_fallthru
        _
      // Predicated region
      $region21: #{iam_forward.21} parent=11 // pred_check
        %p191 = pneg %p86
      $region22: #{iam_forward.21} parent=11 // pred_check_branch
        %193 = sbr.rel (%p191) target = $region24
      $region23: #{iam_forward.21} parent=11 // pred_region
        _
      $region24: #{iam_forward.21} parent=11 // pred_fallthru
        _
    $region12: #{iam_forward.21} parent=5 // pred_fallthru
      _
    %p194 = scmp.lt.s32.totalorder %s11, 2
    // Predicated region
    $region25: #{iam_forward.21} parent=5 // pred_check
      %p195 = pneg %p194
    $region26: #{iam_forward.21} parent=5 // pred_check_branch
      %197 = sbr.rel (%p195) target = $region28
    $region27: #{iam_forward.21} parent=5 // pred_region
      // Predicated region
      $region29: #{iam_forward.21} parent=27 // pred_check
        %p198 = pneg %p108
      $region30: #{iam_forward.21} parent=27 // pred_check_branch
        %200 = sbr.rel (%p198) target = $region32
      $region31: #{iam_forward.21} parent=27 // pred_region
        %s201 = smul.u32 2, %s19
        %p202 = scmp.lt.s32.totalorder %s18, 1
        %s203 = scalar_select %p202, %s18, 1
        %p204 = scmp.lt.s32.totalorder %s201, 1
        %s205 = scalar_select %p204, %s201, 1
        %s206 = smul.addr %s203, 6
        %s207 = sadd.s32 %s205, %s206
        %s208 = smul.addr %s207, 8
        %s209 = scalar_lea.vmem %s3, %s208
        %s210 = smul.u32 2, %s19
      $region32: #{iam_forward.21} parent=27 // pred_fallthru
        _
      // Predicated region
      $region33: #{iam_forward.21} parent=27 // pred_check
        %p211 = pneg %p136
      $region34: #{iam_forward.21} parent=27 // pred_check_branch
        %213 = sbr.rel (%p211) target = $region36
      $region35: #{iam_forward.21} parent=27 // pred_region
        %s214 = smul.u32 2, %s19
        %p215 = scmp.lt.s32.totalorder %s18, 1
        %s216 = scalar_select %p215, %s18, 1
        %p217 = scmp.lt.s32.totalorder %s214, 1
        %s218 = scalar_select %p217, %s214, 1
        %s219 = smul.addr %s216, 6
        %s220 = sadd.s32 %s218, %s219
        %s221 = smul.addr %s220, 8
        %s222 = scalar_lea.vmem %s4, %s221
        %s223 = smul.u32 2, %s19
      $region36: #{iam_forward.21} parent=27 // pred_fallthru
        _
    $region28: #{iam_forward.21} parent=5 // pred_fallthru
      _
    %p224 = scmp.le.s32.totalorder 1, %s11
    %p225 = scmp.lt.s32.totalorder %s11, 3
    %p226 = pnand %p224, %p225
    %p227 = pneg %p226
    // Predicated region
    $region37: #{iam_forward.21} parent=5 // pred_check
      _
    $region38: #{iam_forward.21} parent=5 // pred_check_branch
      %229 = sbr.rel (%p226) target = $region40
    $region39: #{iam_forward.21} parent=5 // pred_region
      %s230 = ssub.s32 %s11, 1
      %p231 = pneg %p44
      %p232 = pneg %p41
      %p233 = pneg %p65
      %p234 = pneg %p62
      %p235 = pneg %p86
      %p236 = pneg %p83
      %s237 = smul.u32 2, %s21
      %p238 = scmp.lt.s32.totalorder %s20, 1
      %s239 = scalar_select %p238, %s20, 1
      %p240 = scmp.lt.s32.totalorder %s237, 1
      %s241 = scalar_select %p240, %s237, 1
      %s242 = smul.addr %s239, 6
      %s243 = sadd.s32 %s241, %s242
      %s244 = smul.addr %s243, 8
      %s245 = scalar_lea.vmem %s3, %s244
      %p246 = pneg %p114
      %p247 = pneg %p111
      %s248 = smul.u32 2, %s21
      %p249 = scmp.lt.s32.totalorder %s20, 1
      %s250 = scalar_select %p249, %s20, 1
      %p251 = scmp.lt.s32.totalorder %s248, 1
      %s252 = scalar_select %p251, %s248, 1
      %s253 = smul.addr %s250, 6
      %s254 = sadd.s32 %s252, %s253
      %s255 = smul.addr %s254, 8
      %s256 = scalar_lea.vmem %s4, %s255
      %p257 = pneg %p142
      %p258 = pneg %p139
      %p259 = pneg %p170
      %p260 = pneg %p167
      %s261 = smul.u32 2, %s21
      %p262 = scmp.lt.s32.totalorder %s20, 1
      %s263 = scalar_select %p262, %s20, 1
      %p264 = scmp.lt.s32.totalorder %s261, 1
      %s265 = scalar_select %p264, %s261, 1
      %s266 = smul.addr %s263, 16
      %s267 = sadd.s32 %s265, %s266
      %s268 = smul.addr %s267, 8
      %s269 = scalar_lea.vmem %s5, %s268
      %s270 = smul.u32 2, %s21
      %p271 = scmp.lt.s32.totalorder %s20, 1
      %s272 = scalar_select %p271, %s20, 1
      %p273 = scmp.lt.s32.totalorder %s270, 1
      %s274 = scalar_select %p273, %s270, 1
      %s275 = smul.addr %s272, 6
      %s276 = sadd.s32 %s274, %s275
      %s277 = smul.addr %s276, 8
      %s278 = scalar_lea.vmem %s3, %s277
      %s279 = smul.u32 2, %s21
      %s280 = smul.u32 2, %s21
      %p281 = scmp.lt.s32.totalorder %s20, 1
      %s282 = scalar_select %p281, %s20, 1
      %p283 = scmp.lt.s32.totalorder %s280, 1
      %s284 = scalar_select %p283, %s280, 1
      %s285 = smul.addr %s282, 6
      %s286 = sadd.s32 %s284, %s285
      %s287 = smul.addr %s286, 8
      %s288 = scalar_lea.vmem %s4, %s287
      %s289 = smul.u32 2, %s21
      %s290 = smul.u32 2, %s21
      %p291 = scmp.lt.s32.totalorder %s20, 1
      %s292 = scalar_select %p291, %s20, 1
      %p293 = scmp.lt.s32.totalorder %s290, 1
      %s294 = scalar_select %p293, %s290, 1
      %s295 = smul.addr %s292, 16
      %s296 = sadd.s32 %s294, %s295
      %s297 = smul.addr %s296, 8
      %s298 = scalar_lea.vmem %s5, %s297
      %s299 = smul.u32 2, %s21
      %v300 = vld [vmem:[%s0] sm:$0xff]
      %v301 = vld [vmem:[%s0 + $0x8] sm:$0xff]
      %v302 = vld [vmem:[%s0 + $0x10] sm:$0xff]
      %v303 = vld [vmem:[%s0 + $0x18] sm:$0xff]
      %v304 = vld [vmem:[%s0 + $0x20] sm:$0xff]
      %v305 = vld [vmem:[%s0 + $0x28] sm:$0xff]
      %v306 = vld [vmem:[%s0 + $0x30] sm:$0xff]
      %v307 = vld [vmem:[%s0 + $0x38] sm:$0xff]
      %v308 = vld [vmem:[%s1] sm:$0xff]
      %v309 = vld [vmem:[%s1 + $0x8] sm:$0xff]
      %v310 = vld [vmem:[%s1 + $0x10] sm:$0xff]
      %v311 = vld [vmem:[%s1 + $0x18] sm:$0xff]
      %v312 = vld [vmem:[%s1 + $0x20] sm:$0xff]
      %v313 = vld [vmem:[%s1 + $0x28] sm:$0xff]
      %v314 = vld [vmem:[%s1 + $0x30] sm:$0xff]
      %v315 = vld [vmem:[%s1 + $0x38] sm:$0xff]
      %v316 = vld [vmem:[%s2] sm:$0xff]
      %v317 = vld [vmem:[%s2 + $0x8] sm:$0xff]
      %v318 = vld [vmem:[%s2 + $0x10] sm:$0xff]
      %v319 = vld [vmem:[%s2 + $0x18] sm:$0xff]
      %v320 = vld [vmem:[%s2 + $0x20] sm:$0xff]
      %v321 = vld [vmem:[%s2 + $0x28] sm:$0xff]
      %v322 = vld [vmem:[%s2 + $0x30] sm:$0xff]
      %v323 = vld [vmem:[%s2 + $0x38] sm:$0xff]
      %v324 = vld [vmem:[%s278] sm:$0xff]
      %v325 = vld [vmem:[%s278 + $0x8] sm:$0xff]
      %v326 = vld [vmem:[%s278 + $0x10] sm:$0xff]
      %v327 = vld [vmem:[%s278 + $0x18] sm:$0xff]
      %v328 = vld [vmem:[%s278 + $0x20] sm:$0xf]
      %v329 = vld [vmem:[%s278 + $0x28] sm:$0xf]
      %vm330 = vcmask 162816
      %v332 = vsel %vm330, %v300, 0
      %v335 = vsel %vm330, %v301, 0
      %v338 = vsel %vm330, %v302, 0
      %v341 = vsel %vm330, %v303, 0
      %v344 = vsel %vm330, %v304, 0
      %v347 = vsel %vm330, %v305, 0
      %v350 = vsel %vm330, %v306, 0
      %v353 = vsel %vm330, %v307, 0
      %vm355 = vcmask 1043456
      %v357 = vsel %vm355, %v328, 0
      %v360 = vsel %vm355, %v329, 0
      %362 = vmatpush.msra.mxu0 0.0
      %363 = vmatpush.msra.mxu0 0.0
      %364 = vmatpush.msra.mxu0 0.0
      %365 = vmatpush.msra.mxu0 0.0
      %366 = vmatpush.msra.mxu0 0.0
      %367 = vmatpush.msra.mxu0 0.0
      %368 = vmatpush.msra.mxu0 0.0
      %369 = vmatpush.msra.mxu0 0.0
      %370 = vmatpush.msra.mxu0 0.0
      %371 = vmatpush.msra.mxu0 0.0
      %372 = vmatpush.msra.mxu0 0.0
      %373 = vmatpush.msra.mxu0 0.0
      %374 = vmatpush.msra.mxu0 0.0
      %375 = vmatpush.msra.mxu0 %v357
      %376 = vmatpush.msra.mxu0 %v326
      %377 = vmatpush.msra.mxu0 %v324
      %378 = vmatmul.f32.gmra.mxu0 %v332
      %v379 = vpop.f32.mrf.mxu0
      %v380 = vadd.f32 0.0, %v379
      %381 = vmatmul.f32.gmra.mxu0 %v335
      %v382 = vpop.f32.mrf.mxu0
      %v383 = vadd.f32 0.0, %v382
      %384 = vmatmul.f32.gmra.mxu0 %v338
      %v385 = vpop.f32.mrf.mxu0
      %v386 = vadd.f32 0.0, %v385
      %387 = vmatmul.f32.gmra.mxu0 %v341
      %v388 = vpop.f32.mrf.mxu0
      %v389 = vadd.f32 0.0, %v388
      %390 = vmatmul.f32.gmra.mxu0 %v344
      %v391 = vpop.f32.mrf.mxu0
      %v392 = vadd.f32 0.0, %v391
      %393 = vmatmul.f32.gmra.mxu0 %v347
      %v394 = vpop.f32.mrf.mxu0
      %v395 = vadd.f32 0.0, %v394
      %396 = vmatmul.f32.gmra.mxu0 %v350
      %v397 = vpop.f32.mrf.mxu0
      %v398 = vadd.f32 0.0, %v397
      %399 = vmatmul.f32.gmra.mxu0 %v353
      %v400 = vpop.f32.mrf.mxu0
      %v401 = vadd.f32 0.0, %v400
      %402 = vdwg.mxu0
      %403 = vmatpush.msra.mxu0 0.0
      %404 = vmatpush.msra.mxu0 0.0
      %405 = vmatpush.msra.mxu0 0.0
      %406 = vmatpush.msra.mxu0 0.0
      %407 = vmatpush.msra.mxu0 0.0
      %408 = vmatpush.msra.mxu0 0.0
      %409 = vmatpush.msra.mxu0 0.0
      %410 = vmatpush.msra.mxu0 0.0
      %411 = vmatpush.msra.mxu0 0.0
      %412 = vmatpush.msra.mxu0 0.0
      %413 = vmatpush.msra.mxu0 0.0
      %414 = vmatpush.msra.mxu0 0.0
      %415 = vmatpush.msra.mxu0 0.0
      %416 = vmatpush.msra.mxu0 %v360
      %417 = vmatpush.msra.mxu0 %v327
      %418 = vmatpush.msra.mxu0 %v325
      %419 = vmatmul.f32.gmra.mxu0 %v332
      %v420 = vpop.f32.mrf.mxu0
      %v421 = vadd.f32 0.0, %v420
      %422 = vmatmul.f32.gmra.mxu0 %v335
      %v423 = vpop.f32.mrf.mxu0
      %v424 = vadd.f32 0.0, %v423
      %425 = vmatmul.f32.gmra.mxu0 %v338
      %v426 = vpop.f32.mrf.mxu0
      %v427 = vadd.f32 0.0, %v426
      %428 = vmatmul.f32.gmra.mxu0 %v341
      %v429 = vpop.f32.mrf.mxu0
      %v430 = vadd.f32 0.0, %v429
      %431 = vmatmul.f32.gmra.mxu0 %v344
      %v432 = vpop.f32.mrf.mxu0
      %v433 = vadd.f32 0.0, %v432
      %434 = vmatmul.f32.gmra.mxu0 %v347
      %v435 = vpop.f32.mrf.mxu0
      %v436 = vadd.f32 0.0, %v435
      %437 = vmatmul.f32.gmra.mxu0 %v350
      %v438 = vpop.f32.mrf.mxu0
      %v439 = vadd.f32 0.0, %v438
      %440 = vmatmul.f32.gmra.mxu0 %v353
      %v441 = vpop.f32.mrf.mxu0
      %v442 = vadd.f32 0.0, %v441
      %443 = vdwg.mxu0
      %445 = vset.pattern.permute.xlu0 0
      %446 = vperm.xlu0 %445, %v308
      %v447 = vpop.permute.xlu0 %446
      %450 = vset.pattern.permute.xlu0 0
      %451 = vperm.xlu0 %450, %v309
      %v452 = vpop.permute.xlu0 %451
      %455 = vset.pattern.permute.xlu0 0
      %456 = vperm.xlu0 %455, %v310
      %v457 = vpop.permute.xlu0 %456
      %460 = vset.pattern.permute.xlu0 0
      %461 = vperm.xlu0 %460, %v311
      %v462 = vpop.permute.xlu0 %461
      %465 = vset.pattern.permute.xlu0 0
      %466 = vperm.xlu0 %465, %v312
      %v467 = vpop.permute.xlu0 %466
      %470 = vset.pattern.permute.xlu0 0
      %471 = vperm.xlu0 %470, %v313
      %v472 = vpop.permute.xlu0 %471
      %475 = vset.pattern.permute.xlu0 0
      %476 = vperm.xlu0 %475, %v314
      %v477 = vpop.permute.xlu0 %476
      %480 = vset.pattern.permute.xlu0 0
      %481 = vperm.xlu0 %480, %v315
      %v482 = vpop.permute.xlu0 %481
      %v484 = vmul.f32 %v380, %v447
      %v485 = vmul.f32 %v421, %v447
      %v486 = vmul.f32 %v383, %v452
      %v487 = vmul.f32 %v424, %v452
      %v488 = vmul.f32 %v386, %v457
      %v489 = vmul.f32 %v427, %v457
      %v490 = vmul.f32 %v389, %v462
      %v491 = vmul.f32 %v430, %v462
      %v492 = vmul.f32 %v392, %v467
      %v493 = vmul.f32 %v433, %v467
      %v494 = vmul.f32 %v395, %v472
      %v495 = vmul.f32 %v436, %v472
      %v496 = vmul.f32 %v398, %v477
      %v497 = vmul.f32 %v439, %v477
      %v498 = vmul.f32 %v401, %v482
      %v499 = vmul.f32 %v442, %v482
      %501 = vset.pattern.permute.xlu0 0
      %502 = vperm.xlu0 %501, %v316
      %v503 = vpop.permute.xlu0 %502
      %506 = vset.pattern.permute.xlu0 0
      %507 = vperm.xlu0 %506, %v317
      %v508 = vpop.permute.xlu0 %507
      %511 = vset.pattern.permute.xlu0 0
      %512 = vperm.xlu0 %511, %v318
      %v513 = vpop.permute.xlu0 %512
      %516 = vset.pattern.permute.xlu0 0
      %517 = vperm.xlu0 %516, %v319
      %v518 = vpop.permute.xlu0 %517
      %521 = vset.pattern.permute.xlu0 0
      %522 = vperm.xlu0 %521, %v320
      %v523 = vpop.permute.xlu0 %522
      %526 = vset.pattern.permute.xlu0 0
      %527 = vperm.xlu0 %526, %v321
      %v528 = vpop.permute.xlu0 %527
      %531 = vset.pattern.permute.xlu0 0
      %532 = vperm.xlu0 %531, %v322
      %v533 = vpop.permute.xlu0 %532
      %536 = vset.pattern.permute.xlu0 0
      %537 = vperm.xlu0 %536, %v323
      %v538 = vpop.permute.xlu0 %537
      %v540 = vadd.f32 %v484, %v503
      %v541 = vadd.f32 %v485, %v503
      %v542 = vadd.f32 %v486, %v508
      %v543 = vadd.f32 %v487, %v508
      %v544 = vadd.f32 %v488, %v513
      %v545 = vadd.f32 %v489, %v513
      %v546 = vadd.f32 %v490, %v518
      %v547 = vadd.f32 %v491, %v518
      %v548 = vadd.f32 %v492, %v523
      %v549 = vadd.f32 %v493, %v523
      %v550 = vadd.f32 %v494, %v528
      %v551 = vadd.f32 %v495, %v528
      %v552 = vadd.f32 %v496, %v533
      %v553 = vadd.f32 %v497, %v533
      %v554 = vadd.f32 %v498, %v538
      %v555 = vadd.f32 %v499, %v538
      %v556 = vmax.f32 %v540, 0.0
      %v557 = vmax.f32 %v541, 0.0
      %v558 = vmax.f32 %v542, 0.0
      %v559 = vmax.f32 %v543, 0.0
      %v560 = vmax.f32 %v544, 0.0
      %v561 = vmax.f32 %v545, 0.0
      %v562 = vmax.f32 %v546, 0.0
      %v563 = vmax.f32 %v547, 0.0
      %v564 = vmax.f32 %v548, 0.0
      %v565 = vmax.f32 %v549, 0.0
      %v566 = vmax.f32 %v550, 0.0
      %v567 = vmax.f32 %v551, 0.0
      %v568 = vmax.f32 %v552, 0.0
      %v569 = vmax.f32 %v553, 0.0
      %v570 = vmax.f32 %v554, 0.0
      %v571 = vmax.f32 %v555, 0.0
      %v572 = vld [vmem:[%s288] sm:$0xff]
      %v573 = vld [vmem:[%s288 + $0x8] sm:$0xff]
      %v574 = vld [vmem:[%s288 + $0x10] sm:$0xff]
      %v575 = vld [vmem:[%s288 + $0x18] sm:$0xff]
      %v576 = vld [vmem:[%s288 + $0x20] sm:$0xf]
      %v577 = vld [vmem:[%s288 + $0x28] sm:$0xf]
      %v579 = vsel %vm355, %v576, 0
      %v582 = vsel %vm355, %v577, 0
      %584 = vmatpush.msra.mxu0 0.0
      %585 = vmatpush.msra.mxu0 0.0
      %586 = vmatpush.msra.mxu0 0.0
      %587 = vmatpush.msra.mxu0 0.0
      %588 = vmatpush.msra.mxu0 0.0
      %589 = vmatpush.msra.mxu0 0.0
      %590 = vmatpush.msra.mxu0 0.0
      %591 = vmatpush.msra.mxu0 0.0
      %592 = vmatpush.msra.mxu0 0.0
      %593 = vmatpush.msra.mxu0 0.0
      %594 = vmatpush.msra.mxu0 0.0
      %595 = vmatpush.msra.mxu0 0.0
      %596 = vmatpush.msra.mxu0 0.0
      %597 = vmatpush.msra.mxu0 %v579
      %598 = vmatpush.msra.mxu0 %v574
      %599 = vmatpush.msra.mxu0 %v572
      %600 = vmatmul.f32.gmra.mxu0 %v332
      %v601 = vpop.f32.mrf.mxu0
      %v602 = vadd.f32 0.0, %v601
      %603 = vmatmul.f32.gmra.mxu0 %v335
      %v604 = vpop.f32.mrf.mxu0
      %v605 = vadd.f32 0.0, %v604
      %606 = vmatmul.f32.gmra.mxu0 %v338
      %v607 = vpop.f32.mrf.mxu0
      %v608 = vadd.f32 0.0, %v607
      %609 = vmatmul.f32.gmra.mxu0 %v341
      %v610 = vpop.f32.mrf.mxu0
      %v611 = vadd.f32 0.0, %v610
      %612 = vmatmul.f32.gmra.mxu0 %v344
      %v613 = vpop.f32.mrf.mxu0
      %v614 = vadd.f32 0.0, %v613
      %615 = vmatmul.f32.gmra.mxu0 %v347
      %v616 = vpop.f32.mrf.mxu0
      %v617 = vadd.f32 0.0, %v616
      %618 = vmatmul.f32.gmra.mxu0 %v350
      %v619 = vpop.f32.mrf.mxu0
      %v620 = vadd.f32 0.0, %v619
      %621 = vmatmul.f32.gmra.mxu0 %v353
      %v622 = vpop.f32.mrf.mxu0
      %v623 = vadd.f32 0.0, %v622
      %624 = vdwg.mxu0
      %625 = vmatpush.msra.mxu0 0.0
      %626 = vmatpush.msra.mxu0 0.0
      %627 = vmatpush.msra.mxu0 0.0
      %628 = vmatpush.msra.mxu0 0.0
      %629 = vmatpush.msra.mxu0 0.0
      %630 = vmatpush.msra.mxu0 0.0
      %631 = vmatpush.msra.mxu0 0.0
      %632 = vmatpush.msra.mxu0 0.0
      %633 = vmatpush.msra.mxu0 0.0
      %634 = vmatpush.msra.mxu0 0.0
      %635 = vmatpush.msra.mxu0 0.0
      %636 = vmatpush.msra.mxu0 0.0
      %637 = vmatpush.msra.mxu0 0.0
      %638 = vmatpush.msra.mxu0 %v582
      %639 = vmatpush.msra.mxu0 %v575
      %640 = vmatpush.msra.mxu0 %v573
      %641 = vmatmul.f32.gmra.mxu0 %v332
      %v642 = vpop.f32.mrf.mxu0
      %v643 = vadd.f32 0.0, %v642
      %644 = vmatmul.f32.gmra.mxu0 %v335
      %v645 = vpop.f32.mrf.mxu0
      %v646 = vadd.f32 0.0, %v645
      %647 = vmatmul.f32.gmra.mxu0 %v338
      %v648 = vpop.f32.mrf.mxu0
      %v649 = vadd.f32 0.0, %v648
      %650 = vmatmul.f32.gmra.mxu0 %v341
      %v651 = vpop.f32.mrf.mxu0
      %v652 = vadd.f32 0.0, %v651
      %653 = vmatmul.f32.gmra.mxu0 %v344
      %v654 = vpop.f32.mrf.mxu0
      %v655 = vadd.f32 0.0, %v654
      %656 = vmatmul.f32.gmra.mxu0 %v347
      %v657 = vpop.f32.mrf.mxu0
      %v658 = vadd.f32 0.0, %v657
      %659 = vmatmul.f32.gmra.mxu0 %v350
      %v660 = vpop.f32.mrf.mxu0
      %v661 = vadd.f32 0.0, %v660
      %662 = vmatmul.f32.gmra.mxu0 %v353
      %v663 = vpop.f32.mrf.mxu0
      %v664 = vadd.f32 0.0, %v663
      %665 = vdwg.mxu0
      %v666 = vmul.f32 %v602, %v447
      %v667 = vmul.f32 %v643, %v447
      %v668 = vmul.f32 %v605, %v452
      %v669 = vmul.f32 %v646, %v452
      %v670 = vmul.f32 %v608, %v457
      %v671 = vmul.f32 %v649, %v457
      %v672 = vmul.f32 %v611, %v462
      %v673 = vmul.f32 %v652, %v462
      %v674 = vmul.f32 %v614, %v467
      %v675 = vmul.f32 %v655, %v467
      %v676 = vmul.f32 %v617, %v472
      %v677 = vmul.f32 %v658, %v472
      %v678 = vmul.f32 %v620, %v477
      %v679 = vmul.f32 %v661, %v477
      %v680 = vmul.f32 %v623, %v482
      %v681 = vmul.f32 %v664, %v482
      %v682 = vadd.f32 %v666, %v503
      %v683 = vadd.f32 %v667, %v503
      %v684 = vadd.f32 %v668, %v508
      %v685 = vadd.f32 %v669, %v508
      %v686 = vadd.f32 %v670, %v513
      %v687 = vadd.f32 %v671, %v513
      %v688 = vadd.f32 %v672, %v518
      %v689 = vadd.f32 %v673, %v518
      %v690 = vadd.f32 %v674, %v523
      %v691 = vadd.f32 %v675, %v523
      %v692 = vadd.f32 %v676, %v528
      %v693 = vadd.f32 %v677, %v528
      %v694 = vadd.f32 %v678, %v533
      %v695 = vadd.f32 %v679, %v533
      %v696 = vadd.f32 %v680, %v538
      %v697 = vadd.f32 %v681, %v538
      %v698 = vmax.f32 %v682, 0.0
      %v699 = vmax.f32 %v683, 0.0
      %v700 = vmax.f32 %v684, 0.0
      %v701 = vmax.f32 %v685, 0.0
      %v702 = vmax.f32 %v686, 0.0
      %v703 = vmax.f32 %v687, 0.0
      %v704 = vmax.f32 %v688, 0.0
      %v705 = vmax.f32 %v689, 0.0
      %v706 = vmax.f32 %v690, 0.0
      %v707 = vmax.f32 %v691, 0.0
      %v708 = vmax.f32 %v692, 0.0
      %v709 = vmax.f32 %v693, 0.0
      %v710 = vmax.f32 %v694, 0.0
      %v711 = vmax.f32 %v695, 0.0
      %v712 = vmax.f32 %v696, 0.0
      %v713 = vmax.f32 %v697, 0.0
      %v714 = vadd.f32 %v556, %v698
      %v715 = vadd.f32 %v557, %v699
      %v716 = vadd.f32 %v558, %v700
      %v717 = vadd.f32 %v559, %v701
      %v718 = vadd.f32 %v560, %v702
      %v719 = vadd.f32 %v561, %v703
      %v720 = vadd.f32 %v562, %v704
      %v721 = vadd.f32 %v563, %v705
      %v722 = vadd.f32 %v564, %v706
      %v723 = vadd.f32 %v565, %v707
      %v724 = vadd.f32 %v566, %v708
      %v725 = vadd.f32 %v567, %v709
      %v726 = vadd.f32 %v568, %v710
      %v727 = vadd.f32 %v569, %v711
      %v728 = vadd.f32 %v570, %v712
      %v729 = vadd.f32 %v571, %v713
      %730 = vst [vmem:[%s298] sm:$0xff] %v714
      %731 = vst [vmem:[%s298 + $0x8] sm:$0xff] %v715
      %732 = vst [vmem:[%s298 + $0x10] sm:$0xff] %v716
      %733 = vst [vmem:[%s298 + $0x18] sm:$0xff] %v717
      %734 = vst [vmem:[%s298 + $0x20] sm:$0xff] %v718
      %735 = vst [vmem:[%s298 + $0x28] sm:$0xff] %v719
      %736 = vst [vmem:[%s298 + $0x30] sm:$0xff] %v720
      %737 = vst [vmem:[%s298 + $0x38] sm:$0xff] %v721
      %738 = vst [vmem:[%s298 + $0x40] sm:$0xff] %v722
      %739 = vst [vmem:[%s298 + $0x48] sm:$0xff] %v723
      %740 = vst [vmem:[%s298 + $0x50] sm:$0xff] %v724
      %741 = vst [vmem:[%s298 + $0x58] sm:$0xff] %v725
      %742 = vst [vmem:[%s298 + $0x60] sm:$0xff] %v726
      %743 = vst [vmem:[%s298 + $0x68] sm:$0xff] %v727
      %744 = vst [vmem:[%s298 + $0x70] sm:$0xff] %v728
      %745 = vst [vmem:[%s298 + $0x78] sm:$0xff] %v729
      %s746 = smul.u32 2, %s21
      %p747 = scmp.lt.s32.totalorder %s20, 1
      %s748 = scalar_select %p747, %s20, 1
      %p749 = scmp.lt.s32.totalorder %s746, 1
      %s750 = scalar_select %p749, %s746, 1
      %s751 = smul.addr %s748, 16
      %s752 = sadd.s32 %s750, %s751
      %s753 = smul.addr %s752, 8
      %s754 = scalar_lea.vmem %s5, %s753
      // Predicated region
      $region41: #{iam_forward.21} parent=39 // pred_check
        %p755 = pneg %p167
      $region42: #{iam_forward.21} parent=39 // pred_check_branch
        %757 = sbr.rel (%p755) target = $region44
      $region43: #{iam_forward.21} parent=39 // pred_region
        %s758 = smul.u32 2, %s21
      $region44: #{iam_forward.21} parent=39 // pred_fallthru
        _
    $region40: #{iam_forward.21} parent=5 // pred_fallthru
      _
    %p759 = scmp.le.s32.totalorder 2, %s11
    // Predicated region
    $region45: #{iam_forward.21} parent=5 // pred_check
      %p760 = pneg %p759
    $region46: #{iam_forward.21} parent=5 // pred_check_branch
      %762 = sbr.rel (%p760) target = $region48
    $region47: #{iam_forward.21} parent=5 // pred_region
      %s763 = ssub.s32 %s11, 2
      // Predicated region
      $region49: #{iam_forward.21} parent=47 // pred_check
        %p764 = pneg %p173
      $region50: #{iam_forward.21} parent=47 // pred_check_branch
        %766 = sbr.rel (%p764) target = $region52
      $region51: #{iam_forward.21} parent=47 // pred_region
        %s767 = smul.u32 2, %s23
        %p768 = scmp.lt.s32.totalorder %s22, 1
        %s769 = scalar_select %p768, %s22, 1
        %p770 = scmp.lt.s32.totalorder %s767, 1
        %s771 = scalar_select %p770, %s767, 1
        %s772 = smul.addr %s769, 16
        %s773 = sadd.s32 %s771, %s772
        %s774 = smul.addr %s773, 8
        %s775 = scalar_lea.vmem %s5, %s774
      $region52: #{iam_forward.21} parent=47 // pred_fallthru
        _
    $region48: #{iam_forward.21} parent=5 // pred_fallthru
      _
  $region6: #{iam_forward.21} parent=0 // loop_footer
    %s15 = sadd.s32 1, %s11
  $region7: #{iam_forward.21} parent=0 // loop_footer_branch
    %10 = sbr.rel target = $region3
  $region8: #{iam_forward.21} parent=0 // loop_exit
    _

</llo_original>
